<compile_context>
chip_gen: v6e
topology: v6e:2x2x1
jax: 0.10.0
libtpu: 0.0.40
codegen_flags: <defaults>
</compile_context>

<pallas_src>
import math
import jax
import jax.numpy as jnp
from jax import lax
from jax.experimental import pallas as pl
from jax.experimental.pallas import tpu as pltpu  # noqa: F401  (TPU backend)

# Small hyper-params consistent with Model(ntoken, d_model, nhead, d_hid, nlayers)
NTOKEN, D_MODEL, NHEAD, D_HID, NLAYERS = 128, 32, 2, 64, 2
SEQ, BATCH = 8, 2
HEAD_DIM = D_MODEL // NHEAD
R = BATCH * SEQ                 # rows processed by the single-program kernel
LN_EPS = 1e-5                   # torch LayerNorm default
NEG_INF = -1e30                 # finite mask fill; exp underflows cleanly to 0


# ---------------------------------------------------------------------------
# Packed-parameter layout: one [WPACK_ROWS, 128] f32 slab.  Each entry occupies
# rows [off, off+rows) and lanes [0, cols); offsets are 8-row aligned so every
# in-kernel slice is tile-friendly (lane offset 0, 8-aligned sublane offset).
# ---------------------------------------------------------------------------
def _ceil8(n):
    return (n + 7) & ~7


def _build_layout():
    order = [("emb_ext", NTOKEN + R, D_MODEL),   # scaled embedding table + PE rows
             ("bias", R, R),                     # block-diag(batch) AND causal mask
             ("wout", D_MODEL, NTOKEN),
             ("bout", 1, NTOKEN)]
    for l in range(NLAYERS):
        for h in range(NHEAD):
            order += [(f"wq_{l}_{h}", D_MODEL, HEAD_DIM),
                      (f"wk_{l}_{h}", D_MODEL, HEAD_DIM),
                      (f"wv_{l}_{h}", D_MODEL, HEAD_DIM),
                      (f"wo_{l}_{h}", HEAD_DIM, D_MODEL),
                      (f"bq_{l}_{h}", 1, HEAD_DIM),
                      (f"bk_{l}_{h}", 1, HEAD_DIM),
                      (f"bv_{l}_{h}", 1, HEAD_DIM)]
        order += [(f"bo_{l}", 1, D_MODEL),
                  (f"ln1g_{l}", 1, D_MODEL), (f"ln1b_{l}", 1, D_MODEL),
                  (f"ln2g_{l}", 1, D_MODEL), (f"ln2b_{l}", 1, D_MODEL),
                  (f"w1_{l}", D_MODEL, D_HID), (f"b1_{l}", 1, D_HID),
                  (f"w2_{l}", D_HID, D_MODEL), (f"b2_{l}", 1, D_MODEL)]
    layout, off = {}, 0
    for name, r, c in order:
        layout[name] = (off, r, c)
        off += _ceil8(r)
    return layout, off


WLAYOUT, WPACK_ROWS = _build_layout()            # WPACK_ROWS is a multiple of 8


# ---------------------------------------------------------------------------
# Kernel
# ---------------------------------------------------------------------------
def _layernorm(x, g, b):
    # one-pass variance: the two lane reductions are independent (XLU overlap)
    mu = jnp.mean(x, axis=-1, keepdims=True)
    var = jnp.mean(x * x, axis=-1, keepdims=True) - mu * mu
    return (x - mu) * lax.rsqrt(var + LN_EPS) * g + b


def transformer_kernel(oh_ref, wp_ref, out_ref):
    def W(name):
        off, rows, cols = WLAYOUT[name]          # static python ints
        return wp_ref[off:off + rows, 0:cols]    # static ref slice -> cheap load

    # fused embedding gather (*sqrt(d_model)) + positional encoding: one matmul
    x = jnp.dot(oh_ref[...], W("emb_ext"), preferred_element_type=jnp.float32)

    bias = W("bias")        # additive mask, [R, R]
    for l in range(NLAYERS):                     # static & small -> unrolled
        # ---- multi-head causal self attention (post-norm, dropout = identity)
        attn = None
        for h in range(NHEAD):
            q = jnp.dot(x, W(f"wq_{l}_{h}"),
                        preferred_element_type=jnp.float32) + W(f"bq_{l}_{h}")
            k = jnp.dot(x, W(f"wk_{l}_{h}"),
                        preferred_element_type=jnp.float32) + W(f"bk_{l}_{h}")
            v = jnp.dot(x, W(f"wv_{l}_{h}"),
                        preferred_element_type=jnp.float32) + W(f"bv_{l}_{h}")
            # q @ k.T without materializing a transpose
            s = lax.dot_general(q, k, (((1,), (1,)), ((), ())),
                                preferred_element_type=jnp.float32) + bias
            p = jnp.exp(s)                       # masked entries underflow to 0
            p = p * pl.reciprocal(jnp.sum(p, axis=-1, keepdims=True), approx=True)
            head = jnp.dot(p, v, preferred_element_type=jnp.float32)
            # concat(heads) @ Wo.T == sum_h head_h @ Wo_h (Wo_h pre-sliced on host)
            proj = jnp.dot(head, W(f"wo_{l}_{h}"),
                           preferred_element_type=jnp.float32)
            attn = proj if attn is None else attn + proj
        x = _layernorm(x + attn + W(f"bo_{l}"), W(f"ln1g_{l}"), W(f"ln1b_{l}"))

        # ---- feed forward (ReLU)
        h1 = jnp.maximum(
            jnp.dot(x, W(f"w1_{l}"), preferred_element_type=jnp.float32)
            + W(f"b1_{l}"), 0.0)
        ff = jnp.dot(h1, W(f"w2_{l}"),
                     preferred_element_type=jnp.float32) + W(f"b2_{l}")
        x = _layernorm(x + ff, W(f"ln2g_{l}"), W(f"ln2b_{l}"))

    # ---- final vocab projection (lane-dense 128-wide output)
    out_ref[...] = jnp.dot(x, W("wout"),
                           preferred_element_type=jnp.float32) + W("bout")


# ---------------------------------------------------------------------------
# Host-side helpers
# ---------------------------------------------------------------------------
def positional_encoding(seq, d_model):
    position = jnp.arange(seq, dtype=jnp.float32)[:, None]
    div_term = jnp.exp(jnp.arange(0, d_model, 2, dtype=jnp.float32)
                       * (-math.log(10000.0) / d_model))
    ang = position * div_term                                     # [seq, d_model//2]
    return jnp.stack([jnp.sin(ang), jnp.cos(ang)], axis=-1).reshape(seq, d_model)


def prepare_params(params):
    """One-time host-side preprocessing: transposes, scale folding, per-head
    splits, and packing of everything into a single lane-dense slab."""
    scale = 1.0 / math.sqrt(HEAD_DIM)

    # embedding table (pre-scaled) + per-row positional encoding (row = s*BATCH + b)
    pe_rows = jnp.repeat(positional_encoding(SEQ, D_MODEL), BATCH, axis=0)    # [R, D]
    emb_ext = jnp.concatenate([params["emb"] * math.sqrt(D_MODEL), pe_rows], axis=0)

    # block-diagonal (per batch element) AND causal additive mask over rows
    idx = jnp.arange(R)
    allowed = ((idx[:, None] % BATCH) == (idx[None, :] % BATCH)) & \
              ((idx[None, :] // BATCH) <= (idx[:, None] // BATCH))
    bias = jnp.where(allowed, 0.0, NEG_INF).astype(jnp.float32)

    mats = {"emb_ext": emb_ext, "bias": bias,
            "wout": params["wout"].T, "bout": params["bout"]}
    for l in range(NLAYERS):
        wqkv, bqkv, wo = params["wqkv"][l], params["bqkv"][l], params["wo"][l]
        for h in range(NHEAD):
            qs = slice(h * HEAD_DIM, (h + 1) * HEAD_DIM)
            ks = slice(D_MODEL + h * HEAD_DIM, D_MODEL + (h + 1) * HEAD_DIM)
            vs = slice(2 * D_MODEL + h * HEAD_DIM, 2 * D_MODEL + (h + 1) * HEAD_DIM)
            mats[f"wq_{l}_{h}"] = wqkv[qs].T * scale          # [D_MODEL, HEAD_DIM]
            mats[f"wk_{l}_{h}"] = wqkv[ks].T
            mats[f"wv_{l}_{h}"] = wqkv[vs].T
            mats[f"bq_{l}_{h}"] = (bqkv[qs] * scale)[None, :]
            mats[f"bk_{l}_{h}"] = bqkv[ks][None, :]
            mats[f"bv_{l}_{h}"] = bqkv[vs][None, :]
            mats[f"wo_{l}_{h}"] = wo[:, h * HEAD_DIM:(h + 1) * HEAD_DIM].T
        mats[f"bo_{l}"] = params["bo"][l][None, :]
        mats[f"ln1g_{l}"] = params["ln1g"][l][None, :]
        mats[f"ln1b_{l}"] = params["ln1b"][l][None, :]
        mats[f"ln2g_{l}"] = params["ln2g"][l][None, :]
        mats[f"ln2b_{l}"] = params["ln2b"][l][None, :]
        mats[f"w1_{l}"] = params["w1"][l].T
        mats[f"b1_{l}"] = params["b1"][l][None, :]
        mats[f"w2_{l}"] = params["w2"][l].T
        mats[f"b2_{l}"] = params["b2"][l][None, :]

    wpack = jnp.zeros((WPACK_ROWS, 128), jnp.float32)
    for name, (off, rows, cols) in WLAYOUT.items():
        m = jnp.asarray(mats[name], jnp.float32)
        assert m.shape == (rows, cols), (name, m.shape, (rows, cols))
        wpack = wpack.at[off:off + rows, 0:cols].set(m)
    return wpack


@jax.jit
def transformer_forward(src, wpack):
    # row r = s*BATCH + b (row-major flatten of seq-first src), so the output
    # reshapes straight back to [SEQ, BATCH, NTOKEN] with no transpose.
    ids = src.reshape(R).astype(jnp.int32)
    onehot_ext = jnp.concatenate(
        [jax.nn.one_hot(ids, NTOKEN, dtype=jnp.float32),   # token one-hot
         jnp.eye(R, dtype=jnp.float32)],                    # row one-hot (selects PE)
        axis=1)                                             # [R, NTOKEN + R]
    out = pl.pallas_call(
        transformer_kernel,
        out_shape=jax.ShapeDtypeStruct((R, NTOKEN), jnp.float32),
    )(onehot_ext, wpack)
    return out.reshape(SEQ, BATCH, NTOKEN)


# ---------------- pure-JAX reference (original torch-layout math) ----------------
def _layernorm_ref(x, g, b):
    mu = jnp.mean(x, axis=-1, keepdims=True)
    var = jnp.mean((x - mu) ** 2, axis=-1, keepdims=True)
    return (x - mu) * lax.rsqrt(var + LN_EPS) * g + b


def _ref_single(x, params):
    causal = jnp.tril(jnp.ones((SEQ, SEQ), bool))
    scale = 1.0 / math.sqrt(HEAD_DIM)
    for l in range(NLAYERS):
        qkv = x @ params["wqkv"][l].T + params["bqkv"][l]
        q, k, v = qkv[:, :D_MODEL], qkv[:, D_MODEL:2 * D_MODEL], qkv[:, 2 * D_MODEL:]
        heads = []
        for h in range(NHEAD):
            sl = slice(h * HEAD_DIM, (h + 1) * HEAD_DIM)
            s = (q[:, sl] * scale) @ k[:, sl].T
            s = jnp.where(causal, s, -jnp.inf)
            heads.append(jax.nn.softmax(s, axis=-1) @ v[:, sl])
        attn = jnp.concatenate(heads, -1) @ params["wo"][l].T + params["bo"][l]
        x = _layernorm_ref(x + attn, params["ln1g"][l], params["ln1b"][l])
        ff = jnp.maximum(x @ params["w1"][l].T + params["b1"][l], 0.0) \
             @ params["w2"][l].T + params["b2"][l]
        x = _layernorm_ref(x + ff, params["ln2g"][l], params["ln2b"][l])
    return x @ params["wout"].T + params["bout"][0]


def reference_forward(src, params):
    x = params["emb"][src] * math.sqrt(D_MODEL) \
        + positional_encoding(SEQ, D_MODEL)[:, None, :]
    xb = jnp.transpose(x, (1, 0, 2)).astype(jnp.float32)
    out = jax.vmap(lambda xi: _ref_single(xi, params))(xb)
    return jnp.transpose(out, (1, 0, 2))


# ---------------- deterministic parameter init (shapes from Model.__init__) -------
def init_params(key):
    ks = jax.random.split(key, 8)
    initrange = 0.1
    u = lambda k, shape, a: jax.random.uniform(k, shape, jnp.float32, -a, a)
    return {
        "emb":  u(ks[0], (NTOKEN, D_MODEL), initrange),                 # embedding.weight
        "wqkv": u(ks[1], (NLAYERS, 3 * D_MODEL, D_MODEL),
                  math.sqrt(6.0 / (4 * D_MODEL))),                      # MHA in_proj
        "bqkv": jnp.zeros((NLAYERS, 3 * D_MODEL), jnp.float32),
        "wo":   u(ks[2], (NLAYERS, D_MODEL, D_MODEL), math.sqrt(1.0 / D_MODEL)),
        "bo":   jnp.zeros((NLAYERS, D_MODEL), jnp.float32),
        "ln1g": jnp.ones((NLAYERS, D_MODEL), jnp.float32),
        "ln1b": jnp.zeros((NLAYERS, D_MODEL), jnp.float32),
        "ln2g": jnp.ones((NLAYERS, D_MODEL), jnp.float32),
        "ln2b": jnp.zeros((NLAYERS, D_MODEL), jnp.float32),
        "w1":   u(ks[3], (NLAYERS, D_HID, D_MODEL), math.sqrt(1.0 / D_MODEL)),
        "b1":   u(ks[4], (NLAYERS, D_HID), math.sqrt(1.0 / D_MODEL)),
        "w2":   u(ks[5], (NLAYERS, D_MODEL, D_HID), math.sqrt(1.0 / D_HID)),
        "b2":   u(ks[6], (NLAYERS, D_MODEL), math.sqrt(1.0 / D_HID)),
        "wout": u(ks[7], (NTOKEN, D_MODEL), initrange),                 # linear.weight
        "bout": jnp.zeros((1, NTOKEN), jnp.float32),                    # linear.bias
    }


if __name__ == "__main__":
    key = jax.random.PRNGKey(0)
    k_src, k_par = jax.random.split(key)
    src = jax.random.randint(k_src, (SEQ, BATCH), 0, NTOKEN, dtype=jnp.int32)
    params = init_params(k_par)
    wpack = prepare_params(params)           # one-time host-side weight packing

    out = jax.block_until_ready(transformer_forward(src, wpack))
    assert out.shape == (SEQ, BATCH, NTOKEN), out.shape

    ref = reference_forward(src, params)
    if not jnp.allclose(out, ref, rtol=5e-3, atol=5e-3):
        err = float(jnp.max(jnp.abs(out - ref)))
        raise SystemExit(f"Pallas output does not match reference (max abs err {err})")
    print("KERNEL_OK")
</pallas_src>

<mosaic_0001>
module attributes {stable_mosaic.version = 11 : i64} {
  func.func @transformer_kernel(%arg0: memref<16x144xf32, #tpu.memory_space<vmem>>, %arg1: memref<1048x128xf32, #tpu.memory_space<vmem>>, %arg2: memref<16x128xf32, #tpu.memory_space<vmem>>) attributes {dimension_semantics = [], scalar_prefetch = 0 : i64, scratch_operands = 0 : i64, tpu.core_type = #tpu.core_type<tc>} {
    %c0 = arith.constant 0 : index
    %c0_0 = arith.constant 0 : index
    %0 = vector.load %arg0[%c0, %c0_0] : memref<16x144xf32, #tpu.memory_space<vmem>>, vector<16x144xf32>
    %c0_1 = arith.constant 0 : index
    %c0_2 = arith.constant 0 : index
    %1 = vector.load %arg1[%c0_1, %c0_2] : memref<1048x128xf32, #tpu.memory_space<vmem>>, vector<144x32xf32>
    %cst = arith.constant dense<0.000000e+00> : vector<16x32xf32>
    %2 = tpu.matmul %0, %1, %cst {dimension_numbers = #tpu.dot_dimension_numbers<[1], [0], [0], [1], [0, 0, 1, 1], [], []>} : vector<16x144xf32>, vector<144x32xf32>, vector<16x32xf32> -> vector<16x32xf32>
    %c144 = arith.constant 144 : index
    %c0_3 = arith.constant 0 : index
    %3 = vector.load %arg1[%c144, %c0_3] : memref<1048x128xf32, #tpu.memory_space<vmem>>, vector<16x16xf32>
    %c200 = arith.constant 200 : index
    %c0_4 = arith.constant 0 : index
    %4 = vector.load %arg1[%c200, %c0_4] : memref<1048x128xf32, #tpu.memory_space<vmem>>, vector<32x16xf32>
    %cst_5 = arith.constant dense<0.000000e+00> : vector<16x16xf32>
    %5 = tpu.matmul %2, %4, %cst_5 {dimension_numbers = #tpu.dot_dimension_numbers<[1], [0], [0], [1], [0, 0, 1, 1], [], []>} : vector<16x32xf32>, vector<32x16xf32>, vector<16x16xf32> -> vector<16x16xf32>
    %c312 = arith.constant 312 : index
    %c0_6 = arith.constant 0 : index
    %6 = vector.load %arg1[%c312, %c0_6] : memref<1048x128xf32, #tpu.memory_space<vmem>>, vector<1x16xf32>
    %7 = vector.broadcast %6 : vector<1x16xf32> to vector<16x16xf32>
    %8 = arith.addf %5, %7 : vector<16x16xf32>
    %c232 = arith.constant 232 : index
    %c0_7 = arith.constant 0 : index
    %9 = vector.load %arg1[%c232, %c0_7] : memref<1048x128xf32, #tpu.memory_space<vmem>>, vector<32x16xf32>
    %cst_8 = arith.constant dense<0.000000e+00> : vector<16x16xf32>
    %10 = tpu.matmul %2, %9, %cst_8 {dimension_numbers = #tpu.dot_dimension_numbers<[1], [0], [0], [1], [0, 0, 1, 1], [], []>} : vector<16x32xf32>, vector<32x16xf32>, vector<16x16xf32> -> vector<16x16xf32>
    %c320 = arith.constant 320 : index
    %c0_9 = arith.constant 0 : index
    %11 = vector.load %arg1[%c320, %c0_9] : memref<1048x128xf32, #tpu.memory_space<vmem>>, vector<1x16xf32>
    %12 = vector.broadcast %11 : vector<1x16xf32> to vector<16x16xf32>
    %13 = arith.addf %10, %12 : vector<16x16xf32>
    %c264 = arith.constant 264 : index
    %c0_10 = arith.constant 0 : index
    %14 = vector.load %arg1[%c264, %c0_10] : memref<1048x128xf32, #tpu.memory_space<vmem>>, vector<32x16xf32>
    %cst_11 = arith.constant dense<0.000000e+00> : vector<16x16xf32>
    %15 = tpu.matmul %2, %14, %cst_11 {dimension_numbers = #tpu.dot_dimension_numbers<[1], [0], [0], [1], [0, 0, 1, 1], [], []>} : vector<16x32xf32>, vector<32x16xf32>, vector<16x16xf32> -> vector<16x16xf32>
    %c328 = arith.constant 328 : index
    %c0_12 = arith.constant 0 : index
    %16 = vector.load %arg1[%c328, %c0_12] : memref<1048x128xf32, #tpu.memory_space<vmem>>, vector<1x16xf32>
    %17 = vector.broadcast %16 : vector<1x16xf32> to vector<16x16xf32>
    %18 = arith.addf %15, %17 : vector<16x16xf32>
    %cst_13 = arith.constant dense<0.000000e+00> : vector<16x16xf32>
    %19 = tpu.matmul %8, %13, %cst_13 {dimension_numbers = #tpu.dot_dimension_numbers<[1], [1], [0], [0], [0, 0, 1, 0], [], []>} : vector<16x16xf32>, vector<16x16xf32>, vector<16x16xf32> -> vector<16x16xf32>
    %20 = arith.addf %19, %3 : vector<16x16xf32>
    %21 = math.exp %20 : vector<16x16xf32>
    %cst_14 = arith.constant dense<0.000000e+00> : vector<16xf32>
    %22 = vector.multi_reduction <add>, %21, %cst_14 [1] : vector<16x16xf32> to vector<16xf32>
    %23 = vector.shape_cast %22 : vector<16xf32> to vector<16x1xf32>
    %24 = tpu.reciprocal %23 {approx = true} : vector<16x1xf32> -> vector<16x1xf32>
    %25 = vector.broadcast %24 : vector<16x1xf32> to vector<16x16xf32>
    %26 = arith.mulf %21, %25 : vector<16x16xf32>
    %cst_15 = arith.constant dense<0.000000e+00> : vector<16x16xf32>
    %27 = tpu.matmul %26, %18, %cst_15 {dimension_numbers = #tpu.dot_dimension_numbers<[1], [0], [0], [1], [0, 0, 1, 1], [], []>} : vector<16x16xf32>, vector<16x16xf32>, vector<16x16xf32> -> vector<16x16xf32>
    %c296 = arith.constant 296 : index
    %c0_16 = arith.constant 0 : index
    %28 = vector.load %arg1[%c296, %c0_16] : memref<1048x128xf32, #tpu.memory_space<vmem>>, vector<16x32xf32>
    %cst_17 = arith.constant dense<0.000000e+00> : vector<16x32xf32>
    %29 = tpu.matmul %27, %28, %cst_17 {dimension_numbers = #tpu.dot_dimension_numbers<[1], [0], [0], [1], [0, 0, 1, 1], [], []>} : vector<16x16xf32>, vector<16x32xf32>, vector<16x32xf32> -> vector<16x32xf32>
    %c336 = arith.constant 336 : index
    %c0_18 = arith.constant 0 : index
    %30 = vector.load %arg1[%c336, %c0_18] : memref<1048x128xf32, #tpu.memory_space<vmem>>, vector<32x16xf32>
    %cst_19 = arith.constant dense<0.000000e+00> : vector<16x16xf32>
    %31 = tpu.matmul %2, %30, %cst_19 {dimension_numbers = #tpu.dot_dimension_numbers<[1], [0], [0], [1], [0, 0, 1, 1], [], []>} : vector<16x32xf32>, vector<32x16xf32>, vector<16x16xf32> -> vector<16x16xf32>
    %c448 = arith.constant 448 : index
    %c0_20 = arith.constant 0 : index
    %32 = vector.load %arg1[%c448, %c0_20] : memref<1048x128xf32, #tpu.memory_space<vmem>>, vector<1x16xf32>
    %33 = vector.broadcast %32 : vector<1x16xf32> to vector<16x16xf32>
    %34 = arith.addf %31, %33 : vector<16x16xf32>
    %c368 = arith.constant 368 : index
    %c0_21 = arith.constant 0 : index
    %35 = vector.load %arg1[%c368, %c0_21] : memref<1048x128xf32, #tpu.memory_space<vmem>>, vector<32x16xf32>
    %cst_22 = arith.constant dense<0.000000e+00> : vector<16x16xf32>
    %36 = tpu.matmul %2, %35, %cst_22 {dimension_numbers = #tpu.dot_dimension_numbers<[1], [0], [0], [1], [0, 0, 1, 1], [], []>} : vector<16x32xf32>, vector<32x16xf32>, vector<16x16xf32> -> vector<16x16xf32>
    %c456 = arith.constant 456 : index
    %c0_23 = arith.constant 0 : index
    %37 = vector.load %arg1[%c456, %c0_23] : memref<1048x128xf32, #tpu.memory_space<vmem>>, vector<1x16xf32>
    %38 = vector.broadcast %37 : vector<1x16xf32> to vector<16x16xf32>
    %39 = arith.addf %36, %38 : vector<16x16xf32>
    %c400 = arith.constant 400 : index
    %c0_24 = arith.constant 0 : index
    %40 = vector.load %arg1[%c400, %c0_24] : memref<1048x128xf32, #tpu.memory_space<vmem>>, vector<32x16xf32>
    %cst_25 = arith.constant dense<0.000000e+00> : vector<16x16xf32>
    %41 = tpu.matmul %2, %40, %cst_25 {dimension_numbers = #tpu.dot_dimension_numbers<[1], [0], [0], [1], [0, 0, 1, 1], [], []>} : vector<16x32xf32>, vector<32x16xf32>, vector<16x16xf32> -> vector<16x16xf32>
    %c464 = arith.constant 464 : index
    %c0_26 = arith.constant 0 : index
    %42 = vector.load %arg1[%c464, %c0_26] : memref<1048x128xf32, #tpu.memory_space<vmem>>, vector<1x16xf32>
    %43 = vector.broadcast %42 : vector<1x16xf32> to vector<16x16xf32>
    %44 = arith.addf %41, %43 : vector<16x16xf32>
    %cst_27 = arith.constant dense<0.000000e+00> : vector<16x16xf32>
    %45 = tpu.matmul %34, %39, %cst_27 {dimension_numbers = #tpu.dot_dimension_numbers<[1], [1], [0], [0], [0, 0, 1, 0], [], []>} : vector<16x16xf32>, vector<16x16xf32>, vector<16x16xf32> -> vector<16x16xf32>
    %46 = arith.addf %45, %3 : vector<16x16xf32>
    %47 = math.exp %46 : vector<16x16xf32>
    %cst_28 = arith.constant dense<0.000000e+00> : vector<16xf32>
    %48 = vector.multi_reduction <add>, %47, %cst_28 [1] : vector<16x16xf32> to vector<16xf32>
    %49 = vector.shape_cast %48 : vector<16xf32> to vector<16x1xf32>
    %50 = tpu.reciprocal %49 {approx = true} : vector<16x1xf32> -> vector<16x1xf32>
    %51 = vector.broadcast %50 : vector<16x1xf32> to vector<16x16xf32>
    %52 = arith.mulf %47, %51 : vector<16x16xf32>
    %cst_29 = arith.constant dense<0.000000e+00> : vector<16x16xf32>
    %53 = tpu.matmul %52, %44, %cst_29 {dimension_numbers = #tpu.dot_dimension_numbers<[1], [0], [0], [1], [0, 0, 1, 1], [], []>} : vector<16x16xf32>, vector<16x16xf32>, vector<16x16xf32> -> vector<16x16xf32>
    %c432 = arith.constant 432 : index
    %c0_30 = arith.constant 0 : index
    %54 = vector.load %arg1[%c432, %c0_30] : memref<1048x128xf32, #tpu.memory_space<vmem>>, vector<16x32xf32>
    %cst_31 = arith.constant dense<0.000000e+00> : vector<16x32xf32>
    %55 = tpu.matmul %53, %54, %cst_31 {dimension_numbers = #tpu.dot_dimension_numbers<[1], [0], [0], [1], [0, 0, 1, 1], [], []>} : vector<16x16xf32>, vector<16x32xf32>, vector<16x32xf32> -> vector<16x32xf32>
    %56 = arith.addf %29, %55 : vector<16x32xf32>
    %57 = arith.addf %2, %56 : vector<16x32xf32>
    %c472 = arith.constant 472 : index
    %c0_32 = arith.constant 0 : index
    %58 = vector.load %arg1[%c472, %c0_32] : memref<1048x128xf32, #tpu.memory_space<vmem>>, vector<1x32xf32>
    %59 = vector.broadcast %58 : vector<1x32xf32> to vector<16x32xf32>
    %60 = arith.addf %57, %59 : vector<16x32xf32>
    %c480 = arith.constant 480 : index
    %c0_33 = arith.constant 0 : index
    %61 = vector.load %arg1[%c480, %c0_33] : memref<1048x128xf32, #tpu.memory_space<vmem>>, vector<1x32xf32>
    %c488 = arith.constant 488 : index
    %c0_34 = arith.constant 0 : index
    %62 = vector.load %arg1[%c488, %c0_34] : memref<1048x128xf32, #tpu.memory_space<vmem>>, vector<1x32xf32>
    %cst_35 = arith.constant dense<0.000000e+00> : vector<16xf32>
    %63 = vector.multi_reduction <add>, %60, %cst_35 [1] : vector<16x32xf32> to vector<16xf32>
    %64 = vector.shape_cast %63 : vector<16xf32> to vector<16x1xf32>
    %cst_36 = arith.constant 3.200000e+01 : f32
    %65 = vector.broadcast %cst_36 : f32 to vector<16x1xf32>
    %66 = arith.divf %64, %65 : vector<16x1xf32>
    %67 = arith.mulf %60, %60 : vector<16x32xf32>
    %cst_37 = arith.constant dense<0.000000e+00> : vector<16xf32>
    %68 = vector.multi_reduction <add>, %67, %cst_37 [1] : vector<16x32xf32> to vector<16xf32>
    %69 = vector.shape_cast %68 : vector<16xf32> to vector<16x1xf32>
    %cst_38 = arith.constant 3.200000e+01 : f32
    %70 = vector.broadcast %cst_38 : f32 to vector<16x1xf32>
    %71 = arith.divf %69, %70 : vector<16x1xf32>
    %72 = arith.mulf %66, %66 : vector<16x1xf32>
    %73 = arith.subf %71, %72 : vector<16x1xf32>
    %74 = vector.broadcast %66 : vector<16x1xf32> to vector<16x32xf32>
    %75 = arith.subf %60, %74 : vector<16x32xf32>
    %cst_39 = arith.constant 9.99999974E-6 : f32
    %76 = vector.broadcast %cst_39 : f32 to vector<16x1xf32>
    %77 = arith.addf %73, %76 : vector<16x1xf32>
    %78 = math.rsqrt %77 : vector<16x1xf32>
    %79 = vector.broadcast %78 : vector<16x1xf32> to vector<16x32xf32>
    %80 = arith.mulf %75, %79 : vector<16x32xf32>
    %81 = vector.broadcast %61 : vector<1x32xf32> to vector<16x32xf32>
    %82 = arith.mulf %80, %81 : vector<16x32xf32>
    %83 = vector.broadcast %62 : vector<1x32xf32> to vector<16x32xf32>
    %84 = arith.addf %82, %83 : vector<16x32xf32>
    %c512 = arith.constant 512 : index
    %c0_40 = arith.constant 0 : index
    %85 = vector.load %arg1[%c512, %c0_40] : memref<1048x128xf32, #tpu.memory_space<vmem>>, vector<32x64xf32>
    %cst_41 = arith.constant dense<0.000000e+00> : vector<16x64xf32>
    %86 = tpu.matmul %84, %85, %cst_41 {dimension_numbers = #tpu.dot_dimension_numbers<[1], [0], [0], [1], [0, 0, 1, 1], [], []>} : vector<16x32xf32>, vector<32x64xf32>, vector<16x64xf32> -> vector<16x64xf32>
    %c544 = arith.constant 544 : index
    %c0_42 = arith.constant 0 : index
    %87 = vector.load %arg1[%c544, %c0_42] : memref<1048x128xf32, #tpu.memory_space<vmem>>, vector<1x64xf32>
    %88 = vector.broadcast %87 : vector<1x64xf32> to vector<16x64xf32>
    %89 = arith.addf %86, %88 : vector<16x64xf32>
    %cst_43 = arith.constant 0.000000e+00 : f32
    %90 = vector.broadcast %cst_43 : f32 to vector<16x64xf32>
    %91 = arith.maximumf %89, %90 : vector<16x64xf32>
    %c552 = arith.constant 552 : index
    %c0_44 = arith.constant 0 : index
    %92 = vector.load %arg1[%c552, %c0_44] : memref<1048x128xf32, #tpu.memory_space<vmem>>, vector<64x32xf32>
    %cst_45 = arith.constant dense<0.000000e+00> : vector<16x32xf32>
    %93 = tpu.matmul %91, %92, %cst_45 {dimension_numbers = #tpu.dot_dimension_numbers<[1], [0], [0], [1], [0, 0, 1, 1], [], []>} : vector<16x64xf32>, vector<64x32xf32>, vector<16x32xf32> -> vector<16x32xf32>
    %c616 = arith.constant 616 : index
    %c0_46 = arith.constant 0 : index
    %94 = vector.load %arg1[%c616, %c0_46] : memref<1048x128xf32, #tpu.memory_space<vmem>>, vector<1x32xf32>
    %95 = vector.broadcast %94 : vector<1x32xf32> to vector<16x32xf32>
    %96 = arith.addf %93, %95 : vector<16x32xf32>
    %97 = arith.addf %84, %96 : vector<16x32xf32>
    %c496 = arith.constant 496 : index
    %c0_47 = arith.constant 0 : index
    %98 = vector.load %arg1[%c496, %c0_47] : memref<1048x128xf32, #tpu.memory_space<vmem>>, vector<1x32xf32>
    %c504 = arith.constant 504 : index
    %c0_48 = arith.constant 0 : index
    %99 = vector.load %arg1[%c504, %c0_48] : memref<1048x128xf32, #tpu.memory_space<vmem>>, vector<1x32xf32>
    %cst_49 = arith.constant dense<0.000000e+00> : vector<16xf32>
    %100 = vector.multi_reduction <add>, %97, %cst_49 [1] : vector<16x32xf32> to vector<16xf32>
    %101 = vector.shape_cast %100 : vector<16xf32> to vector<16x1xf32>
    %cst_50 = arith.constant 3.200000e+01 : f32
    %102 = vector.broadcast %cst_50 : f32 to vector<16x1xf32>
    %103 = arith.divf %101, %102 : vector<16x1xf32>
    %104 = arith.mulf %97, %97 : vector<16x32xf32>
    %cst_51 = arith.constant dense<0.000000e+00> : vector<16xf32>
    %105 = vector.multi_reduction <add>, %104, %cst_51 [1] : vector<16x32xf32> to vector<16xf32>
    %106 = vector.shape_cast %105 : vector<16xf32> to vector<16x1xf32>
    %cst_52 = arith.constant 3.200000e+01 : f32
    %107 = vector.broadcast %cst_52 : f32 to vector<16x1xf32>
    %108 = arith.divf %106, %107 : vector<16x1xf32>
    %109 = arith.mulf %103, %103 : vector<16x1xf32>
    %110 = arith.subf %108, %109 : vector<16x1xf32>
    %111 = vector.broadcast %103 : vector<16x1xf32> to vector<16x32xf32>
    %112 = arith.subf %97, %111 : vector<16x32xf32>
    %cst_53 = arith.constant 9.99999974E-6 : f32
    %113 = vector.broadcast %cst_53 : f32 to vector<16x1xf32>
    %114 = arith.addf %110, %113 : vector<16x1xf32>
    %115 = math.rsqrt %114 : vector<16x1xf32>
    %116 = vector.broadcast %115 : vector<16x1xf32> to vector<16x32xf32>
    %117 = arith.mulf %112, %116 : vector<16x32xf32>
    %118 = vector.broadcast %98 : vector<1x32xf32> to vector<16x32xf32>
    %119 = arith.mulf %117, %118 : vector<16x32xf32>
    %120 = vector.broadcast %99 : vector<1x32xf32> to vector<16x32xf32>
    %121 = arith.addf %119, %120 : vector<16x32xf32>
    %c624 = arith.constant 624 : index
    %c0_54 = arith.constant 0 : index
    %122 = vector.load %arg1[%c624, %c0_54] : memref<1048x128xf32, #tpu.memory_space<vmem>>, vector<32x16xf32>
    %cst_55 = arith.constant dense<0.000000e+00> : vector<16x16xf32>
    %123 = tpu.matmul %121, %122, %cst_55 {dimension_numbers = #tpu.dot_dimension_numbers<[1], [0], [0], [1], [0, 0, 1, 1], [], []>} : vector<16x32xf32>, vector<32x16xf32>, vector<16x16xf32> -> vector<16x16xf32>
    %c736 = arith.constant 736 : index
    %c0_56 = arith.constant 0 : index
    %124 = vector.load %arg1[%c736, %c0_56] : memref<1048x128xf32, #tpu.memory_space<vmem>>, vector<1x16xf32>
    %125 = vector.broadcast %124 : vector<1x16xf32> to vector<16x16xf32>
    %126 = arith.addf %123, %125 : vector<16x16xf32>
    %c656 = arith.constant 656 : index
    %c0_57 = arith.constant 0 : index
    %127 = vector.load %arg1[%c656, %c0_57] : memref<1048x128xf32, #tpu.memory_space<vmem>>, vector<32x16xf32>
    %cst_58 = arith.constant dense<0.000000e+00> : vector<16x16xf32>
    %128 = tpu.matmul %121, %127, %cst_58 {dimension_numbers = #tpu.dot_dimension_numbers<[1], [0], [0], [1], [0, 0, 1, 1], [], []>} : vector<16x32xf32>, vector<32x16xf32>, vector<16x16xf32> -> vector<16x16xf32>
    %c744 = arith.constant 744 : index
    %c0_59 = arith.constant 0 : index
    %129 = vector.load %arg1[%c744, %c0_59] : memref<1048x128xf32, #tpu.memory_space<vmem>>, vector<1x16xf32>
    %130 = vector.broadcast %129 : vector<1x16xf32> to vector<16x16xf32>
    %131 = arith.addf %128, %130 : vector<16x16xf32>
    %c688 = arith.constant 688 : index
    %c0_60 = arith.constant 0 : index
    %132 = vector.load %arg1[%c688, %c0_60] : memref<1048x128xf32, #tpu.memory_space<vmem>>, vector<32x16xf32>
    %cst_61 = arith.constant dense<0.000000e+00> : vector<16x16xf32>
    %133 = tpu.matmul %121, %132, %cst_61 {dimension_numbers = #tpu.dot_dimension_numbers<[1], [0], [0], [1], [0, 0, 1, 1], [], []>} : vector<16x32xf32>, vector<32x16xf32>, vector<16x16xf32> -> vector<16x16xf32>
    %c752 = arith.constant 752 : index
    %c0_62 = arith.constant 0 : index
    %134 = vector.load %arg1[%c752, %c0_62] : memref<1048x128xf32, #tpu.memory_space<vmem>>, vector<1x16xf32>
    %135 = vector.broadcast %134 : vector<1x16xf32> to vector<16x16xf32>
    %136 = arith.addf %133, %135 : vector<16x16xf32>
    %cst_63 = arith.constant dense<0.000000e+00> : vector<16x16xf32>
    %137 = tpu.matmul %126, %131, %cst_63 {dimension_numbers = #tpu.dot_dimension_numbers<[1], [1], [0], [0], [0, 0, 1, 0], [], []>} : vector<16x16xf32>, vector<16x16xf32>, vector<16x16xf32> -> vector<16x16xf32>
    %138 = arith.addf %137, %3 : vector<16x16xf32>
    %139 = math.exp %138 : vector<16x16xf32>
    %cst_64 = arith.constant dense<0.000000e+00> : vector<16xf32>
    %140 = vector.multi_reduction <add>, %139, %cst_64 [1] : vector<16x16xf32> to vector<16xf32>
    %141 = vector.shape_cast %140 : vector<16xf32> to vector<16x1xf32>
    %142 = tpu.reciprocal %141 {approx = true} : vector<16x1xf32> -> vector<16x1xf32>
    %143 = vector.broadcast %142 : vector<16x1xf32> to vector<16x16xf32>
    %144 = arith.mulf %139, %143 : vector<16x16xf32>
    %cst_65 = arith.constant dense<0.000000e+00> : vector<16x16xf32>
    %145 = tpu.matmul %144, %136, %cst_65 {dimension_numbers = #tpu.dot_dimension_numbers<[1], [0], [0], [1], [0, 0, 1, 1], [], []>} : vector<16x16xf32>, vector<16x16xf32>, vector<16x16xf32> -> vector<16x16xf32>
    %c720 = arith.constant 720 : index
    %c0_66 = arith.constant 0 : index
    %146 = vector.load %arg1[%c720, %c0_66] : memref<1048x128xf32, #tpu.memory_space<vmem>>, vector<16x32xf32>
    %cst_67 = arith.constant dense<0.000000e+00> : vector<16x32xf32>
    %147 = tpu.matmul %145, %146, %cst_67 {dimension_numbers = #tpu.dot_dimension_numbers<[1], [0], [0], [1], [0, 0, 1, 1], [], []>} : vector<16x16xf32>, vector<16x32xf32>, vector<16x32xf32> -> vector<16x32xf32>
    %c760 = arith.constant 760 : index
    %c0_68 = arith.constant 0 : index
    %148 = vector.load %arg1[%c760, %c0_68] : memref<1048x128xf32, #tpu.memory_space<vmem>>, vector<32x16xf32>
    %cst_69 = arith.constant dense<0.000000e+00> : vector<16x16xf32>
    %149 = tpu.matmul %121, %148, %cst_69 {dimension_numbers = #tpu.dot_dimension_numbers<[1], [0], [0], [1], [0, 0, 1, 1], [], []>} : vector<16x32xf32>, vector<32x16xf32>, vector<16x16xf32> -> vector<16x16xf32>
    %c872 = arith.constant 872 : index
    %c0_70 = arith.constant 0 : index
    %150 = vector.load %arg1[%c872, %c0_70] : memref<1048x128xf32, #tpu.memory_space<vmem>>, vector<1x16xf32>
    %151 = vector.broadcast %150 : vector<1x16xf32> to vector<16x16xf32>
    %152 = arith.addf %149, %151 : vector<16x16xf32>
    %c792 = arith.constant 792 : index
    %c0_71 = arith.constant 0 : index
    %153 = vector.load %arg1[%c792, %c0_71] : memref<1048x128xf32, #tpu.memory_space<vmem>>, vector<32x16xf32>
    %cst_72 = arith.constant dense<0.000000e+00> : vector<16x16xf32>
    %154 = tpu.matmul %121, %153, %cst_72 {dimension_numbers = #tpu.dot_dimension_numbers<[1], [0], [0], [1], [0, 0, 1, 1], [], []>} : vector<16x32xf32>, vector<32x16xf32>, vector<16x16xf32> -> vector<16x16xf32>
    %c880 = arith.constant 880 : index
    %c0_73 = arith.constant 0 : index
    %155 = vector.load %arg1[%c880, %c0_73] : memref<1048x128xf32, #tpu.memory_space<vmem>>, vector<1x16xf32>
    %156 = vector.broadcast %155 : vector<1x16xf32> to vector<16x16xf32>
    %157 = arith.addf %154, %156 : vector<16x16xf32>
    %c824 = arith.constant 824 : index
    %c0_74 = arith.constant 0 : index
    %158 = vector.load %arg1[%c824, %c0_74] : memref<1048x128xf32, #tpu.memory_space<vmem>>, vector<32x16xf32>
    %cst_75 = arith.constant dense<0.000000e+00> : vector<16x16xf32>
    %159 = tpu.matmul %121, %158, %cst_75 {dimension_numbers = #tpu.dot_dimension_numbers<[1], [0], [0], [1], [0, 0, 1, 1], [], []>} : vector<16x32xf32>, vector<32x16xf32>, vector<16x16xf32> -> vector<16x16xf32>
    %c888 = arith.constant 888 : index
    %c0_76 = arith.constant 0 : index
    %160 = vector.load %arg1[%c888, %c0_76] : memref<1048x128xf32, #tpu.memory_space<vmem>>, vector<1x16xf32>
    %161 = vector.broadcast %160 : vector<1x16xf32> to vector<16x16xf32>
    %162 = arith.addf %159, %161 : vector<16x16xf32>
    %cst_77 = arith.constant dense<0.000000e+00> : vector<16x16xf32>
    %163 = tpu.matmul %152, %157, %cst_77 {dimension_numbers = #tpu.dot_dimension_numbers<[1], [1], [0], [0], [0, 0, 1, 0], [], []>} : vector<16x16xf32>, vector<16x16xf32>, vector<16x16xf32> -> vector<16x16xf32>
    %164 = arith.addf %163, %3 : vector<16x16xf32>
    %165 = math.exp %164 : vector<16x16xf32>
    %cst_78 = arith.constant dense<0.000000e+00> : vector<16xf32>
    %166 = vector.multi_reduction <add>, %165, %cst_78 [1] : vector<16x16xf32> to vector<16xf32>
    %167 = vector.shape_cast %166 : vector<16xf32> to vector<16x1xf32>
    %168 = tpu.reciprocal %167 {approx = true} : vector<16x1xf32> -> vector<16x1xf32>
    %169 = vector.broadcast %168 : vector<16x1xf32> to vector<16x16xf32>
    %170 = arith.mulf %165, %169 : vector<16x16xf32>
    %cst_79 = arith.constant dense<0.000000e+00> : vector<16x16xf32>
    %171 = tpu.matmul %170, %162, %cst_79 {dimension_numbers = #tpu.dot_dimension_numbers<[1], [0], [0], [1], [0, 0, 1, 1], [], []>} : vector<16x16xf32>, vector<16x16xf32>, vector<16x16xf32> -> vector<16x16xf32>
    %c856 = arith.constant 856 : index
    %c0_80 = arith.constant 0 : index
    %172 = vector.load %arg1[%c856, %c0_80] : memref<1048x128xf32, #tpu.memory_space<vmem>>, vector<16x32xf32>
    %cst_81 = arith.constant dense<0.000000e+00> : vector<16x32xf32>
    %173 = tpu.matmul %171, %172, %cst_81 {dimension_numbers = #tpu.dot_dimension_numbers<[1], [0], [0], [1], [0, 0, 1, 1], [], []>} : vector<16x16xf32>, vector<16x32xf32>, vector<16x32xf32> -> vector<16x32xf32>
    %174 = arith.addf %147, %173 : vector<16x32xf32>
    %175 = arith.addf %121, %174 : vector<16x32xf32>
    %c896 = arith.constant 896 : index
    %c0_82 = arith.constant 0 : index
    %176 = vector.load %arg1[%c896, %c0_82] : memref<1048x128xf32, #tpu.memory_space<vmem>>, vector<1x32xf32>
    %177 = vector.broadcast %176 : vector<1x32xf32> to vector<16x32xf32>
    %178 = arith.addf %175, %177 : vector<16x32xf32>
    %c904 = arith.constant 904 : index
    %c0_83 = arith.constant 0 : index
    %179 = vector.load %arg1[%c904, %c0_83] : memref<1048x128xf32, #tpu.memory_space<vmem>>, vector<1x32xf32>
    %c912 = arith.constant 912 : index
    %c0_84 = arith.constant 0 : index
    %180 = vector.load %arg1[%c912, %c0_84] : memref<1048x128xf32, #tpu.memory_space<vmem>>, vector<1x32xf32>
    %cst_85 = arith.constant dense<0.000000e+00> : vector<16xf32>
    %181 = vector.multi_reduction <add>, %178, %cst_85 [1] : vector<16x32xf32> to vector<16xf32>
    %182 = vector.shape_cast %181 : vector<16xf32> to vector<16x1xf32>
    %cst_86 = arith.constant 3.200000e+01 : f32
    %183 = vector.broadcast %cst_86 : f32 to vector<16x1xf32>
    %184 = arith.divf %182, %183 : vector<16x1xf32>
    %185 = arith.mulf %178, %178 : vector<16x32xf32>
    %cst_87 = arith.constant dense<0.000000e+00> : vector<16xf32>
    %186 = vector.multi_reduction <add>, %185, %cst_87 [1] : vector<16x32xf32> to vector<16xf32>
    %187 = vector.shape_cast %186 : vector<16xf32> to vector<16x1xf32>
    %cst_88 = arith.constant 3.200000e+01 : f32
    %188 = vector.broadcast %cst_88 : f32 to vector<16x1xf32>
    %189 = arith.divf %187, %188 : vector<16x1xf32>
    %190 = arith.mulf %184, %184 : vector<16x1xf32>
    %191 = arith.subf %189, %190 : vector<16x1xf32>
    %192 = vector.broadcast %184 : vector<16x1xf32> to vector<16x32xf32>
    %193 = arith.subf %178, %192 : vector<16x32xf32>
    %cst_89 = arith.constant 9.99999974E-6 : f32
    %194 = vector.broadcast %cst_89 : f32 to vector<16x1xf32>
    %195 = arith.addf %191, %194 : vector<16x1xf32>
    %196 = math.rsqrt %195 : vector<16x1xf32>
    %197 = vector.broadcast %196 : vector<16x1xf32> to vector<16x32xf32>
    %198 = arith.mulf %193, %197 : vector<16x32xf32>
    %199 = vector.broadcast %179 : vector<1x32xf32> to vector<16x32xf32>
    %200 = arith.mulf %198, %199 : vector<16x32xf32>
    %201 = vector.broadcast %180 : vector<1x32xf32> to vector<16x32xf32>
    %202 = arith.addf %200, %201 : vector<16x32xf32>
    %c936 = arith.constant 936 : index
    %c0_90 = arith.constant 0 : index
    %203 = vector.load %arg1[%c936, %c0_90] : memref<1048x128xf32, #tpu.memory_space<vmem>>, vector<32x64xf32>
    %cst_91 = arith.constant dense<0.000000e+00> : vector<16x64xf32>
    %204 = tpu.matmul %202, %203, %cst_91 {dimension_numbers = #tpu.dot_dimension_numbers<[1], [0], [0], [1], [0, 0, 1, 1], [], []>} : vector<16x32xf32>, vector<32x64xf32>, vector<16x64xf32> -> vector<16x64xf32>
    %c968 = arith.constant 968 : index
    %c0_92 = arith.constant 0 : index
    %205 = vector.load %arg1[%c968, %c0_92] : memref<1048x128xf32, #tpu.memory_space<vmem>>, vector<1x64xf32>
    %206 = vector.broadcast %205 : vector<1x64xf32> to vector<16x64xf32>
    %207 = arith.addf %204, %206 : vector<16x64xf32>
    %cst_93 = arith.constant 0.000000e+00 : f32
    %208 = vector.broadcast %cst_93 : f32 to vector<16x64xf32>
    %209 = arith.maximumf %207, %208 : vector<16x64xf32>
    %c976 = arith.constant 976 : index
    %c0_94 = arith.constant 0 : index
    %210 = vector.load %arg1[%c976, %c0_94] : memref<1048x128xf32, #tpu.memory_space<vmem>>, vector<64x32xf32>
    %cst_95 = arith.constant dense<0.000000e+00> : vector<16x32xf32>
    %211 = tpu.matmul %209, %210, %cst_95 {dimension_numbers = #tpu.dot_dimension_numbers<[1], [0], [0], [1], [0, 0, 1, 1], [], []>} : vector<16x64xf32>, vector<64x32xf32>, vector<16x32xf32> -> vector<16x32xf32>
    %c1040 = arith.constant 1040 : index
    %c0_96 = arith.constant 0 : index
    %212 = vector.load %arg1[%c1040, %c0_96] : memref<1048x128xf32, #tpu.memory_space<vmem>>, vector<1x32xf32>
    %213 = vector.broadcast %212 : vector<1x32xf32> to vector<16x32xf32>
    %214 = arith.addf %211, %213 : vector<16x32xf32>
    %215 = arith.addf %202, %214 : vector<16x32xf32>
    %c920 = arith.constant 920 : index
    %c0_97 = arith.constant 0 : index
    %216 = vector.load %arg1[%c920, %c0_97] : memref<1048x128xf32, #tpu.memory_space<vmem>>, vector<1x32xf32>
    %c928 = arith.constant 928 : index
    %c0_98 = arith.constant 0 : index
    %217 = vector.load %arg1[%c928, %c0_98] : memref<1048x128xf32, #tpu.memory_space<vmem>>, vector<1x32xf32>
    %cst_99 = arith.constant dense<0.000000e+00> : vector<16xf32>
    %218 = vector.multi_reduction <add>, %215, %cst_99 [1] : vector<16x32xf32> to vector<16xf32>
    %219 = vector.shape_cast %218 : vector<16xf32> to vector<16x1xf32>
    %cst_100 = arith.constant 3.200000e+01 : f32
    %220 = vector.broadcast %cst_100 : f32 to vector<16x1xf32>
    %221 = arith.divf %219, %220 : vector<16x1xf32>
    %222 = arith.mulf %215, %215 : vector<16x32xf32>
    %cst_101 = arith.constant dense<0.000000e+00> : vector<16xf32>
    %223 = vector.multi_reduction <add>, %222, %cst_101 [1] : vector<16x32xf32> to vector<16xf32>
    %224 = vector.shape_cast %223 : vector<16xf32> to vector<16x1xf32>
    %cst_102 = arith.constant 3.200000e+01 : f32
    %225 = vector.broadcast %cst_102 : f32 to vector<16x1xf32>
    %226 = arith.divf %224, %225 : vector<16x1xf32>
    %227 = arith.mulf %221, %221 : vector<16x1xf32>
    %228 = arith.subf %226, %227 : vector<16x1xf32>
    %229 = vector.broadcast %221 : vector<16x1xf32> to vector<16x32xf32>
    %230 = arith.subf %215, %229 : vector<16x32xf32>
    %cst_103 = arith.constant 9.99999974E-6 : f32
    %231 = vector.broadcast %cst_103 : f32 to vector<16x1xf32>
    %232 = arith.addf %228, %231 : vector<16x1xf32>
    %233 = math.rsqrt %232 : vector<16x1xf32>
    %234 = vector.broadcast %233 : vector<16x1xf32> to vector<16x32xf32>
    %235 = arith.mulf %230, %234 : vector<16x32xf32>
    %236 = vector.broadcast %216 : vector<1x32xf32> to vector<16x32xf32>
    %237 = arith.mulf %235, %236 : vector<16x32xf32>
    %238 = vector.broadcast %217 : vector<1x32xf32> to vector<16x32xf32>
    %239 = arith.addf %237, %238 : vector<16x32xf32>
    %c160 = arith.constant 160 : index
    %c0_104 = arith.constant 0 : index
    %240 = vector.load %arg1[%c160, %c0_104] : memref<1048x128xf32, #tpu.memory_space<vmem>>, vector<32x128xf32>
    %cst_105 = arith.constant dense<0.000000e+00> : vector<16x128xf32>
    %241 = tpu.matmul %239, %240, %cst_105 {dimension_numbers = #tpu.dot_dimension_numbers<[1], [0], [0], [1], [0, 0, 1, 1], [], []>} : vector<16x32xf32>, vector<32x128xf32>, vector<16x128xf32> -> vector<16x128xf32>
    %c192 = arith.constant 192 : index
    %c0_106 = arith.constant 0 : index
    %242 = vector.load %arg1[%c192, %c0_106] : memref<1048x128xf32, #tpu.memory_space<vmem>>, vector<1x128xf32>
    %243 = vector.broadcast %242 : vector<1x128xf32> to vector<16x128xf32>
    %244 = arith.addf %241, %243 : vector<16x128xf32>
    %c0_107 = arith.constant 0 : index
    %c0_108 = arith.constant 0 : index
    %245 = vector.load %arg2[%c0_107, %c0_108] : memref<16x128xf32, #tpu.memory_space<vmem>>, vector<16x128xf32>
    tpu.vector_store %arg2[%c0_107, %c0_108], %244 {strides = array<i32>} : memref<16x128xf32, #tpu.memory_space<vmem>>, vector<16x128xf32>,
    return
  }
}

</mosaic_0001>

<llo_original>
// kernel: eq.1
$region0: #{eq.1}
  %s0 = inlined_call_operand.vmem [shape: s32[8,2], index: 0, kind: input, shape index: {}]
  %s1 = inlined_call_operand.vmem [shape: s32[16], index: 1, kind: output, shape index: {}]
  $region1: #{eq.1} parent=0
    #allocation0 [shape = 'u8[4096]{0}', space=vmem, size = 0x1000, scoped, tag = 'scoped mem for output reshape']
    %v2 = vld [vmem:[%s0] sm:$0x1]
    %vm3 = vcmask 15360
    %4 = vst.msk [vmem:[#allocation0] sm:$0x1] %vm3, %v2
    %s5 = scalar_lea.vmem %s0, 7
    %v6 = vld [vmem:[%s5] sm:$0x1]
    %7 = vrot.lane.b32.xlu0 %v6, 14
    %v8 = vpop.permute.xlu0 %7
    %vm9 = vcmask 130160
    %10 = vst.msk [vmem:[#allocation0] sm:$0x1] %vm9, %v8
    %s11 = scalar_lea.vmem %s0, 6
    %v12 = vld [vmem:[%s11] sm:$0x1]
    %13 = vrot.lane.b32.xlu0 %v12, 12
    %v14 = vpop.permute.xlu0 %13
    %vm15 = vcmask 113760
    %16 = vst.msk [vmem:[#allocation0] sm:$0x1] %vm15, %v14
    %s17 = scalar_lea.vmem %s0, 5
    %v18 = vld [vmem:[%s17] sm:$0x1]
    %19 = vrot.lane.b32.xlu0 %v18, 10
    %v20 = vpop.permute.xlu0 %19
    %vm21 = vcmask 97360
    %22 = vst.msk [vmem:[#allocation0] sm:$0x1] %vm21, %v20
    %s23 = scalar_lea.vmem %s0, 4
    %v24 = vld [vmem:[%s23] sm:$0x1]
    %25 = vrot.lane.b32.xlu0 %v24, 8
    %v26 = vpop.permute.xlu0 %25
    %vm27 = vcmask 80960
    %28 = vst.msk [vmem:[#allocation0] sm:$0x1] %vm27, %v26
    %s29 = scalar_lea.vmem %s0, 3
    %v30 = vld [vmem:[%s29] sm:$0x1]
    %31 = vrot.lane.b32.xlu0 %v30, 6
    %v32 = vpop.permute.xlu0 %31
    %vm33 = vcmask 64560
    %34 = vst.msk [vmem:[#allocation0] sm:$0x1] %vm33, %v32
    %s35 = scalar_lea.vmem %s0, 2
    %v36 = vld [vmem:[%s35] sm:$0x1]
    %37 = vrot.lane.b32.xlu0 %v36, 4
    %v38 = vpop.permute.xlu0 %37
    %vm39 = vcmask 48160
    %40 = vst.msk [vmem:[#allocation0] sm:$0x1] %vm39, %v38
    %s41 = scalar_lea.vmem %s0, 1
    %v42 = vld [vmem:[%s41] sm:$0x1]
    %43 = vrot.lane.b32.xlu0 %v42, 2
    %v44 = vpop.permute.xlu0 %43
    %vm45 = vcmask 31760
    %46 = vst.msk [vmem:[#allocation0] sm:$0x1] %vm45, %v44
    %s48 = sshll.u32 1, 1
    %s49 = ssub.s32 %s48, 1
    %v51 = vld [vmem:[#allocation0] sm:%s49]
    %s52 = sshll.u32 1, 1
    %s53 = ssub.s32 %s52, 1
    %54 = vst [vmem:[%s1] sm:%s53] %v51

// kernel: transformer_forward.1
$region0: #{transformer_forward.1}
  #allocation0 [shape = 'u32[]', space=smem, size = 0x4, offset = 0x4, fixed_abs, tag = 'smem constant byte address 0x4 - core index']
  #allocation1 [shape = 'u32[144,128]{1,0:T(1,128)}', space=vmem, size = 0x12000, scoped, tag = 'internal scratch']
  %s0 = inlined_call_operand.vmem [shape: f32[16,144], index: 0, kind: input, shape index: {}]
  %s1 = inlined_call_operand.hbm [shape: f32[1048,128], index: 1, kind: input, shape index: {}]
  %s2 = inlined_call_operand.hbm [shape: f32[16,128], index: 2, kind: output, shape index: {}]
  %s3 = sld [smem:[#allocation0]]
  $region22: #{transformer_forward.1} parent=0
    _
  %s5 = ssub.s32 1, %s3
  %s6 = scalar_select 0, %s5, %s3
  $region1: #{transformer_forward.1} parent=0
    #allocation2 [shape = 'u8[536576]{0}', space=vmem, size = 0x83000, scoped, tag = 'input window, operand 1, single buffered']
    #allocation3 [shape = 's32[1]{0}', space=sflag, size = 0x4, scoped, tag = 'scoped memory for transformer_forward.1']
    #allocation4 [shape = 's32[1]{0}', space=sflag, size = 0x4, scoped, tag = 'scoped memory for transformer_forward.1']
    #allocation5 [shape = 'u8[8192]{0}', space=vmem, size = 0x2000, scoped, tag = 'output window, operand 0, single buffered']
    %7 = vsyncpa [#allocation3], 0
    %8 = vsyncpa [#allocation4], 0
    // Predicated region
    $region2: #{transformer_forward.1} parent=1 // pred_check
      _
    $region3: #{transformer_forward.1} parent=1 // pred_check_branch
      %10 = sbr.rel (0) target = $region5
    $region4: #{transformer_forward.1} parent=1 // pred_region
      _
    $region5: #{transformer_forward.1} parent=1 // pred_fallthru
      _
    // Predicated region
    $region6: #{transformer_forward.1} parent=1 // pred_check
      _
    $region7: #{transformer_forward.1} parent=1 // pred_check_branch
      %12 = sbr.rel (0) target = $region9
    $region8: #{transformer_forward.1} parent=1 // pred_region
      %s14 = ssub.s32 16768, 16768
      %15 = vsyncadd [#allocation3], %s14
      %s16 = sshll.u32 [#allocation2], 4
      %s17 = int_to_ptr.vmem [resolvable:$true] %s16
      %22 = dma.hbm_to_vmem [thread:$0]  %s1, 16768, %s17, [#allocation3], 128, 128, 8
    $region9: #{transformer_forward.1} parent=1 // pred_fallthru
      _
    // Predicated region
    $region10: #{transformer_forward.1} parent=1 // pred_check
      _
    $region11: #{transformer_forward.1} parent=1 // pred_check_branch
      %24 = sbr.rel (0) target = $region13
    $region12: #{transformer_forward.1} parent=1 // pred_region
      %25 = dma.done [#allocation3], 16768
    $region13: #{transformer_forward.1} parent=1 // pred_fallthru
      _
    %v26 = vld [vmem:[%s0] sm:$0xff]
    %v27 = vld [vmem:[%s0 + $0x8] sm:$0xff]
    %v28 = vld [vmem:[%s0 + $0x10] sm:$0xff]
    %v29 = vld [vmem:[%s0 + $0x18] sm:$0xff]
    %v30 = vld [vmem:[#allocation2] sm:$0xff]
    %v31 = vld [vmem:[#allocation2 + $0x8] sm:$0xff]
    %v32 = vld [vmem:[#allocation2 + $0x10] sm:$0xff]
    %v33 = vld [vmem:[#allocation2 + $0x18] sm:$0xff]
    %v34 = vld [vmem:[#allocation2 + $0x20] sm:$0xff]
    %v35 = vld [vmem:[#allocation2 + $0x28] sm:$0xff]
    %v36 = vld [vmem:[#allocation2 + $0x30] sm:$0xff]
    %v37 = vld [vmem:[#allocation2 + $0x38] sm:$0xff]
    %v38 = vld [vmem:[#allocation2 + $0x40] sm:$0xff]
    %v39 = vld [vmem:[#allocation2 + $0x48] sm:$0xff]
    %v40 = vld [vmem:[#allocation2 + $0x50] sm:$0xff]
    %v41 = vld [vmem:[#allocation2 + $0x58] sm:$0xff]
    %v42 = vld [vmem:[#allocation2 + $0x60] sm:$0xff]
    %v43 = vld [vmem:[#allocation2 + $0x68] sm:$0xff]
    %v44 = vld [vmem:[#allocation2 + $0x70] sm:$0xff]
    %v45 = vld [vmem:[#allocation2 + $0x78] sm:$0xff]
    %v46 = vld [vmem:[#allocation2 + $0x80] sm:$0xff]
    %v47 = vld [vmem:[#allocation2 + $0x88] sm:$0xff]
    %vm48 = vcmask 130048
    %v50 = vsel %vm48, %v27, 0
    %v53 = vsel %vm48, %v29, 0
    %55 = vmatprep.subr.mxu0 0.0
    %56 = vmatpush1.msra.mxu0 %v45
    %57 = vmatprep.subr.mxu0 0.0
    %58 = vmatpush1.msra.mxu0 %v44
    %59 = vmatprep.subr.mxu0 0.0
    %60 = vmatpush1.msra.mxu0 %v43
    %61 = vmatprep.subr.mxu0 0.0
    %62 = vmatpush1.msra.mxu0 %v42
    %63 = vmatprep.subr.mxu0 0.0
    %64 = vmatpush1.msra.mxu0 %v41
    %65 = vmatprep.subr.mxu0 0.0
    %66 = vmatpush1.msra.mxu0 %v40
    %67 = vmatprep.subr.mxu0 0.0
    %68 = vmatpush1.msra.mxu0 %v39
    %69 = vmatprep.subr.mxu0 0.0
    %70 = vmatpush1.msra.mxu0 %v38
    %71 = vmatprep.subr.mxu0 0.0
    %72 = vmatpush1.msra.mxu0 %v37
    %73 = vmatprep.subr.mxu0 0.0
    %74 = vmatpush1.msra.mxu0 %v36
    %75 = vmatprep.subr.mxu0 0.0
    %76 = vmatpush1.msra.mxu0 %v35
    %77 = vmatprep.subr.mxu0 0.0
    %78 = vmatpush1.msra.mxu0 %v34
    %79 = vmatprep.subr.mxu0 0.0
    %80 = vmatpush1.msra.mxu0 %v33
    %81 = vmatprep.subr.mxu0 0.0
    %82 = vmatpush1.msra.mxu0 %v32
    %83 = vmatprep.subr.mxu0 0.0
    %84 = vmatpush1.msra.mxu0 %v31
    %85 = vmatprep.subr.mxu0 0.0
    %86 = vmatpush1.msra.mxu0 %v30
    %87 = vmatprep.subr.mxu0 0.0
    %88 = vmatpush2.msra.mxu0 0.0
    %89 = vmatprep.subr.mxu0 0.0
    %90 = vmatpush2.msra.mxu0 0.0
    %91 = vmatprep.subr.mxu0 0.0
    %92 = vmatpush2.msra.mxu0 0.0
    %93 = vmatprep.subr.mxu0 0.0
    %94 = vmatpush2.msra.mxu0 0.0
    %95 = vmatprep.subr.mxu0 0.0
    %96 = vmatpush2.msra.mxu0 0.0
    %97 = vmatprep.subr.mxu0 0.0
    %98 = vmatpush2.msra.mxu0 0.0
    %99 = vmatprep.subr.mxu0 0.0
    %100 = vmatpush2.msra.mxu0 0.0
    %101 = vmatprep.subr.mxu0 0.0
    %102 = vmatpush2.msra.mxu0 0.0
    %103 = vmatprep.subr.mxu0 0.0
    %104 = vmatpush2.msra.mxu0 0.0
    %105 = vmatprep.subr.mxu0 0.0
    %106 = vmatpush2.msra.mxu0 0.0
    %107 = vmatprep.subr.mxu0 0.0
    %108 = vmatpush2.msra.mxu0 0.0
    %109 = vmatprep.subr.mxu0 0.0
    %110 = vmatpush2.msra.mxu0 0.0
    %111 = vmatprep.subr.mxu0 0.0
    %112 = vmatpush2.msra.mxu0 0.0
    %113 = vmatprep.subr.mxu0 0.0
    %114 = vmatpush2.msra.mxu0 0.0
    %115 = vmatprep.subr.mxu0 0.0
    %116 = vmatpush2.msra.mxu0 %v47
    %117 = vmatprep.subr.mxu0 0.0
    %118 = vmatpush2.msra.mxu0 %v46
    %119 = vmatprep.mubr.f32.mxu0 %v50
    %120 = vmatmul.mubr.f32.gmra.mxu0 %v26
    %v121 = vpop.f32.mrf.mxu0
    %v122 = vadd.f32 0.0, %v121
    %v123 = vpop.f32.mrf.mxu0
    %124 = vmatprep.mubr.f32.mxu0 %v53
    %125 = vmatmul.mubr.f32.gmra.mxu0 %v28
    %v126 = vpop.f32.mrf.mxu0
    %v127 = vadd.f32 0.0, %v126
    %v128 = vpop.f32.mrf.mxu0
    %129 = vdwg.mxu0
    %v130 = vld [vmem:[#allocation2 + $0x90] sm:$0xff]
    %v131 = vld [vmem:[#allocation2 + $0x98] sm:$0xff]
    %v132 = vld [vmem:[#allocation2 + $0xc8] sm:$0xff]
    %v133 = vld [vmem:[#allocation2 + $0xd0] sm:$0xff]
    %v134 = vld [vmem:[#allocation2 + $0xd8] sm:$0xff]
    %v135 = vld [vmem:[#allocation2 + $0xe0] sm:$0xff]
    %v136 = vld [vmem:[#allocation2 + $0x138] sm:$0x1]
    %v137 = vlaneseq
    %v138 = vshrl.u32 %v137, 7
    %v139 = vsub.s32 0, %v138
    %v140 = vrot.slane %v136, %v139
    %vm141 = vcmask 261120
    %v143 = vsel %vm141, %v122, 0
    %v146 = vsel %vm141, %v127, 0
    %148 = vmatprep.subr.mxu0 0.0
    %149 = vmatpush1.msra.mxu0 0.0
    %150 = vmatprep.subr.mxu0 0.0
    %151 = vmatpush1.msra.mxu0 0.0
    %152 = vmatprep.subr.mxu0 0.0
    %153 = vmatpush1.msra.mxu0 0.0
    %154 = vmatprep.subr.mxu0 0.0
    %155 = vmatpush1.msra.mxu0 0.0
    %156 = vmatprep.subr.mxu0 0.0
    %157 = vmatpush1.msra.mxu0 0.0
    %158 = vmatprep.subr.mxu0 0.0
    %159 = vmatpush1.msra.mxu0 0.0
    %160 = vmatprep.subr.mxu0 0.0
    %161 = vmatpush1.msra.mxu0 0.0
    %162 = vmatprep.subr.mxu0 0.0
    %163 = vmatpush1.msra.mxu0 0.0
    %164 = vmatprep.subr.mxu0 0.0
    %165 = vmatpush1.msra.mxu0 0.0
    %166 = vmatprep.subr.mxu0 0.0
    %167 = vmatpush1.msra.mxu0 0.0
    %168 = vmatprep.subr.mxu0 0.0
    %169 = vmatpush1.msra.mxu0 0.0
    %170 = vmatprep.subr.mxu0 0.0
    %171 = vmatpush1.msra.mxu0 0.0
    %172 = vmatprep.subr.mxu0 0.0
    %173 = vmatpush1.msra.mxu0 %v135
    %174 = vmatprep.subr.mxu0 0.0
    %175 = vmatpush1.msra.mxu0 %v134
    %176 = vmatprep.subr.mxu0 0.0
    %177 = vmatpush1.msra.mxu0 %v133
    %178 = vmatprep.subr.mxu0 0.0
    %179 = vmatpush1.msra.mxu0 %v132
    %180 = vmatprep.subr.mxu0 0.0
    %181 = vmatpush2.msra.mxu0 0.0
    %182 = vmatprep.subr.mxu0 0.0
    %183 = vmatpush2.msra.mxu0 0.0
    %184 = vmatprep.subr.mxu0 0.0
    %185 = vmatpush2.msra.mxu0 0.0
    %186 = vmatprep.subr.mxu0 0.0
    %187 = vmatpush2.msra.mxu0 0.0
    %188 = vmatprep.subr.mxu0 0.0
    %189 = vmatpush2.msra.mxu0 0.0
    %190 = vmatprep.subr.mxu0 0.0
    %191 = vmatpush2.msra.mxu0 0.0
    %192 = vmatprep.subr.mxu0 0.0
    %193 = vmatpush2.msra.mxu0 0.0
    %194 = vmatprep.subr.mxu0 0.0
    %195 = vmatpush2.msra.mxu0 0.0
    %196 = vmatprep.subr.mxu0 0.0
    %197 = vmatpush2.msra.mxu0 0.0
    %198 = vmatprep.subr.mxu0 0.0
    %199 = vmatpush2.msra.mxu0 0.0
    %200 = vmatprep.subr.mxu0 0.0
    %201 = vmatpush2.msra.mxu0 0.0
    %202 = vmatprep.subr.mxu0 0.0
    %203 = vmatpush2.msra.mxu0 0.0
    %204 = vmatprep.subr.mxu0 0.0
    %205 = vmatpush2.msra.mxu0 0.0
    %206 = vmatprep.subr.mxu0 0.0
    %207 = vmatpush2.msra.mxu0 0.0
    %208 = vmatprep.subr.mxu0 0.0
    %209 = vmatpush2.msra.mxu0 0.0
    %210 = vmatprep.subr.mxu0 0.0
    %211 = vmatpush2.msra.mxu0 0.0
    %212 = vmatprep.mubr.f32.mxu0 0.0
    %213 = vmatmul.mubr.f32.gmra.mxu0 %v143
    %v214 = vpop.f32.mrf.mxu0
    %v215 = vadd.f32 %v140, %v214
    %v216 = vpop.f32.mrf.mxu0
    %217 = vmatprep.mubr.f32.mxu0 0.0
    %218 = vmatmul.mubr.f32.gmra.mxu0 %v146
    %v219 = vpop.f32.mrf.mxu0
    %v220 = vadd.f32 %v140, %v219
    %v221 = vpop.f32.mrf.mxu0
    %222 = vdwg.mxu0
    %v223 = vld [vmem:[#allocation2 + $0xe8] sm:$0xff]
    %v224 = vld [vmem:[#allocation2 + $0xf0] sm:$0xff]
    %v225 = vld [vmem:[#allocation2 + $0xf8] sm:$0xff]
    %v226 = vld [vmem:[#allocation2 + $0x100] sm:$0xff]
    %v227 = vld [vmem:[#allocation2 + $0x140] sm:$0x1]
    %v228 = vlaneseq
    %v229 = vshrl.u32 %v228, 7
    %v230 = vsub.s32 0, %v229
    %v231 = vrot.slane %v227, %v230
    %232 = vmatprep.subr.mxu0 0.0
    %233 = vmatpush1.msra.mxu0 0.0
    %234 = vmatprep.subr.mxu0 0.0
    %235 = vmatpush1.msra.mxu0 0.0
    %236 = vmatprep.subr.mxu0 0.0
    %237 = vmatpush1.msra.mxu0 0.0
    %238 = vmatprep.subr.mxu0 0.0
    %239 = vmatpush1.msra.mxu0 0.0
    %240 = vmatprep.subr.mxu0 0.0
    %241 = vmatpush1.msra.mxu0 0.0
    %242 = vmatprep.subr.mxu0 0.0
    %243 = vmatpush1.msra.mxu0 0.0
    %244 = vmatprep.subr.mxu0 0.0
    %245 = vmatpush1.msra.mxu0 0.0
    %246 = vmatprep.subr.mxu0 0.0
    %247 = vmatpush1.msra.mxu0 0.0
    %248 = vmatprep.subr.mxu0 0.0
    %249 = vmatpush1.msra.mxu0 0.0
    %250 = vmatprep.subr.mxu0 0.0
    %251 = vmatpush1.msra.mxu0 0.0
    %252 = vmatprep.subr.mxu0 0.0
    %253 = vmatpush1.msra.mxu0 0.0
    %254 = vmatprep.subr.mxu0 0.0
    %255 = vmatpush1.msra.mxu0 0.0
    %256 = vmatprep.subr.mxu0 0.0
    %257 = vmatpush1.msra.mxu0 %v226
    %258 = vmatprep.subr.mxu0 0.0
    %259 = vmatpush1.msra.mxu0 %v225
    %260 = vmatprep.subr.mxu0 0.0
    %261 = vmatpush1.msra.mxu0 %v224
    %262 = vmatprep.subr.mxu0 0.0
    %263 = vmatpush1.msra.mxu0 %v223
    %264 = vmatprep.subr.mxu0 0.0
    %265 = vmatpush2.msra.mxu0 0.0
    %266 = vmatprep.subr.mxu0 0.0
    %267 = vmatpush2.msra.mxu0 0.0
    %268 = vmatprep.subr.mxu0 0.0
    %269 = vmatpush2.msra.mxu0 0.0
    %270 = vmatprep.subr.mxu0 0.0
    %271 = vmatpush2.msra.mxu0 0.0
    %272 = vmatprep.subr.mxu0 0.0
    %273 = vmatpush2.msra.mxu0 0.0
    %274 = vmatprep.subr.mxu0 0.0
    %275 = vmatpush2.msra.mxu0 0.0
    %276 = vmatprep.subr.mxu0 0.0
    %277 = vmatpush2.msra.mxu0 0.0
    %278 = vmatprep.subr.mxu0 0.0
    %279 = vmatpush2.msra.mxu0 0.0
    %280 = vmatprep.subr.mxu0 0.0
    %281 = vmatpush2.msra.mxu0 0.0
    %282 = vmatprep.subr.mxu0 0.0
    %283 = vmatpush2.msra.mxu0 0.0
    %284 = vmatprep.subr.mxu0 0.0
    %285 = vmatpush2.msra.mxu0 0.0
    %286 = vmatprep.subr.mxu0 0.0
    %287 = vmatpush2.msra.mxu0 0.0
    %288 = vmatprep.subr.mxu0 0.0
    %289 = vmatpush2.msra.mxu0 0.0
    %290 = vmatprep.subr.mxu0 0.0
    %291 = vmatpush2.msra.mxu0 0.0
    %292 = vmatprep.subr.mxu0 0.0
    %293 = vmatpush2.msra.mxu0 0.0
    %294 = vmatprep.subr.mxu0 0.0
    %295 = vmatpush2.msra.mxu0 0.0
    %296 = vmatprep.mubr.f32.mxu0 0.0
    %297 = vmatmul.mubr.f32.gmra.mxu0 %v143
    %v298 = vpop.f32.mrf.mxu0
    %v299 = vadd.f32 %v231, %v298
    %v300 = vpop.f32.mrf.mxu0
    %301 = vmatprep.mubr.f32.mxu0 0.0
    %302 = vmatmul.mubr.f32.gmra.mxu0 %v146
    %v303 = vpop.f32.mrf.mxu0
    %v304 = vadd.f32 %v231, %v303
    %v305 = vpop.f32.mrf.mxu0
    %306 = vdwg.mxu0
    %v307 = vld [vmem:[#allocation2 + $0x108] sm:$0xff]
    %v308 = vld [vmem:[#allocation2 + $0x110] sm:$0xff]
    %v309 = vld [vmem:[#allocation2 + $0x118] sm:$0xff]
    %v310 = vld [vmem:[#allocation2 + $0x120] sm:$0xff]
    %v311 = vld [vmem:[#allocation2 + $0x148] sm:$0x1]
    %v312 = vlaneseq
    %v313 = vshrl.u32 %v312, 7
    %v314 = vsub.s32 0, %v313
    %v315 = vrot.slane %v311, %v314
    %316 = vmatprep.subr.mxu0 0.0
    %317 = vmatpush1.msra.mxu0 0.0
    %318 = vmatprep.subr.mxu0 0.0
    %319 = vmatpush1.msra.mxu0 0.0
    %320 = vmatprep.subr.mxu0 0.0
    %321 = vmatpush1.msra.mxu0 0.0
    %322 = vmatprep.subr.mxu0 0.0
    %323 = vmatpush1.msra.mxu0 0.0
    %324 = vmatprep.subr.mxu0 0.0
    %325 = vmatpush1.msra.mxu0 0.0
    %326 = vmatprep.subr.mxu0 0.0
    %327 = vmatpush1.msra.mxu0 0.0
    %328 = vmatprep.subr.mxu0 0.0
    %329 = vmatpush1.msra.mxu0 0.0
    %330 = vmatprep.subr.mxu0 0.0
    %331 = vmatpush1.msra.mxu0 0.0
    %332 = vmatprep.subr.mxu0 0.0
    %333 = vmatpush1.msra.mxu0 0.0
    %334 = vmatprep.subr.mxu0 0.0
    %335 = vmatpush1.msra.mxu0 0.0
    %336 = vmatprep.subr.mxu0 0.0
    %337 = vmatpush1.msra.mxu0 0.0
    %338 = vmatprep.subr.mxu0 0.0
    %339 = vmatpush1.msra.mxu0 0.0
    %340 = vmatprep.subr.mxu0 0.0
    %341 = vmatpush1.msra.mxu0 %v310
    %342 = vmatprep.subr.mxu0 0.0
    %343 = vmatpush1.msra.mxu0 %v309
    %344 = vmatprep.subr.mxu0 0.0
    %345 = vmatpush1.msra.mxu0 %v308
    %346 = vmatprep.subr.mxu0 0.0
    %347 = vmatpush1.msra.mxu0 %v307
    %348 = vmatprep.subr.mxu0 0.0
    %349 = vmatpush2.msra.mxu0 0.0
    %350 = vmatprep.subr.mxu0 0.0
    %351 = vmatpush2.msra.mxu0 0.0
    %352 = vmatprep.subr.mxu0 0.0
    %353 = vmatpush2.msra.mxu0 0.0
    %354 = vmatprep.subr.mxu0 0.0
    %355 = vmatpush2.msra.mxu0 0.0
    %356 = vmatprep.subr.mxu0 0.0
    %357 = vmatpush2.msra.mxu0 0.0
    %358 = vmatprep.subr.mxu0 0.0
    %359 = vmatpush2.msra.mxu0 0.0
    %360 = vmatprep.subr.mxu0 0.0
    %361 = vmatpush2.msra.mxu0 0.0
    %362 = vmatprep.subr.mxu0 0.0
    %363 = vmatpush2.msra.mxu0 0.0
    %364 = vmatprep.subr.mxu0 0.0
    %365 = vmatpush2.msra.mxu0 0.0
    %366 = vmatprep.subr.mxu0 0.0
    %367 = vmatpush2.msra.mxu0 0.0
    %368 = vmatprep.subr.mxu0 0.0
    %369 = vmatpush2.msra.mxu0 0.0
    %370 = vmatprep.subr.mxu0 0.0
    %371 = vmatpush2.msra.mxu0 0.0
    %372 = vmatprep.subr.mxu0 0.0
    %373 = vmatpush2.msra.mxu0 0.0
    %374 = vmatprep.subr.mxu0 0.0
    %375 = vmatpush2.msra.mxu0 0.0
    %376 = vmatprep.subr.mxu0 0.0
    %377 = vmatpush2.msra.mxu0 0.0
    %378 = vmatprep.subr.mxu0 0.0
    %379 = vmatpush2.msra.mxu0 0.0
    %380 = vmatprep.mubr.f32.mxu0 0.0
    %381 = vmatmul.mubr.f32.gmra.mxu0 %v143
    %v382 = vpop.f32.mrf.mxu0
    %v383 = vadd.f32 %v315, %v382
    %v384 = vpop.f32.mrf.mxu0
    %385 = vmatprep.mubr.f32.mxu0 0.0
    %386 = vmatmul.mubr.f32.gmra.mxu0 %v146
    %v387 = vpop.f32.mrf.mxu0
    %v388 = vadd.f32 %v315, %v387
    %v389 = vpop.f32.mrf.mxu0
    %390 = vdwg.mxu0
    %v392 = vsel %vm48, %v215, 0
    %v395 = vsel %vm48, %v220, 0
    %v398 = vsel %vm48, %v299, 0
    %v401 = vsel %vm48, %v304, 0
    %403 = vmatprep.subr.mxu0 0.0
    %404 = vmatpush1.xpose.msra.mxu0 0.0
    %405 = vmatprep.subr.mxu0 0.0
    %406 = vmatpush1.xpose.msra.mxu0 0.0
    %407 = vmatprep.subr.mxu0 0.0
    %408 = vmatpush1.xpose.msra.mxu0 0.0
    %409 = vmatprep.subr.mxu0 0.0
    %410 = vmatpush1.xpose.msra.mxu0 0.0
    %411 = vmatprep.subr.mxu0 0.0
    %412 = vmatpush1.xpose.msra.mxu0 0.0
    %413 = vmatprep.subr.mxu0 0.0
    %414 = vmatpush1.xpose.msra.mxu0 0.0
    %415 = vmatprep.subr.mxu0 0.0
    %416 = vmatpush1.xpose.msra.mxu0 0.0
    %417 = vmatprep.subr.mxu0 0.0
    %418 = vmatpush1.xpose.msra.mxu0 0.0
    %419 = vmatprep.subr.mxu0 0.0
    %420 = vmatpush1.xpose.msra.mxu0 0.0
    %421 = vmatprep.subr.mxu0 0.0
    %422 = vmatpush1.xpose.msra.mxu0 0.0
    %423 = vmatprep.subr.mxu0 0.0
    %424 = vmatpush1.xpose.msra.mxu0 0.0
    %425 = vmatprep.subr.mxu0 0.0
    %426 = vmatpush1.xpose.msra.mxu0 0.0
    %427 = vmatprep.subr.mxu0 0.0
    %428 = vmatpush1.xpose.msra.mxu0 0.0
    %429 = vmatprep.subr.mxu0 0.0
    %430 = vmatpush1.xpose.msra.mxu0 0.0
    %431 = vmatprep.subr.mxu0 0.0
    %432 = vmatpush1.xpose.msra.mxu0 %v401
    %433 = vmatprep.subr.mxu0 0.0
    %434 = vmatpush1.xpose.msra.mxu0 %v398
    %435 = vmatprep.subr.mxu0 0.0
    %436 = vmatpush2.xpose.msra.mxu0 0.0
    %437 = vmatprep.subr.mxu0 0.0
    %438 = vmatpush2.xpose.msra.mxu0 0.0
    %439 = vmatprep.subr.mxu0 0.0
    %440 = vmatpush2.xpose.msra.mxu0 0.0
    %441 = vmatprep.subr.mxu0 0.0
    %442 = vmatpush2.xpose.msra.mxu0 0.0
    %443 = vmatprep.subr.mxu0 0.0
    %444 = vmatpush2.xpose.msra.mxu0 0.0
    %445 = vmatprep.subr.mxu0 0.0
    %446 = vmatpush2.xpose.msra.mxu0 0.0
    %447 = vmatprep.subr.mxu0 0.0
    %448 = vmatpush2.xpose.msra.mxu0 0.0
    %449 = vmatprep.subr.mxu0 0.0
    %450 = vmatpush2.xpose.msra.mxu0 0.0
    %451 = vmatprep.subr.mxu0 0.0
    %452 = vmatpush2.xpose.msra.mxu0 0.0
    %453 = vmatprep.subr.mxu0 0.0
    %454 = vmatpush2.xpose.msra.mxu0 0.0
    %455 = vmatprep.subr.mxu0 0.0
    %456 = vmatpush2.xpose.msra.mxu0 0.0
    %457 = vmatprep.subr.mxu0 0.0
    %458 = vmatpush2.xpose.msra.mxu0 0.0
    %459 = vmatprep.subr.mxu0 0.0
    %460 = vmatpush2.xpose.msra.mxu0 0.0
    %461 = vmatprep.subr.mxu0 0.0
    %462 = vmatpush2.xpose.msra.mxu0 0.0
    %463 = vmatprep.subr.mxu0 0.0
    %464 = vmatpush2.xpose.msra.mxu0 0.0
    %465 = vmatprep.subr.mxu0 0.0
    %466 = vmatpush2.xpose.msra.mxu0 0.0
    %467 = vmatprep.mubr.f32.mxu0 0.0
    %468 = vmatmul.mubr.f32.gmra.mxu0 %v392
    %v469 = vpop.f32.mrf.mxu0
    %v470 = vadd.f32 %v130, %v469
    %v471 = vpop.f32.mrf.mxu0
    %472 = vmatprep.mubr.f32.mxu0 0.0
    %473 = vmatmul.mubr.f32.gmra.mxu0 %v395
    %v474 = vpop.f32.mrf.mxu0
    %v475 = vadd.f32 %v131, %v474
    %v476 = vpop.f32.mrf.mxu0
    %477 = vdwg.mxu0
    %v478 = vmul.f32 %v470, 1.442695
    %v479 = vpow.pop %v478
    %v480 = vmul.f32 %v475, 1.442695
    %v481 = vpow.pop %v480
    %v482 = vsel %vm48, %v479, 0.0
    %483 = vadd.xlane.f32.xlu0 %v482
    %v484 = vpop.xlane.xlu0 %483
    %v485 = vsel %vm48, %v481, 0.0
    %486 = vadd.xlane.f32.xlu0 %v485
    %v487 = vpop.xlane.xlu0 %486
    %v488 = vrcp.pop %v484
    %v489 = vrcp.pop %v487
    %v490 = vmul.f32 %v479, %v488
    %v491 = vmul.f32 %v481, %v489
    %v493 = vsel %vm48, %v490, 0
    %v496 = vsel %vm48, %v491, 0
    %498 = vmatprep.subr.mxu0 0.0
    %499 = vmatpush1.msra.mxu0 0.0
    %500 = vmatprep.subr.mxu0 0.0
    %501 = vmatpush1.msra.mxu0 0.0
    %502 = vmatprep.subr.mxu0 0.0
    %503 = vmatpush1.msra.mxu0 0.0
    %504 = vmatprep.subr.mxu0 0.0
    %505 = vmatpush1.msra.mxu0 0.0
    %506 = vmatprep.subr.mxu0 0.0
    %507 = vmatpush1.msra.mxu0 0.0
    %508 = vmatprep.subr.mxu0 0.0
    %509 = vmatpush1.msra.mxu0 0.0
    %510 = vmatprep.subr.mxu0 0.0
    %511 = vmatpush1.msra.mxu0 0.0
    %512 = vmatprep.subr.mxu0 0.0
    %513 = vmatpush1.msra.mxu0 0.0
    %514 = vmatprep.subr.mxu0 0.0
    %515 = vmatpush1.msra.mxu0 0.0
    %516 = vmatprep.subr.mxu0 0.0
    %517 = vmatpush1.msra.mxu0 0.0
    %518 = vmatprep.subr.mxu0 0.0
    %519 = vmatpush1.msra.mxu0 0.0
    %520 = vmatprep.subr.mxu0 0.0
    %521 = vmatpush1.msra.mxu0 0.0
    %522 = vmatprep.subr.mxu0 0.0
    %523 = vmatpush1.msra.mxu0 0.0
    %524 = vmatprep.subr.mxu0 0.0
    %525 = vmatpush1.msra.mxu0 0.0
    %526 = vmatprep.subr.mxu0 0.0
    %527 = vmatpush1.msra.mxu0 %v388
    %528 = vmatprep.subr.mxu0 0.0
    %529 = vmatpush1.msra.mxu0 %v383
    %530 = vmatprep.subr.mxu0 0.0
    %531 = vmatpush2.msra.mxu0 0.0
    %532 = vmatprep.subr.mxu0 0.0
    %533 = vmatpush2.msra.mxu0 0.0
    %534 = vmatprep.subr.mxu0 0.0
    %535 = vmatpush2.msra.mxu0 0.0
    %536 = vmatprep.subr.mxu0 0.0
    %537 = vmatpush2.msra.mxu0 0.0
    %538 = vmatprep.subr.mxu0 0.0
    %539 = vmatpush2.msra.mxu0 0.0
    %540 = vmatprep.subr.mxu0 0.0
    %541 = vmatpush2.msra.mxu0 0.0
    %542 = vmatprep.subr.mxu0 0.0
    %543 = vmatpush2.msra.mxu0 0.0
    %544 = vmatprep.subr.mxu0 0.0
    %545 = vmatpush2.msra.mxu0 0.0
    %546 = vmatprep.subr.mxu0 0.0
    %547 = vmatpush2.msra.mxu0 0.0
    %548 = vmatprep.subr.mxu0 0.0
    %549 = vmatpush2.msra.mxu0 0.0
    %550 = vmatprep.subr.mxu0 0.0
    %551 = vmatpush2.msra.mxu0 0.0
    %552 = vmatprep.subr.mxu0 0.0
    %553 = vmatpush2.msra.mxu0 0.0
    %554 = vmatprep.subr.mxu0 0.0
    %555 = vmatpush2.msra.mxu0 0.0
    %556 = vmatprep.subr.mxu0 0.0
    %557 = vmatpush2.msra.mxu0 0.0
    %558 = vmatprep.subr.mxu0 0.0
    %559 = vmatpush2.msra.mxu0 0.0
    %560 = vmatprep.subr.mxu0 0.0
    %561 = vmatpush2.msra.mxu0 0.0
    %562 = vmatprep.mubr.f32.mxu0 0.0
    %563 = vmatmul.mubr.f32.gmra.mxu0 %v493
    %v564 = vpop.f32.mrf.mxu0
    %v565 = vadd.f32 0.0, %v564
    %v566 = vpop.f32.mrf.mxu0
    %567 = vmatprep.mubr.f32.mxu0 0.0
    %568 = vmatmul.mubr.f32.gmra.mxu0 %v496
    %v569 = vpop.f32.mrf.mxu0
    %v570 = vadd.f32 0.0, %v569
    %v571 = vpop.f32.mrf.mxu0
    %572 = vdwg.mxu0
    %v573 = vld [vmem:[#allocation2 + $0x128] sm:$0xff]
    %v574 = vld [vmem:[#allocation2 + $0x130] sm:$0xff]
    %v575 = vld [vmem:[#allocation2 + $0x150] sm:$0xff]
    %v576 = vld [vmem:[#allocation2 + $0x158] sm:$0xff]
    %v577 = vld [vmem:[#allocation2 + $0x160] sm:$0xff]
    %v578 = vld [vmem:[#allocation2 + $0x168] sm:$0xff]
    %v579 = vld [vmem:[#allocation2 + $0x1c0] sm:$0x1]
    %v580 = vlaneseq
    %v581 = vshrl.u32 %v580, 7
    %v582 = vsub.s32 0, %v581
    %v583 = vrot.slane %v579, %v582
    %584 = vmatprep.subr.mxu0 0.0
    %585 = vmatpush1.msra.mxu0 0.0
    %586 = vmatprep.subr.mxu0 0.0
    %587 = vmatpush1.msra.mxu0 0.0
    %588 = vmatprep.subr.mxu0 0.0
    %589 = vmatpush1.msra.mxu0 0.0
    %590 = vmatprep.subr.mxu0 0.0
    %591 = vmatpush1.msra.mxu0 0.0
    %592 = vmatprep.subr.mxu0 0.0
    %593 = vmatpush1.msra.mxu0 0.0
    %594 = vmatprep.subr.mxu0 0.0
    %595 = vmatpush1.msra.mxu0 0.0
    %596 = vmatprep.subr.mxu0 0.0
    %597 = vmatpush1.msra.mxu0 0.0
    %598 = vmatprep.subr.mxu0 0.0
    %599 = vmatpush1.msra.mxu0 0.0
    %600 = vmatprep.subr.mxu0 0.0
    %601 = vmatpush1.msra.mxu0 0.0
    %602 = vmatprep.subr.mxu0 0.0
    %603 = vmatpush1.msra.mxu0 0.0
    %604 = vmatprep.subr.mxu0 0.0
    %605 = vmatpush1.msra.mxu0 0.0
    %606 = vmatprep.subr.mxu0 0.0
    %607 = vmatpush1.msra.mxu0 0.0
    %608 = vmatprep.subr.mxu0 0.0
    %609 = vmatpush1.msra.mxu0 %v578
    %610 = vmatprep.subr.mxu0 0.0
    %611 = vmatpush1.msra.mxu0 %v577
    %612 = vmatprep.subr.mxu0 0.0
    %613 = vmatpush1.msra.mxu0 %v576
    %614 = vmatprep.subr.mxu0 0.0
    %615 = vmatpush1.msra.mxu0 %v575
    %616 = vmatprep.subr.mxu0 0.0
    %617 = vmatpush2.msra.mxu0 0.0
    %618 = vmatprep.subr.mxu0 0.0
    %619 = vmatpush2.msra.mxu0 0.0
    %620 = vmatprep.subr.mxu0 0.0
    %621 = vmatpush2.msra.mxu0 0.0
    %622 = vmatprep.subr.mxu0 0.0
    %623 = vmatpush2.msra.mxu0 0.0
    %624 = vmatprep.subr.mxu0 0.0
    %625 = vmatpush2.msra.mxu0 0.0
    %626 = vmatprep.subr.mxu0 0.0
    %627 = vmatpush2.msra.mxu0 0.0
    %628 = vmatprep.subr.mxu0 0.0
    %629 = vmatpush2.msra.mxu0 0.0
    %630 = vmatprep.subr.mxu0 0.0
    %631 = vmatpush2.msra.mxu0 0.0
    %632 = vmatprep.subr.mxu0 0.0
    %633 = vmatpush2.msra.mxu0 0.0
    %634 = vmatprep.subr.mxu0 0.0
    %635 = vmatpush2.msra.mxu0 0.0
    %636 = vmatprep.subr.mxu0 0.0
    %637 = vmatpush2.msra.mxu0 0.0
    %638 = vmatprep.subr.mxu0 0.0
    %639 = vmatpush2.msra.mxu0 0.0
    %640 = vmatprep.subr.mxu0 0.0
    %641 = vmatpush2.msra.mxu0 0.0
    %642 = vmatprep.subr.mxu0 0.0
    %643 = vmatpush2.msra.mxu0 0.0
    %644 = vmatprep.subr.mxu0 0.0
    %645 = vmatpush2.msra.mxu0 0.0
    %646 = vmatprep.subr.mxu0 0.0
    %647 = vmatpush2.msra.mxu0 0.0
    %648 = vmatprep.mubr.f32.mxu0 0.0
    %649 = vmatmul.mubr.f32.gmra.mxu0 %v143
    %v650 = vpop.f32.mrf.mxu0
    %v651 = vadd.f32 %v583, %v650
    %v652 = vpop.f32.mrf.mxu0
    %653 = vmatprep.mubr.f32.mxu0 0.0
    %654 = vmatmul.mubr.f32.gmra.mxu0 %v146
    %v655 = vpop.f32.mrf.mxu0
    %v656 = vadd.f32 %v583, %v655
    %v657 = vpop.f32.mrf.mxu0
    %658 = vdwg.mxu0
    %v659 = vld [vmem:[#allocation2 + $0x170] sm:$0xff]
    %v660 = vld [vmem:[#allocation2 + $0x178] sm:$0xff]
    %v661 = vld [vmem:[#allocation2 + $0x180] sm:$0xff]
    %v662 = vld [vmem:[#allocation2 + $0x188] sm:$0xff]
    %v663 = vld [vmem:[#allocation2 + $0x1c8] sm:$0x1]
    %v664 = vlaneseq
    %v665 = vshrl.u32 %v664, 7
    %v666 = vsub.s32 0, %v665
    %v667 = vrot.slane %v663, %v666
    %668 = vmatprep.subr.mxu0 0.0
    %669 = vmatpush1.msra.mxu0 0.0
    %670 = vmatprep.subr.mxu0 0.0
    %671 = vmatpush1.msra.mxu0 0.0
    %672 = vmatprep.subr.mxu0 0.0
    %673 = vmatpush1.msra.mxu0 0.0
    %674 = vmatprep.subr.mxu0 0.0
    %675 = vmatpush1.msra.mxu0 0.0
    %676 = vmatprep.subr.mxu0 0.0
    %677 = vmatpush1.msra.mxu0 0.0
    %678 = vmatprep.subr.mxu0 0.0
    %679 = vmatpush1.msra.mxu0 0.0
    %680 = vmatprep.subr.mxu0 0.0
    %681 = vmatpush1.msra.mxu0 0.0
    %682 = vmatprep.subr.mxu0 0.0
    %683 = vmatpush1.msra.mxu0 0.0
    %684 = vmatprep.subr.mxu0 0.0
    %685 = vmatpush1.msra.mxu0 0.0
    %686 = vmatprep.subr.mxu0 0.0
    %687 = vmatpush1.msra.mxu0 0.0
    %688 = vmatprep.subr.mxu0 0.0
    %689 = vmatpush1.msra.mxu0 0.0
    %690 = vmatprep.subr.mxu0 0.0
    %691 = vmatpush1.msra.mxu0 0.0
    %692 = vmatprep.subr.mxu0 0.0
    %693 = vmatpush1.msra.mxu0 %v662
    %694 = vmatprep.subr.mxu0 0.0
    %695 = vmatpush1.msra.mxu0 %v661
    %696 = vmatprep.subr.mxu0 0.0
    %697 = vmatpush1.msra.mxu0 %v660
    %698 = vmatprep.subr.mxu0 0.0
    %699 = vmatpush1.msra.mxu0 %v659
    %700 = vmatprep.subr.mxu0 0.0
    %701 = vmatpush2.msra.mxu0 0.0
    %702 = vmatprep.subr.mxu0 0.0
    %703 = vmatpush2.msra.mxu0 0.0
    %704 = vmatprep.subr.mxu0 0.0
    %705 = vmatpush2.msra.mxu0 0.0
    %706 = vmatprep.subr.mxu0 0.0
    %707 = vmatpush2.msra.mxu0 0.0
    %708 = vmatprep.subr.mxu0 0.0
    %709 = vmatpush2.msra.mxu0 0.0
    %710 = vmatprep.subr.mxu0 0.0
    %711 = vmatpush2.msra.mxu0 0.0
    %712 = vmatprep.subr.mxu0 0.0
    %713 = vmatpush2.msra.mxu0 0.0
    %714 = vmatprep.subr.mxu0 0.0
    %715 = vmatpush2.msra.mxu0 0.0
    %716 = vmatprep.subr.mxu0 0.0
    %717 = vmatpush2.msra.mxu0 0.0
    %718 = vmatprep.subr.mxu0 0.0
    %719 = vmatpush2.msra.mxu0 0.0
    %720 = vmatprep.subr.mxu0 0.0
    %721 = vmatpush2.msra.mxu0 0.0
    %722 = vmatprep.subr.mxu0 0.0
    %723 = vmatpush2.msra.mxu0 0.0
    %724 = vmatprep.subr.mxu0 0.0
    %725 = vmatpush2.msra.mxu0 0.0
    %726 = vmatprep.subr.mxu0 0.0
    %727 = vmatpush2.msra.mxu0 0.0
    %728 = vmatprep.subr.mxu0 0.0
    %729 = vmatpush2.msra.mxu0 0.0
    %730 = vmatprep.subr.mxu0 0.0
    %731 = vmatpush2.msra.mxu0 0.0
    %732 = vmatprep.mubr.f32.mxu0 0.0
    %733 = vmatmul.mubr.f32.gmra.mxu0 %v143
    %v734 = vpop.f32.mrf.mxu0
    %v735 = vadd.f32 %v667, %v734
    %v736 = vpop.f32.mrf.mxu0
    %737 = vmatprep.mubr.f32.mxu0 0.0
    %738 = vmatmul.mubr.f32.gmra.mxu0 %v146
    %v739 = vpop.f32.mrf.mxu0
    %v740 = vadd.f32 %v667, %v739
    %v741 = vpop.f32.mrf.mxu0
    %742 = vdwg.mxu0
    %v743 = vld [vmem:[#allocation2 + $0x190] sm:$0xff]
    %v744 = vld [vmem:[#allocation2 + $0x198] sm:$0xff]
    %v745 = vld [vmem:[#allocation2 + $0x1a0] sm:$0xff]
    %v746 = vld [vmem:[#allocation2 + $0x1a8] sm:$0xff]
    %v747 = vld [vmem:[#allocation2 + $0x1d0] sm:$0x1]
    %v748 = vlaneseq
    %v749 = vshrl.u32 %v748, 7
    %v750 = vsub.s32 0, %v749
    %v751 = vrot.slane %v747, %v750
    %752 = vmatprep.subr.mxu0 0.0
    %753 = vmatpush1.msra.mxu0 0.0
    %754 = vmatprep.subr.mxu0 0.0
    %755 = vmatpush1.msra.mxu0 0.0
    %756 = vmatprep.subr.mxu0 0.0
    %757 = vmatpush1.msra.mxu0 0.0
    %758 = vmatprep.subr.mxu0 0.0
    %759 = vmatpush1.msra.mxu0 0.0
    %760 = vmatprep.subr.mxu0 0.0
    %761 = vmatpush1.msra.mxu0 0.0
    %762 = vmatprep.subr.mxu0 0.0
    %763 = vmatpush1.msra.mxu0 0.0
    %764 = vmatprep.subr.mxu0 0.0
    %765 = vmatpush1.msra.mxu0 0.0
    %766 = vmatprep.subr.mxu0 0.0
    %767 = vmatpush1.msra.mxu0 0.0
    %768 = vmatprep.subr.mxu0 0.0
    %769 = vmatpush1.msra.mxu0 0.0
    %770 = vmatprep.subr.mxu0 0.0
    %771 = vmatpush1.msra.mxu0 0.0
    %772 = vmatprep.subr.mxu0 0.0
    %773 = vmatpush1.msra.mxu0 0.0
    %774 = vmatprep.subr.mxu0 0.0
    %775 = vmatpush1.msra.mxu0 0.0
    %776 = vmatprep.subr.mxu0 0.0
    %777 = vmatpush1.msra.mxu0 %v746
    %778 = vmatprep.subr.mxu0 0.0
    %779 = vmatpush1.msra.mxu0 %v745
    %780 = vmatprep.subr.mxu0 0.0
    %781 = vmatpush1.msra.mxu0 %v744
    %782 = vmatprep.subr.mxu0 0.0
    %783 = vmatpush1.msra.mxu0 %v743
    %784 = vmatprep.subr.mxu0 0.0
    %785 = vmatpush2.msra.mxu0 0.0
    %786 = vmatprep.subr.mxu0 0.0
    %787 = vmatpush2.msra.mxu0 0.0
    %788 = vmatprep.subr.mxu0 0.0
    %789 = vmatpush2.msra.mxu0 0.0
    %790 = vmatprep.subr.mxu0 0.0
    %791 = vmatpush2.msra.mxu0 0.0
    %792 = vmatprep.subr.mxu0 0.0
    %793 = vmatpush2.msra.mxu0 0.0
    %794 = vmatprep.subr.mxu0 0.0
    %795 = vmatpush2.msra.mxu0 0.0
    %796 = vmatprep.subr.mxu0 0.0
    %797 = vmatpush2.msra.mxu0 0.0
    %798 = vmatprep.subr.mxu0 0.0
    %799 = vmatpush2.msra.mxu0 0.0
    %800 = vmatprep.subr.mxu0 0.0
    %801 = vmatpush2.msra.mxu0 0.0
    %802 = vmatprep.subr.mxu0 0.0
    %803 = vmatpush2.msra.mxu0 0.0
    %804 = vmatprep.subr.mxu0 0.0
    %805 = vmatpush2.msra.mxu0 0.0
    %806 = vmatprep.subr.mxu0 0.0
    %807 = vmatpush2.msra.mxu0 0.0
    %808 = vmatprep.subr.mxu0 0.0
    %809 = vmatpush2.msra.mxu0 0.0
    %810 = vmatprep.subr.mxu0 0.0
    %811 = vmatpush2.msra.mxu0 0.0
    %812 = vmatprep.subr.mxu0 0.0
    %813 = vmatpush2.msra.mxu0 0.0
    %814 = vmatprep.subr.mxu0 0.0
    %815 = vmatpush2.msra.mxu0 0.0
    %816 = vmatprep.mubr.f32.mxu0 0.0
    %817 = vmatmul.mubr.f32.gmra.mxu0 %v143
    %v818 = vpop.f32.mrf.mxu0
    %v819 = vadd.f32 %v751, %v818
    %v820 = vpop.f32.mrf.mxu0
    %821 = vmatprep.mubr.f32.mxu0 0.0
    %822 = vmatmul.mubr.f32.gmra.mxu0 %v146
    %v823 = vpop.f32.mrf.mxu0
    %v824 = vadd.f32 %v751, %v823
    %v825 = vpop.f32.mrf.mxu0
    %826 = vdwg.mxu0
    %v828 = vsel %vm48, %v651, 0
    %v831 = vsel %vm48, %v656, 0
    %v834 = vsel %vm48, %v735, 0
    %v837 = vsel %vm48, %v740, 0
    %839 = vmatprep.subr.mxu0 0.0
    %840 = vmatpush1.xpose.msra.mxu0 0.0
    %841 = vmatprep.subr.mxu0 0.0
    %842 = vmatpush1.xpose.msra.mxu0 0.0
    %843 = vmatprep.subr.mxu0 0.0
    %844 = vmatpush1.xpose.msra.mxu0 0.0
    %845 = vmatprep.subr.mxu0 0.0
    %846 = vmatpush1.xpose.msra.mxu0 0.0
    %847 = vmatprep.subr.mxu0 0.0
    %848 = vmatpush1.xpose.msra.mxu0 0.0
    %849 = vmatprep.subr.mxu0 0.0
    %850 = vmatpush1.xpose.msra.mxu0 0.0
    %851 = vmatprep.subr.mxu0 0.0
    %852 = vmatpush1.xpose.msra.mxu0 0.0
    %853 = vmatprep.subr.mxu0 0.0
    %854 = vmatpush1.xpose.msra.mxu0 0.0
    %855 = vmatprep.subr.mxu0 0.0
    %856 = vmatpush1.xpose.msra.mxu0 0.0
    %857 = vmatprep.subr.mxu0 0.0
    %858 = vmatpush1.xpose.msra.mxu0 0.0
    %859 = vmatprep.subr.mxu0 0.0
    %860 = vmatpush1.xpose.msra.mxu0 0.0
    %861 = vmatprep.subr.mxu0 0.0
    %862 = vmatpush1.xpose.msra.mxu0 0.0
    %863 = vmatprep.subr.mxu0 0.0
    %864 = vmatpush1.xpose.msra.mxu0 0.0
    %865 = vmatprep.subr.mxu0 0.0
    %866 = vmatpush1.xpose.msra.mxu0 0.0
    %867 = vmatprep.subr.mxu0 0.0
    %868 = vmatpush1.xpose.msra.mxu0 %v837
    %869 = vmatprep.subr.mxu0 0.0
    %870 = vmatpush1.xpose.msra.mxu0 %v834
    %871 = vmatprep.subr.mxu0 0.0
    %872 = vmatpush2.xpose.msra.mxu0 0.0
    %873 = vmatprep.subr.mxu0 0.0
    %874 = vmatpush2.xpose.msra.mxu0 0.0
    %875 = vmatprep.subr.mxu0 0.0
    %876 = vmatpush2.xpose.msra.mxu0 0.0
    %877 = vmatprep.subr.mxu0 0.0
    %878 = vmatpush2.xpose.msra.mxu0 0.0
    %879 = vmatprep.subr.mxu0 0.0
    %880 = vmatpush2.xpose.msra.mxu0 0.0
    %881 = vmatprep.subr.mxu0 0.0
    %882 = vmatpush2.xpose.msra.mxu0 0.0
    %883 = vmatprep.subr.mxu0 0.0
    %884 = vmatpush2.xpose.msra.mxu0 0.0
    %885 = vmatprep.subr.mxu0 0.0
    %886 = vmatpush2.xpose.msra.mxu0 0.0
    %887 = vmatprep.subr.mxu0 0.0
    %888 = vmatpush2.xpose.msra.mxu0 0.0
    %889 = vmatprep.subr.mxu0 0.0
    %890 = vmatpush2.xpose.msra.mxu0 0.0
    %891 = vmatprep.subr.mxu0 0.0
    %892 = vmatpush2.xpose.msra.mxu0 0.0
    %893 = vmatprep.subr.mxu0 0.0
    %894 = vmatpush2.xpose.msra.mxu0 0.0
    %895 = vmatprep.subr.mxu0 0.0
    %896 = vmatpush2.xpose.msra.mxu0 0.0
    %897 = vmatprep.subr.mxu0 0.0
    %898 = vmatpush2.xpose.msra.mxu0 0.0
    %899 = vmatprep.subr.mxu0 0.0
    %900 = vmatpush2.xpose.msra.mxu0 0.0
    %901 = vmatprep.subr.mxu0 0.0
    %902 = vmatpush2.xpose.msra.mxu0 0.0
    %903 = vmatprep.mubr.f32.mxu0 0.0
    %904 = vmatmul.mubr.f32.gmra.mxu0 %v828
    %v905 = vpop.f32.mrf.mxu0
    %v906 = vadd.f32 %v130, %v905
    %v907 = vpop.f32.mrf.mxu0
    %908 = vmatprep.mubr.f32.mxu0 0.0
    %909 = vmatmul.mubr.f32.gmra.mxu0 %v831
    %v910 = vpop.f32.mrf.mxu0
    %v911 = vadd.f32 %v131, %v910
    %v912 = vpop.f32.mrf.mxu0
    %913 = vdwg.mxu0
    %v914 = vmul.f32 %v906, 1.442695
    %v915 = vpow.pop %v914
    %v916 = vmul.f32 %v911, 1.442695
    %v917 = vpow.pop %v916
    %v918 = vsel %vm48, %v915, 0.0
    %919 = vadd.xlane.f32.xlu0 %v918
    %v920 = vpop.xlane.xlu0 %919
    %v921 = vsel %vm48, %v917, 0.0
    %922 = vadd.xlane.f32.xlu0 %v921
    %v923 = vpop.xlane.xlu0 %922
    %v924 = vrcp.pop %v920
    %v925 = vrcp.pop %v923
    %v926 = vmul.f32 %v915, %v924
    %v927 = vmul.f32 %v917, %v925
    %v929 = vsel %vm48, %v926, 0
    %v932 = vsel %vm48, %v927, 0
    %934 = vmatprep.subr.mxu0 0.0
    %935 = vmatpush1.msra.mxu0 0.0
    %936 = vmatprep.subr.mxu0 0.0
    %937 = vmatpush1.msra.mxu0 0.0
    %938 = vmatprep.subr.mxu0 0.0
    %939 = vmatpush1.msra.mxu0 0.0
    %940 = vmatprep.subr.mxu0 0.0
    %941 = vmatpush1.msra.mxu0 0.0
    %942 = vmatprep.subr.mxu0 0.0
    %943 = vmatpush1.msra.mxu0 0.0
    %944 = vmatprep.subr.mxu0 0.0
    %945 = vmatpush1.msra.mxu0 0.0
    %946 = vmatprep.subr.mxu0 0.0
    %947 = vmatpush1.msra.mxu0 0.0
    %948 = vmatprep.subr.mxu0 0.0
    %949 = vmatpush1.msra.mxu0 0.0
    %950 = vmatprep.subr.mxu0 0.0
    %951 = vmatpush1.msra.mxu0 0.0
    %952 = vmatprep.subr.mxu0 0.0
    %953 = vmatpush1.msra.mxu0 0.0
    %954 = vmatprep.subr.mxu0 0.0
    %955 = vmatpush1.msra.mxu0 0.0
    %956 = vmatprep.subr.mxu0 0.0
    %957 = vmatpush1.msra.mxu0 0.0
    %958 = vmatprep.subr.mxu0 0.0
    %959 = vmatpush1.msra.mxu0 0.0
    %960 = vmatprep.subr.mxu0 0.0
    %961 = vmatpush1.msra.mxu0 0.0
    %962 = vmatprep.subr.mxu0 0.0
    %963 = vmatpush1.msra.mxu0 %v824
    %964 = vmatprep.subr.mxu0 0.0
    %965 = vmatpush1.msra.mxu0 %v819
    %966 = vmatprep.subr.mxu0 0.0
    %967 = vmatpush2.msra.mxu0 0.0
    %968 = vmatprep.subr.mxu0 0.0
    %969 = vmatpush2.msra.mxu0 0.0
    %970 = vmatprep.subr.mxu0 0.0
    %971 = vmatpush2.msra.mxu0 0.0
    %972 = vmatprep.subr.mxu0 0.0
    %973 = vmatpush2.msra.mxu0 0.0
    %974 = vmatprep.subr.mxu0 0.0
    %975 = vmatpush2.msra.mxu0 0.0
    %976 = vmatprep.subr.mxu0 0.0
    %977 = vmatpush2.msra.mxu0 0.0
    %978 = vmatprep.subr.mxu0 0.0
    %979 = vmatpush2.msra.mxu0 0.0
    %980 = vmatprep.subr.mxu0 0.0
    %981 = vmatpush2.msra.mxu0 0.0
    %982 = vmatprep.subr.mxu0 0.0
    %983 = vmatpush2.msra.mxu0 0.0
    %984 = vmatprep.subr.mxu0 0.0
    %985 = vmatpush2.msra.mxu0 0.0
    %986 = vmatprep.subr.mxu0 0.0
    %987 = vmatpush2.msra.mxu0 0.0
    %988 = vmatprep.subr.mxu0 0.0
    %989 = vmatpush2.msra.mxu0 0.0
    %990 = vmatprep.subr.mxu0 0.0
    %991 = vmatpush2.msra.mxu0 0.0
    %992 = vmatprep.subr.mxu0 0.0
    %993 = vmatpush2.msra.mxu0 0.0
    %994 = vmatprep.subr.mxu0 0.0
    %995 = vmatpush2.msra.mxu0 0.0
    %996 = vmatprep.subr.mxu0 0.0
    %997 = vmatpush2.msra.mxu0 0.0
    %998 = vmatprep.mubr.f32.mxu0 0.0
    %999 = vmatmul.mubr.f32.gmra.mxu0 %v929
    %v1000 = vpop.f32.mrf.mxu0
    %v1001 = vadd.f32 0.0, %v1000
    %v1002 = vpop.f32.mrf.mxu0
    %1003 = vmatprep.mubr.f32.mxu0 0.0
    %1004 = vmatmul.mubr.f32.gmra.mxu0 %v932
    %v1005 = vpop.f32.mrf.mxu0
    %v1006 = vadd.f32 0.0, %v1005
    %v1007 = vpop.f32.mrf.mxu0
    %1008 = vdwg.mxu0
    %v1009 = vld [vmem:[#allocation2 + $0x1b0] sm:$0xff]
    %v1010 = vld [vmem:[#allocation2 + $0x1b8] sm:$0xff]
    %v1012 = vsel %vm48, %v1001, 0
    %v1015 = vsel %vm48, %v1006, 0
    %1017 = vmatprep.subr.mxu0 0.0
    %1018 = vmatpush1.msra.mxu0 0.0
    %1019 = vmatprep.subr.mxu0 0.0
    %1020 = vmatpush1.msra.mxu0 0.0
    %1021 = vmatprep.subr.mxu0 0.0
    %1022 = vmatpush1.msra.mxu0 0.0
    %1023 = vmatprep.subr.mxu0 0.0
    %1024 = vmatpush1.msra.mxu0 0.0
    %1025 = vmatprep.subr.mxu0 0.0
    %1026 = vmatpush1.msra.mxu0 0.0
    %1027 = vmatprep.subr.mxu0 0.0
    %1028 = vmatpush1.msra.mxu0 0.0
    %1029 = vmatprep.subr.mxu0 0.0
    %1030 = vmatpush1.msra.mxu0 0.0
    %1031 = vmatprep.subr.mxu0 0.0
    %1032 = vmatpush1.msra.mxu0 0.0
    %1033 = vmatprep.subr.mxu0 0.0
    %1034 = vmatpush1.msra.mxu0 0.0
    %1035 = vmatprep.subr.mxu0 0.0
    %1036 = vmatpush1.msra.mxu0 0.0
    %1037 = vmatprep.subr.mxu0 0.0
    %1038 = vmatpush1.msra.mxu0 0.0
    %1039 = vmatprep.subr.mxu0 0.0
    %1040 = vmatpush1.msra.mxu0 0.0
    %1041 = vmatprep.subr.mxu0 0.0
    %1042 = vmatpush1.msra.mxu0 0.0
    %1043 = vmatprep.subr.mxu0 0.0
    %1044 = vmatpush1.msra.mxu0 0.0
    %1045 = vmatprep.subr.mxu0 0.0
    %1046 = vmatpush1.msra.mxu0 %v1010
    %1047 = vmatprep.subr.mxu0 0.0
    %1048 = vmatpush1.msra.mxu0 %v1009
    %1049 = vmatprep.subr.mxu0 0.0
    %1050 = vmatpush2.msra.mxu0 0.0
    %1051 = vmatprep.subr.mxu0 0.0
    %1052 = vmatpush2.msra.mxu0 0.0
    %1053 = vmatprep.subr.mxu0 0.0
    %1054 = vmatpush2.msra.mxu0 0.0
    %1055 = vmatprep.subr.mxu0 0.0
    %1056 = vmatpush2.msra.mxu0 0.0
    %1057 = vmatprep.subr.mxu0 0.0
    %1058 = vmatpush2.msra.mxu0 0.0
    %1059 = vmatprep.subr.mxu0 0.0
    %1060 = vmatpush2.msra.mxu0 0.0
    %1061 = vmatprep.subr.mxu0 0.0
    %1062 = vmatpush2.msra.mxu0 0.0
    %1063 = vmatprep.subr.mxu0 0.0
    %1064 = vmatpush2.msra.mxu0 0.0
    %1065 = vmatprep.subr.mxu0 0.0
    %1066 = vmatpush2.msra.mxu0 0.0
    %1067 = vmatprep.subr.mxu0 0.0
    %1068 = vmatpush2.msra.mxu0 0.0
    %1069 = vmatprep.subr.mxu0 0.0
    %1070 = vmatpush2.msra.mxu0 0.0
    %1071 = vmatprep.subr.mxu0 0.0
    %1072 = vmatpush2.msra.mxu0 0.0
    %1073 = vmatprep.subr.mxu0 0.0
    %1074 = vmatpush2.msra.mxu0 0.0
    %1075 = vmatprep.subr.mxu0 0.0
    %1076 = vmatpush2.msra.mxu0 0.0
    %1077 = vmatprep.subr.mxu0 0.0
    %1078 = vmatpush2.msra.mxu0 0.0
    %1079 = vmatprep.subr.mxu0 0.0
    %1080 = vmatpush2.msra.mxu0 0.0
    %1081 = vmatprep.mubr.f32.mxu0 0.0
    %1082 = vmatmul.mubr.f32.gmra.mxu0 %v1012
    %v1083 = vpop.f32.mrf.mxu0
    %v1084 = vadd.f32 0.0, %v1083
    %v1085 = vpop.f32.mrf.mxu0
    %1086 = vmatprep.mubr.f32.mxu0 0.0
    %1087 = vmatmul.mubr.f32.gmra.mxu0 %v1015
    %v1088 = vpop.f32.mrf.mxu0
    %v1089 = vadd.f32 0.0, %v1088
    %v1090 = vpop.f32.mrf.mxu0
    %1091 = vdwg.mxu0
    %v1093 = vsel %vm48, %v565, 0
    %v1096 = vsel %vm48, %v570, 0
    %1098 = vmatprep.subr.mxu0 0.0
    %1099 = vmatpush1.msra.mxu0 0.0
    %1100 = vmatprep.subr.mxu0 0.0
    %1101 = vmatpush1.msra.mxu0 0.0
    %1102 = vmatprep.subr.mxu0 0.0
    %1103 = vmatpush1.msra.mxu0 0.0
    %1104 = vmatprep.subr.mxu0 0.0
    %1105 = vmatpush1.msra.mxu0 0.0
    %1106 = vmatprep.subr.mxu0 0.0
    %1107 = vmatpush1.msra.mxu0 0.0
    %1108 = vmatprep.subr.mxu0 0.0
    %1109 = vmatpush1.msra.mxu0 0.0
    %1110 = vmatprep.subr.mxu0 0.0
    %1111 = vmatpush1.msra.mxu0 0.0
    %1112 = vmatprep.subr.mxu0 0.0
    %1113 = vmatpush1.msra.mxu0 0.0
    %1114 = vmatprep.subr.mxu0 0.0
    %1115 = vmatpush1.msra.mxu0 0.0
    %1116 = vmatprep.subr.mxu0 0.0
    %1117 = vmatpush1.msra.mxu0 0.0
    %1118 = vmatprep.subr.mxu0 0.0
    %1119 = vmatpush1.msra.mxu0 0.0
    %1120 = vmatprep.subr.mxu0 0.0
    %1121 = vmatpush1.msra.mxu0 0.0
    %1122 = vmatprep.subr.mxu0 0.0
    %1123 = vmatpush1.msra.mxu0 0.0
    %1124 = vmatprep.subr.mxu0 0.0
    %1125 = vmatpush1.msra.mxu0 0.0
    %1126 = vmatprep.subr.mxu0 0.0
    %1127 = vmatpush1.msra.mxu0 %v574
    %1128 = vmatprep.subr.mxu0 0.0
    %1129 = vmatpush1.msra.mxu0 %v573
    %1130 = vmatprep.subr.mxu0 0.0
    %1131 = vmatpush2.msra.mxu0 0.0
    %1132 = vmatprep.subr.mxu0 0.0
    %1133 = vmatpush2.msra.mxu0 0.0
    %1134 = vmatprep.subr.mxu0 0.0
    %1135 = vmatpush2.msra.mxu0 0.0
    %1136 = vmatprep.subr.mxu0 0.0
    %1137 = vmatpush2.msra.mxu0 0.0
    %1138 = vmatprep.subr.mxu0 0.0
    %1139 = vmatpush2.msra.mxu0 0.0
    %1140 = vmatprep.subr.mxu0 0.0
    %1141 = vmatpush2.msra.mxu0 0.0
    %1142 = vmatprep.subr.mxu0 0.0
    %1143 = vmatpush2.msra.mxu0 0.0
    %1144 = vmatprep.subr.mxu0 0.0
    %1145 = vmatpush2.msra.mxu0 0.0
    %1146 = vmatprep.subr.mxu0 0.0
    %1147 = vmatpush2.msra.mxu0 0.0
    %1148 = vmatprep.subr.mxu0 0.0
    %1149 = vmatpush2.msra.mxu0 0.0
    %1150 = vmatprep.subr.mxu0 0.0
    %1151 = vmatpush2.msra.mxu0 0.0
    %1152 = vmatprep.subr.mxu0 0.0
    %1153 = vmatpush2.msra.mxu0 0.0
    %1154 = vmatprep.subr.mxu0 0.0
    %1155 = vmatpush2.msra.mxu0 0.0
    %1156 = vmatprep.subr.mxu0 0.0
    %1157 = vmatpush2.msra.mxu0 0.0
    %1158 = vmatprep.subr.mxu0 0.0
    %1159 = vmatpush2.msra.mxu0 0.0
    %1160 = vmatprep.subr.mxu0 0.0
    %1161 = vmatpush2.msra.mxu0 0.0
    %1162 = vmatprep.mubr.f32.mxu0 0.0
    %1163 = vmatmul.mubr.f32.gmra.mxu0 %v1093
    %v1164 = vpop.f32.mrf.mxu0
    %v1165 = vadd.f32 %v1084, %v1164
    %v1166 = vpop.f32.mrf.mxu0
    %1167 = vmatprep.mubr.f32.mxu0 0.0
    %1168 = vmatmul.mubr.f32.gmra.mxu0 %v1096
    %v1169 = vpop.f32.mrf.mxu0
    %v1170 = vadd.f32 %v1089, %v1169
    %v1171 = vpop.f32.mrf.mxu0
    %1172 = vdwg.mxu0
    %v1173 = vadd.f32 %v122, %v1165
    %v1174 = vadd.f32 %v127, %v1170
    %v1175 = vld [vmem:[#allocation2 + $0x1d8] sm:$0x1]
    %v1176 = vlaneseq
    %v1177 = vshrl.u32 %v1176, 7
    %v1178 = vsub.s32 0, %v1177
    %v1179 = vrot.slane %v1175, %v1178
    %v1180 = vadd.f32 %v1173, %v1179
    %v1181 = vadd.f32 %v1174, %v1179
    %v1182 = vld [vmem:[#allocation2 + $0x1e0] sm:$0x1]
    %v1183 = vld [vmem:[#allocation2 + $0x1e8] sm:$0x1]
    %v1184 = vsel %vm141, %v1180, 0.0
    %1185 = vadd.xlane.f32.xlu0 %v1184
    %v1186 = vpop.xlane.xlu0 %1185
    %v1187 = vsel %vm141, %v1181, 0.0
    %1188 = vadd.xlane.f32.xlu0 %v1187
    %v1189 = vpop.xlane.xlu0 %1188
    %v1190 = vrcp.pop 32.0
    %v1191 = vmul.f32 %v1186, %v1190
    %v1192 = vmul.f32 %v1189, %v1190
    %v1193 = vmul.f32 %v1180, %v1180
    %v1194 = vmul.f32 %v1181, %v1181
    %v1195 = vsel %vm141, %v1193, 0.0
    %1196 = vadd.xlane.f32.xlu0 %v1195
    %v1197 = vpop.xlane.xlu0 %1196
    %v1198 = vsel %vm141, %v1194, 0.0
    %1199 = vadd.xlane.f32.xlu0 %v1198
    %v1200 = vpop.xlane.xlu0 %1199
    %v1201 = vmul.f32 %v1197, %v1190
    %v1202 = vmul.f32 %v1200, %v1190
    %v1203 = vmul.f32 %v1191, %v1191
    %v1204 = vmul.f32 %v1192, %v1192
    %v1205 = vsub.f32 %v1201, %v1203
    %v1206 = vsub.f32 %v1202, %v1204
    %v1207 = vsub.f32 %v1180, %v1191
    %v1208 = vsub.f32 %v1181, %v1192
    %v1209 = vadd.f32 %v1205, 1e-05
    %v1210 = vadd.f32 %v1206, 1e-05
    %v1211 = vrsqrt.pop %v1209
    %v1212 = vrsqrt.pop %v1210
    %v1213 = vmul.f32 %v1207, %v1211
    %v1214 = vmul.f32 %v1208, %v1212
    %v1215 = vlaneseq
    %v1216 = vshrl.u32 %v1215, 7
    %v1217 = vsub.s32 0, %v1216
    %v1218 = vrot.slane %v1182, %v1217
    %v1219 = vmul.f32 %v1213, %v1218
    %v1220 = vmul.f32 %v1214, %v1218
    %v1221 = vlaneseq
    %v1222 = vshrl.u32 %v1221, 7
    %v1223 = vsub.s32 0, %v1222
    %v1224 = vrot.slane %v1183, %v1223
    %v1225 = vadd.f32 %v1219, %v1224
    %v1226 = vadd.f32 %v1220, %v1224
    %v1227 = vld [vmem:[#allocation2 + $0x200] sm:$0xff]
    %v1228 = vld [vmem:[#allocation2 + $0x208] sm:$0xff]
    %v1229 = vld [vmem:[#allocation2 + $0x210] sm:$0xff]
    %v1230 = vld [vmem:[#allocation2 + $0x218] sm:$0xff]
    %v1231 = vld [vmem:[#allocation2 + $0x220] sm:$0x1]
    %v1232 = vlaneseq
    %v1233 = vshrl.u32 %v1232, 7
    %v1234 = vsub.s32 0, %v1233
    %v1235 = vrot.slane %v1231, %v1234
    %v1237 = vsel %vm141, %v1225, 0
    %v1240 = vsel %vm141, %v1226, 0
    %1242 = vmatprep.subr.mxu0 0.0
    %1243 = vmatpush1.msra.mxu0 0.0
    %1244 = vmatprep.subr.mxu0 0.0
    %1245 = vmatpush1.msra.mxu0 0.0
    %1246 = vmatprep.subr.mxu0 0.0
    %1247 = vmatpush1.msra.mxu0 0.0
    %1248 = vmatprep.subr.mxu0 0.0
    %1249 = vmatpush1.msra.mxu0 0.0
    %1250 = vmatprep.subr.mxu0 0.0
    %1251 = vmatpush1.msra.mxu0 0.0
    %1252 = vmatprep.subr.mxu0 0.0
    %1253 = vmatpush1.msra.mxu0 0.0
    %1254 = vmatprep.subr.mxu0 0.0
    %1255 = vmatpush1.msra.mxu0 0.0
    %1256 = vmatprep.subr.mxu0 0.0
    %1257 = vmatpush1.msra.mxu0 0.0
    %1258 = vmatprep.subr.mxu0 0.0
    %1259 = vmatpush1.msra.mxu0 0.0
    %1260 = vmatprep.subr.mxu0 0.0
    %1261 = vmatpush1.msra.mxu0 0.0
    %1262 = vmatprep.subr.mxu0 0.0
    %1263 = vmatpush1.msra.mxu0 0.0
    %1264 = vmatprep.subr.mxu0 0.0
    %1265 = vmatpush1.msra.mxu0 0.0
    %1266 = vmatprep.subr.mxu0 0.0
    %1267 = vmatpush1.msra.mxu0 %v1230
    %1268 = vmatprep.subr.mxu0 0.0
    %1269 = vmatpush1.msra.mxu0 %v1229
    %1270 = vmatprep.subr.mxu0 0.0
    %1271 = vmatpush1.msra.mxu0 %v1228
    %1272 = vmatprep.subr.mxu0 0.0
    %1273 = vmatpush1.msra.mxu0 %v1227
    %1274 = vmatprep.subr.mxu0 0.0
    %1275 = vmatpush2.msra.mxu0 0.0
    %1276 = vmatprep.subr.mxu0 0.0
    %1277 = vmatpush2.msra.mxu0 0.0
    %1278 = vmatprep.subr.mxu0 0.0
    %1279 = vmatpush2.msra.mxu0 0.0
    %1280 = vmatprep.subr.mxu0 0.0
    %1281 = vmatpush2.msra.mxu0 0.0
    %1282 = vmatprep.subr.mxu0 0.0
    %1283 = vmatpush2.msra.mxu0 0.0
    %1284 = vmatprep.subr.mxu0 0.0
    %1285 = vmatpush2.msra.mxu0 0.0
    %1286 = vmatprep.subr.mxu0 0.0
    %1287 = vmatpush2.msra.mxu0 0.0
    %1288 = vmatprep.subr.mxu0 0.0
    %1289 = vmatpush2.msra.mxu0 0.0
    %1290 = vmatprep.subr.mxu0 0.0
    %1291 = vmatpush2.msra.mxu0 0.0
    %1292 = vmatprep.subr.mxu0 0.0
    %1293 = vmatpush2.msra.mxu0 0.0
    %1294 = vmatprep.subr.mxu0 0.0
    %1295 = vmatpush2.msra.mxu0 0.0
    %1296 = vmatprep.subr.mxu0 0.0
    %1297 = vmatpush2.msra.mxu0 0.0
    %1298 = vmatprep.subr.mxu0 0.0
    %1299 = vmatpush2.msra.mxu0 0.0
    %1300 = vmatprep.subr.mxu0 0.0
    %1301 = vmatpush2.msra.mxu0 0.0
    %1302 = vmatprep.subr.mxu0 0.0
    %1303 = vmatpush2.msra.mxu0 0.0
    %1304 = vmatprep.subr.mxu0 0.0
    %1305 = vmatpush2.msra.mxu0 0.0
    %1306 = vmatprep.mubr.f32.mxu0 0.0
    %1307 = vmatmul.mubr.f32.gmra.mxu0 %v1237
    %v1308 = vpop.f32.mrf.mxu0
    %v1309 = vadd.f32 %v1235, %v1308
    %v1310 = vpop.f32.mrf.mxu0
    %1311 = vmatprep.mubr.f32.mxu0 0.0
    %1312 = vmatmul.mubr.f32.gmra.mxu0 %v1240
    %v1313 = vpop.f32.mrf.mxu0
    %v1314 = vadd.f32 %v1235, %v1313
    %v1315 = vpop.f32.mrf.mxu0
    %1316 = vdwg.mxu0
    %v1317 = vmax.f32 %v1309, 0.0
    %v1318 = vmax.f32 %v1314, 0.0
    %v1319 = vld [vmem:[#allocation2 + $0x228] sm:$0xff]
    %v1320 = vld [vmem:[#allocation2 + $0x230] sm:$0xff]
    %v1321 = vld [vmem:[#allocation2 + $0x238] sm:$0xff]
    %v1322 = vld [vmem:[#allocation2 + $0x240] sm:$0xff]
    %v1323 = vld [vmem:[#allocation2 + $0x248] sm:$0xff]
    %v1324 = vld [vmem:[#allocation2 + $0x250] sm:$0xff]
    %v1325 = vld [vmem:[#allocation2 + $0x258] sm:$0xff]
    %v1326 = vld [vmem:[#allocation2 + $0x260] sm:$0xff]
    %v1327 = vld [vmem:[#allocation2 + $0x268] sm:$0x1]
    %v1328 = vlaneseq
    %v1329 = vshrl.u32 %v1328, 7
    %v1330 = vsub.s32 0, %v1329
    %v1331 = vrot.slane %v1327, %v1330
    %vm1332 = vcmask 523264
    %v1334 = vsel %vm1332, %v1317, 0
    %v1337 = vsel %vm1332, %v1318, 0
    %1339 = vmatprep.subr.mxu0 0.0
    %1340 = vmatpush1.msra.mxu0 0.0
    %1341 = vmatprep.subr.mxu0 0.0
    %1342 = vmatpush1.msra.mxu0 0.0
    %1343 = vmatprep.subr.mxu0 0.0
    %1344 = vmatpush1.msra.mxu0 0.0
    %1345 = vmatprep.subr.mxu0 0.0
    %1346 = vmatpush1.msra.mxu0 0.0
    %1347 = vmatprep.subr.mxu0 0.0
    %1348 = vmatpush1.msra.mxu0 0.0
    %1349 = vmatprep.subr.mxu0 0.0
    %1350 = vmatpush1.msra.mxu0 0.0
    %1351 = vmatprep.subr.mxu0 0.0
    %1352 = vmatpush1.msra.mxu0 0.0
    %1353 = vmatprep.subr.mxu0 0.0
    %1354 = vmatpush1.msra.mxu0 0.0
    %1355 = vmatprep.subr.mxu0 0.0
    %1356 = vmatpush1.msra.mxu0 %v1326
    %1357 = vmatprep.subr.mxu0 0.0
    %1358 = vmatpush1.msra.mxu0 %v1325
    %1359 = vmatprep.subr.mxu0 0.0
    %1360 = vmatpush1.msra.mxu0 %v1324
    %1361 = vmatprep.subr.mxu0 0.0
    %1362 = vmatpush1.msra.mxu0 %v1323
    %1363 = vmatprep.subr.mxu0 0.0
    %1364 = vmatpush1.msra.mxu0 %v1322
    %1365 = vmatprep.subr.mxu0 0.0
    %1366 = vmatpush1.msra.mxu0 %v1321
    %1367 = vmatprep.subr.mxu0 0.0
    %1368 = vmatpush1.msra.mxu0 %v1320
    %1369 = vmatprep.subr.mxu0 0.0
    %1370 = vmatpush1.msra.mxu0 %v1319
    %1371 = vmatprep.subr.mxu0 0.0
    %1372 = vmatpush2.msra.mxu0 0.0
    %1373 = vmatprep.subr.mxu0 0.0
    %1374 = vmatpush2.msra.mxu0 0.0
    %1375 = vmatprep.subr.mxu0 0.0
    %1376 = vmatpush2.msra.mxu0 0.0
    %1377 = vmatprep.subr.mxu0 0.0
    %1378 = vmatpush2.msra.mxu0 0.0
    %1379 = vmatprep.subr.mxu0 0.0
    %1380 = vmatpush2.msra.mxu0 0.0
    %1381 = vmatprep.subr.mxu0 0.0
    %1382 = vmatpush2.msra.mxu0 0.0
    %1383 = vmatprep.subr.mxu0 0.0
    %1384 = vmatpush2.msra.mxu0 0.0
    %1385 = vmatprep.subr.mxu0 0.0
    %1386 = vmatpush2.msra.mxu0 0.0
    %1387 = vmatprep.subr.mxu0 0.0
    %1388 = vmatpush2.msra.mxu0 0.0
    %1389 = vmatprep.subr.mxu0 0.0
    %1390 = vmatpush2.msra.mxu0 0.0
    %1391 = vmatprep.subr.mxu0 0.0
    %1392 = vmatpush2.msra.mxu0 0.0
    %1393 = vmatprep.subr.mxu0 0.0
    %1394 = vmatpush2.msra.mxu0 0.0
    %1395 = vmatprep.subr.mxu0 0.0
    %1396 = vmatpush2.msra.mxu0 0.0
    %1397 = vmatprep.subr.mxu0 0.0
    %1398 = vmatpush2.msra.mxu0 0.0
    %1399 = vmatprep.subr.mxu0 0.0
    %1400 = vmatpush2.msra.mxu0 0.0
    %1401 = vmatprep.subr.mxu0 0.0
    %1402 = vmatpush2.msra.mxu0 0.0
    %1403 = vmatprep.mubr.f32.mxu0 0.0
    %1404 = vmatmul.mubr.f32.gmra.mxu0 %v1334
    %v1405 = vpop.f32.mrf.mxu0
    %v1406 = vadd.f32 %v1331, %v1405
    %v1407 = vpop.f32.mrf.mxu0
    %1408 = vmatprep.mubr.f32.mxu0 0.0
    %1409 = vmatmul.mubr.f32.gmra.mxu0 %v1337
    %v1410 = vpop.f32.mrf.mxu0
    %v1411 = vadd.f32 %v1331, %v1410
    %v1412 = vpop.f32.mrf.mxu0
    %1413 = vdwg.mxu0
    %v1414 = vadd.f32 %v1225, %v1406
    %v1415 = vadd.f32 %v1226, %v1411
    %v1416 = vld [vmem:[#allocation2 + $0x1f0] sm:$0x1]
    %v1417 = vld [vmem:[#allocation2 + $0x1f8] sm:$0x1]
    %v1418 = vsel %vm141, %v1414, 0.0
    %1419 = vadd.xlane.f32.xlu0 %v1418
    %v1420 = vpop.xlane.xlu0 %1419
    %v1421 = vsel %vm141, %v1415, 0.0
    %1422 = vadd.xlane.f32.xlu0 %v1421
    %v1423 = vpop.xlane.xlu0 %1422
    %v1424 = vmul.f32 %v1420, %v1190
    %v1425 = vmul.f32 %v1423, %v1190
    %v1426 = vmul.f32 %v1414, %v1414
    %v1427 = vmul.f32 %v1415, %v1415
    %v1428 = vsel %vm141, %v1426, 0.0
    %1429 = vadd.xlane.f32.xlu0 %v1428
    %v1430 = vpop.xlane.xlu0 %1429
    %v1431 = vsel %vm141, %v1427, 0.0
    %1432 = vadd.xlane.f32.xlu0 %v1431
    %v1433 = vpop.xlane.xlu0 %1432
    %v1434 = vmul.f32 %v1430, %v1190
    %v1435 = vmul.f32 %v1433, %v1190
    %v1436 = vmul.f32 %v1424, %v1424
    %v1437 = vmul.f32 %v1425, %v1425
    %v1438 = vsub.f32 %v1434, %v1436
    %v1439 = vsub.f32 %v1435, %v1437
    %v1440 = vsub.f32 %v1414, %v1424
    %v1441 = vsub.f32 %v1415, %v1425
    %v1442 = vadd.f32 %v1438, 1e-05
    %v1443 = vadd.f32 %v1439, 1e-05
    %v1444 = vrsqrt.pop %v1442
    %v1445 = vrsqrt.pop %v1443
    %v1446 = vmul.f32 %v1440, %v1444
    %v1447 = vmul.f32 %v1441, %v1445
    %v1448 = vlaneseq
    %v1449 = vshrl.u32 %v1448, 7
    %v1450 = vsub.s32 0, %v1449
    %v1451 = vrot.slane %v1416, %v1450
    %v1452 = vmul.f32 %v1446, %v1451
    %v1453 = vmul.f32 %v1447, %v1451
    %v1454 = vlaneseq
    %v1455 = vshrl.u32 %v1454, 7
    %v1456 = vsub.s32 0, %v1455
    %v1457 = vrot.slane %v1417, %v1456
    %v1458 = vadd.f32 %v1452, %v1457
    %v1459 = vadd.f32 %v1453, %v1457
    %v1460 = vld [vmem:[#allocation2 + $0x270] sm:$0xff]
    %v1461 = vld [vmem:[#allocation2 + $0x278] sm:$0xff]
    %v1462 = vld [vmem:[#allocation2 + $0x280] sm:$0xff]
    %v1463 = vld [vmem:[#allocation2 + $0x288] sm:$0xff]
    %v1464 = vld [vmem:[#allocation2 + $0x2e0] sm:$0x1]
    %v1465 = vlaneseq
    %v1466 = vshrl.u32 %v1465, 7
    %v1467 = vsub.s32 0, %v1466
    %v1468 = vrot.slane %v1464, %v1467
    %v1470 = vsel %vm141, %v1458, 0
    %v1473 = vsel %vm141, %v1459, 0
    %1475 = vmatprep.subr.mxu0 0.0
    %1476 = vmatpush1.msra.mxu0 0.0
    %1477 = vmatprep.subr.mxu0 0.0
    %1478 = vmatpush1.msra.mxu0 0.0
    %1479 = vmatprep.subr.mxu0 0.0
    %1480 = vmatpush1.msra.mxu0 0.0
    %1481 = vmatprep.subr.mxu0 0.0
    %1482 = vmatpush1.msra.mxu0 0.0
    %1483 = vmatprep.subr.mxu0 0.0
    %1484 = vmatpush1.msra.mxu0 0.0
    %1485 = vmatprep.subr.mxu0 0.0
    %1486 = vmatpush1.msra.mxu0 0.0
    %1487 = vmatprep.subr.mxu0 0.0
    %1488 = vmatpush1.msra.mxu0 0.0
    %1489 = vmatprep.subr.mxu0 0.0
    %1490 = vmatpush1.msra.mxu0 0.0
    %1491 = vmatprep.subr.mxu0 0.0
    %1492 = vmatpush1.msra.mxu0 0.0
    %1493 = vmatprep.subr.mxu0 0.0
    %1494 = vmatpush1.msra.mxu0 0.0
    %1495 = vmatprep.subr.mxu0 0.0
    %1496 = vmatpush1.msra.mxu0 0.0
    %1497 = vmatprep.subr.mxu0 0.0
    %1498 = vmatpush1.msra.mxu0 0.0
    %1499 = vmatprep.subr.mxu0 0.0
    %1500 = vmatpush1.msra.mxu0 %v1463
    %1501 = vmatprep.subr.mxu0 0.0
    %1502 = vmatpush1.msra.mxu0 %v1462
    %1503 = vmatprep.subr.mxu0 0.0
    %1504 = vmatpush1.msra.mxu0 %v1461
    %1505 = vmatprep.subr.mxu0 0.0
    %1506 = vmatpush1.msra.mxu0 %v1460
    %1507 = vmatprep.subr.mxu0 0.0
    %1508 = vmatpush2.msra.mxu0 0.0
    %1509 = vmatprep.subr.mxu0 0.0
    %1510 = vmatpush2.msra.mxu0 0.0
    %1511 = vmatprep.subr.mxu0 0.0
    %1512 = vmatpush2.msra.mxu0 0.0
    %1513 = vmatprep.subr.mxu0 0.0
    %1514 = vmatpush2.msra.mxu0 0.0
    %1515 = vmatprep.subr.mxu0 0.0
    %1516 = vmatpush2.msra.mxu0 0.0
    %1517 = vmatprep.subr.mxu0 0.0
    %1518 = vmatpush2.msra.mxu0 0.0
    %1519 = vmatprep.subr.mxu0 0.0
    %1520 = vmatpush2.msra.mxu0 0.0
    %1521 = vmatprep.subr.mxu0 0.0
    %1522 = vmatpush2.msra.mxu0 0.0
    %1523 = vmatprep.subr.mxu0 0.0
    %1524 = vmatpush2.msra.mxu0 0.0
    %1525 = vmatprep.subr.mxu0 0.0
    %1526 = vmatpush2.msra.mxu0 0.0
    %1527 = vmatprep.subr.mxu0 0.0
    %1528 = vmatpush2.msra.mxu0 0.0
    %1529 = vmatprep.subr.mxu0 0.0
    %1530 = vmatpush2.msra.mxu0 0.0
    %1531 = vmatprep.subr.mxu0 0.0
    %1532 = vmatpush2.msra.mxu0 0.0
    %1533 = vmatprep.subr.mxu0 0.0
    %1534 = vmatpush2.msra.mxu0 0.0
    %1535 = vmatprep.subr.mxu0 0.0
    %1536 = vmatpush2.msra.mxu0 0.0
    %1537 = vmatprep.subr.mxu0 0.0
    %1538 = vmatpush2.msra.mxu0 0.0
    %1539 = vmatprep.mubr.f32.mxu0 0.0
    %1540 = vmatmul.mubr.f32.gmra.mxu0 %v1470
    %v1541 = vpop.f32.mrf.mxu0
    %v1542 = vadd.f32 %v1468, %v1541
    %v1543 = vpop.f32.mrf.mxu0
    %1544 = vmatprep.mubr.f32.mxu0 0.0
    %1545 = vmatmul.mubr.f32.gmra.mxu0 %v1473
    %v1546 = vpop.f32.mrf.mxu0
    %v1547 = vadd.f32 %v1468, %v1546
    %v1548 = vpop.f32.mrf.mxu0
    %1549 = vdwg.mxu0
    %v1550 = vld [vmem:[#allocation2 + $0x290] sm:$0xff]
    %v1551 = vld [vmem:[#allocation2 + $0x298] sm:$0xff]
    %v1552 = vld [vmem:[#allocation2 + $0x2a0] sm:$0xff]
    %v1553 = vld [vmem:[#allocation2 + $0x2a8] sm:$0xff]
    %v1554 = vld [vmem:[#allocation2 + $0x2e8] sm:$0x1]
    %v1555 = vlaneseq
    %v1556 = vshrl.u32 %v1555, 7
    %v1557 = vsub.s32 0, %v1556
    %v1558 = vrot.slane %v1554, %v1557
    %1559 = vmatprep.subr.mxu0 0.0
    %1560 = vmatpush1.msra.mxu0 0.0
    %1561 = vmatprep.subr.mxu0 0.0
    %1562 = vmatpush1.msra.mxu0 0.0
    %1563 = vmatprep.subr.mxu0 0.0
    %1564 = vmatpush1.msra.mxu0 0.0
    %1565 = vmatprep.subr.mxu0 0.0
    %1566 = vmatpush1.msra.mxu0 0.0
    %1567 = vmatprep.subr.mxu0 0.0
    %1568 = vmatpush1.msra.mxu0 0.0
    %1569 = vmatprep.subr.mxu0 0.0
    %1570 = vmatpush1.msra.mxu0 0.0
    %1571 = vmatprep.subr.mxu0 0.0
    %1572 = vmatpush1.msra.mxu0 0.0
    %1573 = vmatprep.subr.mxu0 0.0
    %1574 = vmatpush1.msra.mxu0 0.0
    %1575 = vmatprep.subr.mxu0 0.0
    %1576 = vmatpush1.msra.mxu0 0.0
    %1577 = vmatprep.subr.mxu0 0.0
    %1578 = vmatpush1.msra.mxu0 0.0
    %1579 = vmatprep.subr.mxu0 0.0
    %1580 = vmatpush1.msra.mxu0 0.0
    %1581 = vmatprep.subr.mxu0 0.0
    %1582 = vmatpush1.msra.mxu0 0.0
    %1583 = vmatprep.subr.mxu0 0.0
    %1584 = vmatpush1.msra.mxu0 %v1553
    %1585 = vmatprep.subr.mxu0 0.0
    %1586 = vmatpush1.msra.mxu0 %v1552
    %1587 = vmatprep.subr.mxu0 0.0
    %1588 = vmatpush1.msra.mxu0 %v1551
    %1589 = vmatprep.subr.mxu0 0.0
    %1590 = vmatpush1.msra.mxu0 %v1550
    %1591 = vmatprep.subr.mxu0 0.0
    %1592 = vmatpush2.msra.mxu0 0.0
    %1593 = vmatprep.subr.mxu0 0.0
    %1594 = vmatpush2.msra.mxu0 0.0
    %1595 = vmatprep.subr.mxu0 0.0
    %1596 = vmatpush2.msra.mxu0 0.0
    %1597 = vmatprep.subr.mxu0 0.0
    %1598 = vmatpush2.msra.mxu0 0.0
    %1599 = vmatprep.subr.mxu0 0.0
    %1600 = vmatpush2.msra.mxu0 0.0
    %1601 = vmatprep.subr.mxu0 0.0
    %1602 = vmatpush2.msra.mxu0 0.0
    %1603 = vmatprep.subr.mxu0 0.0
    %1604 = vmatpush2.msra.mxu0 0.0
    %1605 = vmatprep.subr.mxu0 0.0
    %1606 = vmatpush2.msra.mxu0 0.0
    %1607 = vmatprep.subr.mxu0 0.0
    %1608 = vmatpush2.msra.mxu0 0.0
    %1609 = vmatprep.subr.mxu0 0.0
    %1610 = vmatpush2.msra.mxu0 0.0
    %1611 = vmatprep.subr.mxu0 0.0
    %1612 = vmatpush2.msra.mxu0 0.0
    %1613 = vmatprep.subr.mxu0 0.0
    %1614 = vmatpush2.msra.mxu0 0.0
    %1615 = vmatprep.subr.mxu0 0.0
    %1616 = vmatpush2.msra.mxu0 0.0
    %1617 = vmatprep.subr.mxu0 0.0
    %1618 = vmatpush2.msra.mxu0 0.0
    %1619 = vmatprep.subr.mxu0 0.0
    %1620 = vmatpush2.msra.mxu0 0.0
    %1621 = vmatprep.subr.mxu0 0.0
    %1622 = vmatpush2.msra.mxu0 0.0
    %1623 = vmatprep.mubr.f32.mxu0 0.0
    %1624 = vmatmul.mubr.f32.gmra.mxu0 %v1470
    %v1625 = vpop.f32.mrf.mxu0
    %v1626 = vadd.f32 %v1558, %v1625
    %v1627 = vpop.f32.mrf.mxu0
    %1628 = vmatprep.mubr.f32.mxu0 0.0
    %1629 = vmatmul.mubr.f32.gmra.mxu0 %v1473
    %v1630 = vpop.f32.mrf.mxu0
    %v1631 = vadd.f32 %v1558, %v1630
    %v1632 = vpop.f32.mrf.mxu0
    %1633 = vdwg.mxu0
    %v1634 = vld [vmem:[#allocation2 + $0x2b0] sm:$0xff]
    %v1635 = vld [vmem:[#allocation2 + $0x2b8] sm:$0xff]
    %v1636 = vld [vmem:[#allocation2 + $0x2c0] sm:$0xff]
    %v1637 = vld [vmem:[#allocation2 + $0x2c8] sm:$0xff]
    %v1638 = vld [vmem:[#allocation2 + $0x2f0] sm:$0x1]
    %v1639 = vlaneseq
    %v1640 = vshrl.u32 %v1639, 7
    %v1641 = vsub.s32 0, %v1640
    %v1642 = vrot.slane %v1638, %v1641
    %1643 = vmatprep.subr.mxu0 0.0
    %1644 = vmatpush1.msra.mxu0 0.0
    %1645 = vmatprep.subr.mxu0 0.0
    %1646 = vmatpush1.msra.mxu0 0.0
    %1647 = vmatprep.subr.mxu0 0.0
    %1648 = vmatpush1.msra.mxu0 0.0
    %1649 = vmatprep.subr.mxu0 0.0
    %1650 = vmatpush1.msra.mxu0 0.0
    %1651 = vmatprep.subr.mxu0 0.0
    %1652 = vmatpush1.msra.mxu0 0.0
    %1653 = vmatprep.subr.mxu0 0.0
    %1654 = vmatpush1.msra.mxu0 0.0
    %1655 = vmatprep.subr.mxu0 0.0
    %1656 = vmatpush1.msra.mxu0 0.0
    %1657 = vmatprep.subr.mxu0 0.0
    %1658 = vmatpush1.msra.mxu0 0.0
    %1659 = vmatprep.subr.mxu0 0.0
    %1660 = vmatpush1.msra.mxu0 0.0
    %1661 = vmatprep.subr.mxu0 0.0
    %1662 = vmatpush1.msra.mxu0 0.0
    %1663 = vmatprep.subr.mxu0 0.0
    %1664 = vmatpush1.msra.mxu0 0.0
    %1665 = vmatprep.subr.mxu0 0.0
    %1666 = vmatpush1.msra.mxu0 0.0
    %1667 = vmatprep.subr.mxu0 0.0
    %1668 = vmatpush1.msra.mxu0 %v1637
    %1669 = vmatprep.subr.mxu0 0.0
    %1670 = vmatpush1.msra.mxu0 %v1636
    %1671 = vmatprep.subr.mxu0 0.0
    %1672 = vmatpush1.msra.mxu0 %v1635
    %1673 = vmatprep.subr.mxu0 0.0
    %1674 = vmatpush1.msra.mxu0 %v1634
    %1675 = vmatprep.subr.mxu0 0.0
    %1676 = vmatpush2.msra.mxu0 0.0
    %1677 = vmatprep.subr.mxu0 0.0
    %1678 = vmatpush2.msra.mxu0 0.0
    %1679 = vmatprep.subr.mxu0 0.0
    %1680 = vmatpush2.msra.mxu0 0.0
    %1681 = vmatprep.subr.mxu0 0.0
    %1682 = vmatpush2.msra.mxu0 0.0
    %1683 = vmatprep.subr.mxu0 0.0
    %1684 = vmatpush2.msra.mxu0 0.0
    %1685 = vmatprep.subr.mxu0 0.0
    %1686 = vmatpush2.msra.mxu0 0.0
    %1687 = vmatprep.subr.mxu0 0.0
    %1688 = vmatpush2.msra.mxu0 0.0
    %1689 = vmatprep.subr.mxu0 0.0
    %1690 = vmatpush2.msra.mxu0 0.0
    %1691 = vmatprep.subr.mxu0 0.0
    %1692 = vmatpush2.msra.mxu0 0.0
    %1693 = vmatprep.subr.mxu0 0.0
    %1694 = vmatpush2.msra.mxu0 0.0
    %1695 = vmatprep.subr.mxu0 0.0
    %1696 = vmatpush2.msra.mxu0 0.0
    %1697 = vmatprep.subr.mxu0 0.0
    %1698 = vmatpush2.msra.mxu0 0.0
    %1699 = vmatprep.subr.mxu0 0.0
    %1700 = vmatpush2.msra.mxu0 0.0
    %1701 = vmatprep.subr.mxu0 0.0
    %1702 = vmatpush2.msra.mxu0 0.0
    %1703 = vmatprep.subr.mxu0 0.0
    %1704 = vmatpush2.msra.mxu0 0.0
    %1705 = vmatprep.subr.mxu0 0.0
    %1706 = vmatpush2.msra.mxu0 0.0
    %1707 = vmatprep.mubr.f32.mxu0 0.0
    %1708 = vmatmul.mubr.f32.gmra.mxu0 %v1470
    %v1709 = vpop.f32.mrf.mxu0
    %v1710 = vadd.f32 %v1642, %v1709
    %v1711 = vpop.f32.mrf.mxu0
    %1712 = vmatprep.mubr.f32.mxu0 0.0
    %1713 = vmatmul.mubr.f32.gmra.mxu0 %v1473
    %v1714 = vpop.f32.mrf.mxu0
    %v1715 = vadd.f32 %v1642, %v1714
    %v1716 = vpop.f32.mrf.mxu0
    %1717 = vdwg.mxu0
    %v1719 = vsel %vm48, %v1542, 0
    %v1722 = vsel %vm48, %v1547, 0
    %v1725 = vsel %vm48, %v1626, 0
    %v1728 = vsel %vm48, %v1631, 0
    %1730 = vmatprep.subr.mxu0 0.0
    %1731 = vmatpush1.xpose.msra.mxu0 0.0
    %1732 = vmatprep.subr.mxu0 0.0
    %1733 = vmatpush1.xpose.msra.mxu0 0.0
    %1734 = vmatprep.subr.mxu0 0.0
    %1735 = vmatpush1.xpose.msra.mxu0 0.0
    %1736 = vmatprep.subr.mxu0 0.0
    %1737 = vmatpush1.xpose.msra.mxu0 0.0
    %1738 = vmatprep.subr.mxu0 0.0
    %1739 = vmatpush1.xpose.msra.mxu0 0.0
    %1740 = vmatprep.subr.mxu0 0.0
    %1741 = vmatpush1.xpose.msra.mxu0 0.0
    %1742 = vmatprep.subr.mxu0 0.0
    %1743 = vmatpush1.xpose.msra.mxu0 0.0
    %1744 = vmatprep.subr.mxu0 0.0
    %1745 = vmatpush1.xpose.msra.mxu0 0.0
    %1746 = vmatprep.subr.mxu0 0.0
    %1747 = vmatpush1.xpose.msra.mxu0 0.0
    %1748 = vmatprep.subr.mxu0 0.0
    %1749 = vmatpush1.xpose.msra.mxu0 0.0
    %1750 = vmatprep.subr.mxu0 0.0
    %1751 = vmatpush1.xpose.msra.mxu0 0.0
    %1752 = vmatprep.subr.mxu0 0.0
    %1753 = vmatpush1.xpose.msra.mxu0 0.0
    %1754 = vmatprep.subr.mxu0 0.0
    %1755 = vmatpush1.xpose.msra.mxu0 0.0
    %1756 = vmatprep.subr.mxu0 0.0
    %1757 = vmatpush1.xpose.msra.mxu0 0.0
    %1758 = vmatprep.subr.mxu0 0.0
    %1759 = vmatpush1.xpose.msra.mxu0 %v1728
    %1760 = vmatprep.subr.mxu0 0.0
    %1761 = vmatpush1.xpose.msra.mxu0 %v1725
    %1762 = vmatprep.subr.mxu0 0.0
    %1763 = vmatpush2.xpose.msra.mxu0 0.0
    %1764 = vmatprep.subr.mxu0 0.0
    %1765 = vmatpush2.xpose.msra.mxu0 0.0
    %1766 = vmatprep.subr.mxu0 0.0
    %1767 = vmatpush2.xpose.msra.mxu0 0.0
    %1768 = vmatprep.subr.mxu0 0.0
    %1769 = vmatpush2.xpose.msra.mxu0 0.0
    %1770 = vmatprep.subr.mxu0 0.0
    %1771 = vmatpush2.xpose.msra.mxu0 0.0
    %1772 = vmatprep.subr.mxu0 0.0
    %1773 = vmatpush2.xpose.msra.mxu0 0.0
    %1774 = vmatprep.subr.mxu0 0.0
    %1775 = vmatpush2.xpose.msra.mxu0 0.0
    %1776 = vmatprep.subr.mxu0 0.0
    %1777 = vmatpush2.xpose.msra.mxu0 0.0
    %1778 = vmatprep.subr.mxu0 0.0
    %1779 = vmatpush2.xpose.msra.mxu0 0.0
    %1780 = vmatprep.subr.mxu0 0.0
    %1781 = vmatpush2.xpose.msra.mxu0 0.0
    %1782 = vmatprep.subr.mxu0 0.0
    %1783 = vmatpush2.xpose.msra.mxu0 0.0
    %1784 = vmatprep.subr.mxu0 0.0
    %1785 = vmatpush2.xpose.msra.mxu0 0.0
    %1786 = vmatprep.subr.mxu0 0.0
    %1787 = vmatpush2.xpose.msra.mxu0 0.0
    %1788 = vmatprep.subr.mxu0 0.0
    %1789 = vmatpush2.xpose.msra.mxu0 0.0
    %1790 = vmatprep.subr.mxu0 0.0
    %1791 = vmatpush2.xpose.msra.mxu0 0.0
    %1792 = vmatprep.subr.mxu0 0.0
    %1793 = vmatpush2.xpose.msra.mxu0 0.0
    %1794 = vmatprep.mubr.f32.mxu0 0.0
    %1795 = vmatmul.mubr.f32.gmra.mxu0 %v1719
    %v1796 = vpop.f32.mrf.mxu0
    %v1797 = vadd.f32 %v130, %v1796
    %v1798 = vpop.f32.mrf.mxu0
    %1799 = vmatprep.mubr.f32.mxu0 0.0
    %1800 = vmatmul.mubr.f32.gmra.mxu0 %v1722
    %v1801 = vpop.f32.mrf.mxu0
    %v1802 = vadd.f32 %v131, %v1801
    %v1803 = vpop.f32.mrf.mxu0
    %1804 = vdwg.mxu0
    %v1805 = vmul.f32 %v1797, 1.442695
    %v1806 = vpow.pop %v1805
    %v1807 = vmul.f32 %v1802, 1.442695
    %v1808 = vpow.pop %v1807
    %v1809 = vsel %vm48, %v1806, 0.0
    %1810 = vadd.xlane.f32.xlu0 %v1809
    %v1811 = vpop.xlane.xlu0 %1810
    %v1812 = vsel %vm48, %v1808, 0.0
    %1813 = vadd.xlane.f32.xlu0 %v1812
    %v1814 = vpop.xlane.xlu0 %1813
    %v1815 = vrcp.pop %v1811
    %v1816 = vrcp.pop %v1814
    %v1817 = vmul.f32 %v1806, %v1815
    %v1818 = vmul.f32 %v1808, %v1816
    %v1820 = vsel %vm48, %v1817, 0
    %v1823 = vsel %vm48, %v1818, 0
    %1825 = vmatprep.subr.mxu0 0.0
    %1826 = vmatpush1.msra.mxu0 0.0
    %1827 = vmatprep.subr.mxu0 0.0
    %1828 = vmatpush1.msra.mxu0 0.0
    %1829 = vmatprep.subr.mxu0 0.0
    %1830 = vmatpush1.msra.mxu0 0.0
    %1831 = vmatprep.subr.mxu0 0.0
    %1832 = vmatpush1.msra.mxu0 0.0
    %1833 = vmatprep.subr.mxu0 0.0
    %1834 = vmatpush1.msra.mxu0 0.0
    %1835 = vmatprep.subr.mxu0 0.0
    %1836 = vmatpush1.msra.mxu0 0.0
    %1837 = vmatprep.subr.mxu0 0.0
    %1838 = vmatpush1.msra.mxu0 0.0
    %1839 = vmatprep.subr.mxu0 0.0
    %1840 = vmatpush1.msra.mxu0 0.0
    %1841 = vmatprep.subr.mxu0 0.0
    %1842 = vmatpush1.msra.mxu0 0.0
    %1843 = vmatprep.subr.mxu0 0.0
    %1844 = vmatpush1.msra.mxu0 0.0
    %1845 = vmatprep.subr.mxu0 0.0
    %1846 = vmatpush1.msra.mxu0 0.0
    %1847 = vmatprep.subr.mxu0 0.0
    %1848 = vmatpush1.msra.mxu0 0.0
    %1849 = vmatprep.subr.mxu0 0.0
    %1850 = vmatpush1.msra.mxu0 0.0
    %1851 = vmatprep.subr.mxu0 0.0
    %1852 = vmatpush1.msra.mxu0 0.0
    %1853 = vmatprep.subr.mxu0 0.0
    %1854 = vmatpush1.msra.mxu0 %v1715
    %1855 = vmatprep.subr.mxu0 0.0
    %1856 = vmatpush1.msra.mxu0 %v1710
    %1857 = vmatprep.subr.mxu0 0.0
    %1858 = vmatpush2.msra.mxu0 0.0
    %1859 = vmatprep.subr.mxu0 0.0
    %1860 = vmatpush2.msra.mxu0 0.0
    %1861 = vmatprep.subr.mxu0 0.0
    %1862 = vmatpush2.msra.mxu0 0.0
    %1863 = vmatprep.subr.mxu0 0.0
    %1864 = vmatpush2.msra.mxu0 0.0
    %1865 = vmatprep.subr.mxu0 0.0
    %1866 = vmatpush2.msra.mxu0 0.0
    %1867 = vmatprep.subr.mxu0 0.0
    %1868 = vmatpush2.msra.mxu0 0.0
    %1869 = vmatprep.subr.mxu0 0.0
    %1870 = vmatpush2.msra.mxu0 0.0
    %1871 = vmatprep.subr.mxu0 0.0
    %1872 = vmatpush2.msra.mxu0 0.0
    %1873 = vmatprep.subr.mxu0 0.0
    %1874 = vmatpush2.msra.mxu0 0.0
    %1875 = vmatprep.subr.mxu0 0.0
    %1876 = vmatpush2.msra.mxu0 0.0
    %1877 = vmatprep.subr.mxu0 0.0
    %1878 = vmatpush2.msra.mxu0 0.0
    %1879 = vmatprep.subr.mxu0 0.0
    %1880 = vmatpush2.msra.mxu0 0.0
    %1881 = vmatprep.subr.mxu0 0.0
    %1882 = vmatpush2.msra.mxu0 0.0
    %1883 = vmatprep.subr.mxu0 0.0
    %1884 = vmatpush2.msra.mxu0 0.0
    %1885 = vmatprep.subr.mxu0 0.0
    %1886 = vmatpush2.msra.mxu0 0.0
    %1887 = vmatprep.subr.mxu0 0.0
    %1888 = vmatpush2.msra.mxu0 0.0
    %1889 = vmatprep.mubr.f32.mxu0 0.0
    %1890 = vmatmul.mubr.f32.gmra.mxu0 %v1820
    %v1891 = vpop.f32.mrf.mxu0
    %v1892 = vadd.f32 0.0, %v1891
    %v1893 = vpop.f32.mrf.mxu0
    %1894 = vmatprep.mubr.f32.mxu0 0.0
    %1895 = vmatmul.mubr.f32.gmra.mxu0 %v1823
    %v1896 = vpop.f32.mrf.mxu0
    %v1897 = vadd.f32 0.0, %v1896
    %v1898 = vpop.f32.mrf.mxu0
    %1899 = vdwg.mxu0
    %v1900 = vld [vmem:[#allocation2 + $0x2d0] sm:$0xff]
    %v1901 = vld [vmem:[#allocation2 + $0x2d8] sm:$0xff]
    %v1902 = vld [vmem:[#allocation2 + $0x2f8] sm:$0xff]
    %v1903 = vld [vmem:[#allocation2 + $0x300] sm:$0xff]
    %v1904 = vld [vmem:[#allocation2 + $0x308] sm:$0xff]
    %v1905 = vld [vmem:[#allocation2 + $0x310] sm:$0xff]
    %v1906 = vld [vmem:[#allocation2 + $0x368] sm:$0x1]
    %v1907 = vlaneseq
    %v1908 = vshrl.u32 %v1907, 7
    %v1909 = vsub.s32 0, %v1908
    %v1910 = vrot.slane %v1906, %v1909
    %1911 = vmatprep.subr.mxu0 0.0
    %1912 = vmatpush1.msra.mxu0 0.0
    %1913 = vmatprep.subr.mxu0 0.0
    %1914 = vmatpush1.msra.mxu0 0.0
    %1915 = vmatprep.subr.mxu0 0.0
    %1916 = vmatpush1.msra.mxu0 0.0
    %1917 = vmatprep.subr.mxu0 0.0
    %1918 = vmatpush1.msra.mxu0 0.0
    %1919 = vmatprep.subr.mxu0 0.0
    %1920 = vmatpush1.msra.mxu0 0.0
    %1921 = vmatprep.subr.mxu0 0.0
    %1922 = vmatpush1.msra.mxu0 0.0
    %1923 = vmatprep.subr.mxu0 0.0
    %1924 = vmatpush1.msra.mxu0 0.0
    %1925 = vmatprep.subr.mxu0 0.0
    %1926 = vmatpush1.msra.mxu0 0.0
    %1927 = vmatprep.subr.mxu0 0.0
    %1928 = vmatpush1.msra.mxu0 0.0
    %1929 = vmatprep.subr.mxu0 0.0
    %1930 = vmatpush1.msra.mxu0 0.0
    %1931 = vmatprep.subr.mxu0 0.0
    %1932 = vmatpush1.msra.mxu0 0.0
    %1933 = vmatprep.subr.mxu0 0.0
    %1934 = vmatpush1.msra.mxu0 0.0
    %1935 = vmatprep.subr.mxu0 0.0
    %1936 = vmatpush1.msra.mxu0 %v1905
    %1937 = vmatprep.subr.mxu0 0.0
    %1938 = vmatpush1.msra.mxu0 %v1904
    %1939 = vmatprep.subr.mxu0 0.0
    %1940 = vmatpush1.msra.mxu0 %v1903
    %1941 = vmatprep.subr.mxu0 0.0
    %1942 = vmatpush1.msra.mxu0 %v1902
    %1943 = vmatprep.subr.mxu0 0.0
    %1944 = vmatpush2.msra.mxu0 0.0
    %1945 = vmatprep.subr.mxu0 0.0
    %1946 = vmatpush2.msra.mxu0 0.0
    %1947 = vmatprep.subr.mxu0 0.0
    %1948 = vmatpush2.msra.mxu0 0.0
    %1949 = vmatprep.subr.mxu0 0.0
    %1950 = vmatpush2.msra.mxu0 0.0
    %1951 = vmatprep.subr.mxu0 0.0
    %1952 = vmatpush2.msra.mxu0 0.0
    %1953 = vmatprep.subr.mxu0 0.0
    %1954 = vmatpush2.msra.mxu0 0.0
    %1955 = vmatprep.subr.mxu0 0.0
    %1956 = vmatpush2.msra.mxu0 0.0
    %1957 = vmatprep.subr.mxu0 0.0
    %1958 = vmatpush2.msra.mxu0 0.0
    %1959 = vmatprep.subr.mxu0 0.0
    %1960 = vmatpush2.msra.mxu0 0.0
    %1961 = vmatprep.subr.mxu0 0.0
    %1962 = vmatpush2.msra.mxu0 0.0
    %1963 = vmatprep.subr.mxu0 0.0
    %1964 = vmatpush2.msra.mxu0 0.0
    %1965 = vmatprep.subr.mxu0 0.0
    %1966 = vmatpush2.msra.mxu0 0.0
    %1967 = vmatprep.subr.mxu0 0.0
    %1968 = vmatpush2.msra.mxu0 0.0
    %1969 = vmatprep.subr.mxu0 0.0
    %1970 = vmatpush2.msra.mxu0 0.0
    %1971 = vmatprep.subr.mxu0 0.0
    %1972 = vmatpush2.msra.mxu0 0.0
    %1973 = vmatprep.subr.mxu0 0.0
    %1974 = vmatpush2.msra.mxu0 0.0
    %1975 = vmatprep.mubr.f32.mxu0 0.0
    %1976 = vmatmul.mubr.f32.gmra.mxu0 %v1470
    %v1977 = vpop.f32.mrf.mxu0
    %v1978 = vadd.f32 %v1910, %v1977
    %v1979 = vpop.f32.mrf.mxu0
    %1980 = vmatprep.mubr.f32.mxu0 0.0
    %1981 = vmatmul.mubr.f32.gmra.mxu0 %v1473
    %v1982 = vpop.f32.mrf.mxu0
    %v1983 = vadd.f32 %v1910, %v1982
    %v1984 = vpop.f32.mrf.mxu0
    %1985 = vdwg.mxu0
    %v1986 = vld [vmem:[#allocation2 + $0x318] sm:$0xff]
    %v1987 = vld [vmem:[#allocation2 + $0x320] sm:$0xff]
    %v1988 = vld [vmem:[#allocation2 + $0x328] sm:$0xff]
    %v1989 = vld [vmem:[#allocation2 + $0x330] sm:$0xff]
    %v1990 = vld [vmem:[#allocation2 + $0x370] sm:$0x1]
    %v1991 = vlaneseq
    %v1992 = vshrl.u32 %v1991, 7
    %v1993 = vsub.s32 0, %v1992
    %v1994 = vrot.slane %v1990, %v1993
    %1995 = vmatprep.subr.mxu0 0.0
    %1996 = vmatpush1.msra.mxu0 0.0
    %1997 = vmatprep.subr.mxu0 0.0
    %1998 = vmatpush1.msra.mxu0 0.0
    %1999 = vmatprep.subr.mxu0 0.0
    %2000 = vmatpush1.msra.mxu0 0.0
    %2001 = vmatprep.subr.mxu0 0.0
    %2002 = vmatpush1.msra.mxu0 0.0
    %2003 = vmatprep.subr.mxu0 0.0
    %2004 = vmatpush1.msra.mxu0 0.0
    %2005 = vmatprep.subr.mxu0 0.0
    %2006 = vmatpush1.msra.mxu0 0.0
    %2007 = vmatprep.subr.mxu0 0.0
    %2008 = vmatpush1.msra.mxu0 0.0
    %2009 = vmatprep.subr.mxu0 0.0
    %2010 = vmatpush1.msra.mxu0 0.0
    %2011 = vmatprep.subr.mxu0 0.0
    %2012 = vmatpush1.msra.mxu0 0.0
    %2013 = vmatprep.subr.mxu0 0.0
    %2014 = vmatpush1.msra.mxu0 0.0
    %2015 = vmatprep.subr.mxu0 0.0
    %2016 = vmatpush1.msra.mxu0 0.0
    %2017 = vmatprep.subr.mxu0 0.0
    %2018 = vmatpush1.msra.mxu0 0.0
    %2019 = vmatprep.subr.mxu0 0.0
    %2020 = vmatpush1.msra.mxu0 %v1989
    %2021 = vmatprep.subr.mxu0 0.0
    %2022 = vmatpush1.msra.mxu0 %v1988
    %2023 = vmatprep.subr.mxu0 0.0
    %2024 = vmatpush1.msra.mxu0 %v1987
    %2025 = vmatprep.subr.mxu0 0.0
    %2026 = vmatpush1.msra.mxu0 %v1986
    %2027 = vmatprep.subr.mxu0 0.0
    %2028 = vmatpush2.msra.mxu0 0.0
    %2029 = vmatprep.subr.mxu0 0.0
    %2030 = vmatpush2.msra.mxu0 0.0
    %2031 = vmatprep.subr.mxu0 0.0
    %2032 = vmatpush2.msra.mxu0 0.0
    %2033 = vmatprep.subr.mxu0 0.0
    %2034 = vmatpush2.msra.mxu0 0.0
    %2035 = vmatprep.subr.mxu0 0.0
    %2036 = vmatpush2.msra.mxu0 0.0
    %2037 = vmatprep.subr.mxu0 0.0
    %2038 = vmatpush2.msra.mxu0 0.0
    %2039 = vmatprep.subr.mxu0 0.0
    %2040 = vmatpush2.msra.mxu0 0.0
    %2041 = vmatprep.subr.mxu0 0.0
    %2042 = vmatpush2.msra.mxu0 0.0
    %2043 = vmatprep.subr.mxu0 0.0
    %2044 = vmatpush2.msra.mxu0 0.0
    %2045 = vmatprep.subr.mxu0 0.0
    %2046 = vmatpush2.msra.mxu0 0.0
    %2047 = vmatprep.subr.mxu0 0.0
    %2048 = vmatpush2.msra.mxu0 0.0
    %2049 = vmatprep.subr.mxu0 0.0
    %2050 = vmatpush2.msra.mxu0 0.0
    %2051 = vmatprep.subr.mxu0 0.0
    %2052 = vmatpush2.msra.mxu0 0.0
    %2053 = vmatprep.subr.mxu0 0.0
    %2054 = vmatpush2.msra.mxu0 0.0
    %2055 = vmatprep.subr.mxu0 0.0
    %2056 = vmatpush2.msra.mxu0 0.0
    %2057 = vmatprep.subr.mxu0 0.0
    %2058 = vmatpush2.msra.mxu0 0.0
    %2059 = vmatprep.mubr.f32.mxu0 0.0
    %2060 = vmatmul.mubr.f32.gmra.mxu0 %v1470
    %v2061 = vpop.f32.mrf.mxu0
    %v2062 = vadd.f32 %v1994, %v2061
    %v2063 = vpop.f32.mrf.mxu0
    %2064 = vmatprep.mubr.f32.mxu0 0.0
    %2065 = vmatmul.mubr.f32.gmra.mxu0 %v1473
    %v2066 = vpop.f32.mrf.mxu0
    %v2067 = vadd.f32 %v1994, %v2066
    %v2068 = vpop.f32.mrf.mxu0
    %2069 = vdwg.mxu0
    %v2070 = vld [vmem:[#allocation2 + $0x338] sm:$0xff]
    %v2071 = vld [vmem:[#allocation2 + $0x340] sm:$0xff]
    %v2072 = vld [vmem:[#allocation2 + $0x348] sm:$0xff]
    %v2073 = vld [vmem:[#allocation2 + $0x350] sm:$0xff]
    %v2074 = vld [vmem:[#allocation2 + $0x378] sm:$0x1]
    %v2075 = vlaneseq
    %v2076 = vshrl.u32 %v2075, 7
    %v2077 = vsub.s32 0, %v2076
    %v2078 = vrot.slane %v2074, %v2077
    %2079 = vmatprep.subr.mxu0 0.0
    %2080 = vmatpush1.msra.mxu0 0.0
    %2081 = vmatprep.subr.mxu0 0.0
    %2082 = vmatpush1.msra.mxu0 0.0
    %2083 = vmatprep.subr.mxu0 0.0
    %2084 = vmatpush1.msra.mxu0 0.0
    %2085 = vmatprep.subr.mxu0 0.0
    %2086 = vmatpush1.msra.mxu0 0.0
    %2087 = vmatprep.subr.mxu0 0.0
    %2088 = vmatpush1.msra.mxu0 0.0
    %2089 = vmatprep.subr.mxu0 0.0
    %2090 = vmatpush1.msra.mxu0 0.0
    %2091 = vmatprep.subr.mxu0 0.0
    %2092 = vmatpush1.msra.mxu0 0.0
    %2093 = vmatprep.subr.mxu0 0.0
    %2094 = vmatpush1.msra.mxu0 0.0
    %2095 = vmatprep.subr.mxu0 0.0
    %2096 = vmatpush1.msra.mxu0 0.0
    %2097 = vmatprep.subr.mxu0 0.0
    %2098 = vmatpush1.msra.mxu0 0.0
    %2099 = vmatprep.subr.mxu0 0.0
    %2100 = vmatpush1.msra.mxu0 0.0
    %2101 = vmatprep.subr.mxu0 0.0
    %2102 = vmatpush1.msra.mxu0 0.0
    %2103 = vmatprep.subr.mxu0 0.0
    %2104 = vmatpush1.msra.mxu0 %v2073
    %2105 = vmatprep.subr.mxu0 0.0
    %2106 = vmatpush1.msra.mxu0 %v2072
    %2107 = vmatprep.subr.mxu0 0.0
    %2108 = vmatpush1.msra.mxu0 %v2071
    %2109 = vmatprep.subr.mxu0 0.0
    %2110 = vmatpush1.msra.mxu0 %v2070
    %2111 = vmatprep.subr.mxu0 0.0
    %2112 = vmatpush2.msra.mxu0 0.0
    %2113 = vmatprep.subr.mxu0 0.0
    %2114 = vmatpush2.msra.mxu0 0.0
    %2115 = vmatprep.subr.mxu0 0.0
    %2116 = vmatpush2.msra.mxu0 0.0
    %2117 = vmatprep.subr.mxu0 0.0
    %2118 = vmatpush2.msra.mxu0 0.0
    %2119 = vmatprep.subr.mxu0 0.0
    %2120 = vmatpush2.msra.mxu0 0.0
    %2121 = vmatprep.subr.mxu0 0.0
    %2122 = vmatpush2.msra.mxu0 0.0
    %2123 = vmatprep.subr.mxu0 0.0
    %2124 = vmatpush2.msra.mxu0 0.0
    %2125 = vmatprep.subr.mxu0 0.0
    %2126 = vmatpush2.msra.mxu0 0.0
    %2127 = vmatprep.subr.mxu0 0.0
    %2128 = vmatpush2.msra.mxu0 0.0
    %2129 = vmatprep.subr.mxu0 0.0
    %2130 = vmatpush2.msra.mxu0 0.0
    %2131 = vmatprep.subr.mxu0 0.0
    %2132 = vmatpush2.msra.mxu0 0.0
    %2133 = vmatprep.subr.mxu0 0.0
    %2134 = vmatpush2.msra.mxu0 0.0
    %2135 = vmatprep.subr.mxu0 0.0
    %2136 = vmatpush2.msra.mxu0 0.0
    %2137 = vmatprep.subr.mxu0 0.0
    %2138 = vmatpush2.msra.mxu0 0.0
    %2139 = vmatprep.subr.mxu0 0.0
    %2140 = vmatpush2.msra.mxu0 0.0
    %2141 = vmatprep.subr.mxu0 0.0
    %2142 = vmatpush2.msra.mxu0 0.0
    %2143 = vmatprep.mubr.f32.mxu0 0.0
    %2144 = vmatmul.mubr.f32.gmra.mxu0 %v1470
    %v2145 = vpop.f32.mrf.mxu0
    %v2146 = vadd.f32 %v2078, %v2145
    %v2147 = vpop.f32.mrf.mxu0
    %2148 = vmatprep.mubr.f32.mxu0 0.0
    %2149 = vmatmul.mubr.f32.gmra.mxu0 %v1473
    %v2150 = vpop.f32.mrf.mxu0
    %v2151 = vadd.f32 %v2078, %v2150
    %v2152 = vpop.f32.mrf.mxu0
    %2153 = vdwg.mxu0
    %v2155 = vsel %vm48, %v1978, 0
    %v2158 = vsel %vm48, %v1983, 0
    %v2161 = vsel %vm48, %v2062, 0
    %v2164 = vsel %vm48, %v2067, 0
    %2166 = vmatprep.subr.mxu0 0.0
    %2167 = vmatpush1.xpose.msra.mxu0 0.0
    %2168 = vmatprep.subr.mxu0 0.0
    %2169 = vmatpush1.xpose.msra.mxu0 0.0
    %2170 = vmatprep.subr.mxu0 0.0
    %2171 = vmatpush1.xpose.msra.mxu0 0.0
    %2172 = vmatprep.subr.mxu0 0.0
    %2173 = vmatpush1.xpose.msra.mxu0 0.0
    %2174 = vmatprep.subr.mxu0 0.0
    %2175 = vmatpush1.xpose.msra.mxu0 0.0
    %2176 = vmatprep.subr.mxu0 0.0
    %2177 = vmatpush1.xpose.msra.mxu0 0.0
    %2178 = vmatprep.subr.mxu0 0.0
    %2179 = vmatpush1.xpose.msra.mxu0 0.0
    %2180 = vmatprep.subr.mxu0 0.0
    %2181 = vmatpush1.xpose.msra.mxu0 0.0
    %2182 = vmatprep.subr.mxu0 0.0
    %2183 = vmatpush1.xpose.msra.mxu0 0.0
    %2184 = vmatprep.subr.mxu0 0.0
    %2185 = vmatpush1.xpose.msra.mxu0 0.0
    %2186 = vmatprep.subr.mxu0 0.0
    %2187 = vmatpush1.xpose.msra.mxu0 0.0
    %2188 = vmatprep.subr.mxu0 0.0
    %2189 = vmatpush1.xpose.msra.mxu0 0.0
    %2190 = vmatprep.subr.mxu0 0.0
    %2191 = vmatpush1.xpose.msra.mxu0 0.0
    %2192 = vmatprep.subr.mxu0 0.0
    %2193 = vmatpush1.xpose.msra.mxu0 0.0
    %2194 = vmatprep.subr.mxu0 0.0
    %2195 = vmatpush1.xpose.msra.mxu0 %v2164
    %2196 = vmatprep.subr.mxu0 0.0
    %2197 = vmatpush1.xpose.msra.mxu0 %v2161
    %2198 = vmatprep.subr.mxu0 0.0
    %2199 = vmatpush2.xpose.msra.mxu0 0.0
    %2200 = vmatprep.subr.mxu0 0.0
    %2201 = vmatpush2.xpose.msra.mxu0 0.0
    %2202 = vmatprep.subr.mxu0 0.0
    %2203 = vmatpush2.xpose.msra.mxu0 0.0
    %2204 = vmatprep.subr.mxu0 0.0
    %2205 = vmatpush2.xpose.msra.mxu0 0.0
    %2206 = vmatprep.subr.mxu0 0.0
    %2207 = vmatpush2.xpose.msra.mxu0 0.0
    %2208 = vmatprep.subr.mxu0 0.0
    %2209 = vmatpush2.xpose.msra.mxu0 0.0
    %2210 = vmatprep.subr.mxu0 0.0
    %2211 = vmatpush2.xpose.msra.mxu0 0.0
    %2212 = vmatprep.subr.mxu0 0.0
    %2213 = vmatpush2.xpose.msra.mxu0 0.0
    %2214 = vmatprep.subr.mxu0 0.0
    %2215 = vmatpush2.xpose.msra.mxu0 0.0
    %2216 = vmatprep.subr.mxu0 0.0
    %2217 = vmatpush2.xpose.msra.mxu0 0.0
    %2218 = vmatprep.subr.mxu0 0.0
    %2219 = vmatpush2.xpose.msra.mxu0 0.0
    %2220 = vmatprep.subr.mxu0 0.0
    %2221 = vmatpush2.xpose.msra.mxu0 0.0
    %2222 = vmatprep.subr.mxu0 0.0
    %2223 = vmatpush2.xpose.msra.mxu0 0.0
    %2224 = vmatprep.subr.mxu0 0.0
    %2225 = vmatpush2.xpose.msra.mxu0 0.0
    %2226 = vmatprep.subr.mxu0 0.0
    %2227 = vmatpush2.xpose.msra.mxu0 0.0
    %2228 = vmatprep.subr.mxu0 0.0
    %2229 = vmatpush2.xpose.msra.mxu0 0.0
    %2230 = vmatprep.mubr.f32.mxu0 0.0
    %2231 = vmatmul.mubr.f32.gmra.mxu0 %v2155
    %v2232 = vpop.f32.mrf.mxu0
    %v2233 = vadd.f32 %v130, %v2232
    %v2234 = vpop.f32.mrf.mxu0
    %2235 = vmatprep.mubr.f32.mxu0 0.0
    %2236 = vmatmul.mubr.f32.gmra.mxu0 %v2158
    %v2237 = vpop.f32.mrf.mxu0
    %v2238 = vadd.f32 %v131, %v2237
    %v2239 = vpop.f32.mrf.mxu0
    %2240 = vdwg.mxu0
    %v2241 = vmul.f32 %v2233, 1.442695
    %v2242 = vpow.pop %v2241
    %v2243 = vmul.f32 %v2238, 1.442695
    %v2244 = vpow.pop %v2243
    %v2245 = vsel %vm48, %v2242, 0.0
    %2246 = vadd.xlane.f32.xlu0 %v2245
    %v2247 = vpop.xlane.xlu0 %2246
    %v2248 = vsel %vm48, %v2244, 0.0
    %2249 = vadd.xlane.f32.xlu0 %v2248
    %v2250 = vpop.xlane.xlu0 %2249
    %v2251 = vrcp.pop %v2247
    %v2252 = vrcp.pop %v2250
    %v2253 = vmul.f32 %v2242, %v2251
    %v2254 = vmul.f32 %v2244, %v2252
    %v2256 = vsel %vm48, %v2253, 0
    %v2259 = vsel %vm48, %v2254, 0
    %2261 = vmatprep.subr.mxu0 0.0
    %2262 = vmatpush1.msra.mxu0 0.0
    %2263 = vmatprep.subr.mxu0 0.0
    %2264 = vmatpush1.msra.mxu0 0.0
    %2265 = vmatprep.subr.mxu0 0.0
    %2266 = vmatpush1.msra.mxu0 0.0
    %2267 = vmatprep.subr.mxu0 0.0
    %2268 = vmatpush1.msra.mxu0 0.0
    %2269 = vmatprep.subr.mxu0 0.0
    %2270 = vmatpush1.msra.mxu0 0.0
    %2271 = vmatprep.subr.mxu0 0.0
    %2272 = vmatpush1.msra.mxu0 0.0
    %2273 = vmatprep.subr.mxu0 0.0
    %2274 = vmatpush1.msra.mxu0 0.0
    %2275 = vmatprep.subr.mxu0 0.0
    %2276 = vmatpush1.msra.mxu0 0.0
    %2277 = vmatprep.subr.mxu0 0.0
    %2278 = vmatpush1.msra.mxu0 0.0
    %2279 = vmatprep.subr.mxu0 0.0
    %2280 = vmatpush1.msra.mxu0 0.0
    %2281 = vmatprep.subr.mxu0 0.0
    %2282 = vmatpush1.msra.mxu0 0.0
    %2283 = vmatprep.subr.mxu0 0.0
    %2284 = vmatpush1.msra.mxu0 0.0
    %2285 = vmatprep.subr.mxu0 0.0
    %2286 = vmatpush1.msra.mxu0 0.0
    %2287 = vmatprep.subr.mxu0 0.0
    %2288 = vmatpush1.msra.mxu0 0.0
    %2289 = vmatprep.subr.mxu0 0.0
    %2290 = vmatpush1.msra.mxu0 %v2151
    %2291 = vmatprep.subr.mxu0 0.0
    %2292 = vmatpush1.msra.mxu0 %v2146
    %2293 = vmatprep.subr.mxu0 0.0
    %2294 = vmatpush2.msra.mxu0 0.0
    %2295 = vmatprep.subr.mxu0 0.0
    %2296 = vmatpush2.msra.mxu0 0.0
    %2297 = vmatprep.subr.mxu0 0.0
    %2298 = vmatpush2.msra.mxu0 0.0
    %2299 = vmatprep.subr.mxu0 0.0
    %2300 = vmatpush2.msra.mxu0 0.0
    %2301 = vmatprep.subr.mxu0 0.0
    %2302 = vmatpush2.msra.mxu0 0.0
    %2303 = vmatprep.subr.mxu0 0.0
    %2304 = vmatpush2.msra.mxu0 0.0
    %2305 = vmatprep.subr.mxu0 0.0
    %2306 = vmatpush2.msra.mxu0 0.0
    %2307 = vmatprep.subr.mxu0 0.0
    %2308 = vmatpush2.msra.mxu0 0.0
    %2309 = vmatprep.subr.mxu0 0.0
    %2310 = vmatpush2.msra.mxu0 0.0
    %2311 = vmatprep.subr.mxu0 0.0
    %2312 = vmatpush2.msra.mxu0 0.0
    %2313 = vmatprep.subr.mxu0 0.0
    %2314 = vmatpush2.msra.mxu0 0.0
    %2315 = vmatprep.subr.mxu0 0.0
    %2316 = vmatpush2.msra.mxu0 0.0
    %2317 = vmatprep.subr.mxu0 0.0
    %2318 = vmatpush2.msra.mxu0 0.0
    %2319 = vmatprep.subr.mxu0 0.0
    %2320 = vmatpush2.msra.mxu0 0.0
    %2321 = vmatprep.subr.mxu0 0.0
    %2322 = vmatpush2.msra.mxu0 0.0
    %2323 = vmatprep.subr.mxu0 0.0
    %2324 = vmatpush2.msra.mxu0 0.0
    %2325 = vmatprep.mubr.f32.mxu0 0.0
    %2326 = vmatmul.mubr.f32.gmra.mxu0 %v2256
    %v2327 = vpop.f32.mrf.mxu0
    %v2328 = vadd.f32 0.0, %v2327
    %v2329 = vpop.f32.mrf.mxu0
    %2330 = vmatprep.mubr.f32.mxu0 0.0
    %2331 = vmatmul.mubr.f32.gmra.mxu0 %v2259
    %v2332 = vpop.f32.mrf.mxu0
    %v2333 = vadd.f32 0.0, %v2332
    %v2334 = vpop.f32.mrf.mxu0
    %2335 = vdwg.mxu0
    %v2336 = vld [vmem:[#allocation2 + $0x358] sm:$0xff]
    %v2337 = vld [vmem:[#allocation2 + $0x360] sm:$0xff]
    %v2339 = vsel %vm48, %v2328, 0
    %v2342 = vsel %vm48, %v2333, 0
    %2344 = vmatprep.subr.mxu0 0.0
    %2345 = vmatpush1.msra.mxu0 0.0
    %2346 = vmatprep.subr.mxu0 0.0
    %2347 = vmatpush1.msra.mxu0 0.0
    %2348 = vmatprep.subr.mxu0 0.0
    %2349 = vmatpush1.msra.mxu0 0.0
    %2350 = vmatprep.subr.mxu0 0.0
    %2351 = vmatpush1.msra.mxu0 0.0
    %2352 = vmatprep.subr.mxu0 0.0
    %2353 = vmatpush1.msra.mxu0 0.0
    %2354 = vmatprep.subr.mxu0 0.0
    %2355 = vmatpush1.msra.mxu0 0.0
    %2356 = vmatprep.subr.mxu0 0.0
    %2357 = vmatpush1.msra.mxu0 0.0
    %2358 = vmatprep.subr.mxu0 0.0
    %2359 = vmatpush1.msra.mxu0 0.0
    %2360 = vmatprep.subr.mxu0 0.0
    %2361 = vmatpush1.msra.mxu0 0.0
    %2362 = vmatprep.subr.mxu0 0.0
    %2363 = vmatpush1.msra.mxu0 0.0
    %2364 = vmatprep.subr.mxu0 0.0
    %2365 = vmatpush1.msra.mxu0 0.0
    %2366 = vmatprep.subr.mxu0 0.0
    %2367 = vmatpush1.msra.mxu0 0.0
    %2368 = vmatprep.subr.mxu0 0.0
    %2369 = vmatpush1.msra.mxu0 0.0
    %2370 = vmatprep.subr.mxu0 0.0
    %2371 = vmatpush1.msra.mxu0 0.0
    %2372 = vmatprep.subr.mxu0 0.0
    %2373 = vmatpush1.msra.mxu0 %v2337
    %2374 = vmatprep.subr.mxu0 0.0
    %2375 = vmatpush1.msra.mxu0 %v2336
    %2376 = vmatprep.subr.mxu0 0.0
    %2377 = vmatpush2.msra.mxu0 0.0
    %2378 = vmatprep.subr.mxu0 0.0
    %2379 = vmatpush2.msra.mxu0 0.0
    %2380 = vmatprep.subr.mxu0 0.0
    %2381 = vmatpush2.msra.mxu0 0.0
    %2382 = vmatprep.subr.mxu0 0.0
    %2383 = vmatpush2.msra.mxu0 0.0
    %2384 = vmatprep.subr.mxu0 0.0
    %2385 = vmatpush2.msra.mxu0 0.0
    %2386 = vmatprep.subr.mxu0 0.0
    %2387 = vmatpush2.msra.mxu0 0.0
    %2388 = vmatprep.subr.mxu0 0.0
    %2389 = vmatpush2.msra.mxu0 0.0
    %2390 = vmatprep.subr.mxu0 0.0
    %2391 = vmatpush2.msra.mxu0 0.0
    %2392 = vmatprep.subr.mxu0 0.0
    %2393 = vmatpush2.msra.mxu0 0.0
    %2394 = vmatprep.subr.mxu0 0.0
    %2395 = vmatpush2.msra.mxu0 0.0
    %2396 = vmatprep.subr.mxu0 0.0
    %2397 = vmatpush2.msra.mxu0 0.0
    %2398 = vmatprep.subr.mxu0 0.0
    %2399 = vmatpush2.msra.mxu0 0.0
    %2400 = vmatprep.subr.mxu0 0.0
    %2401 = vmatpush2.msra.mxu0 0.0
    %2402 = vmatprep.subr.mxu0 0.0
    %2403 = vmatpush2.msra.mxu0 0.0
    %2404 = vmatprep.subr.mxu0 0.0
    %2405 = vmatpush2.msra.mxu0 0.0
    %2406 = vmatprep.subr.mxu0 0.0
    %2407 = vmatpush2.msra.mxu0 0.0
    %2408 = vmatprep.mubr.f32.mxu0 0.0
    %2409 = vmatmul.mubr.f32.gmra.mxu0 %v2339
    %v2410 = vpop.f32.mrf.mxu0
    %v2411 = vadd.f32 0.0, %v2410
    %v2412 = vpop.f32.mrf.mxu0
    %2413 = vmatprep.mubr.f32.mxu0 0.0
    %2414 = vmatmul.mubr.f32.gmra.mxu0 %v2342
    %v2415 = vpop.f32.mrf.mxu0
    %v2416 = vadd.f32 0.0, %v2415
    %v2417 = vpop.f32.mrf.mxu0
    %2418 = vdwg.mxu0
    %v2420 = vsel %vm48, %v1892, 0
    %v2423 = vsel %vm48, %v1897, 0
    %2425 = vmatprep.subr.mxu0 0.0
    %2426 = vmatpush1.msra.mxu0 0.0
    %2427 = vmatprep.subr.mxu0 0.0
    %2428 = vmatpush1.msra.mxu0 0.0
    %2429 = vmatprep.subr.mxu0 0.0
    %2430 = vmatpush1.msra.mxu0 0.0
    %2431 = vmatprep.subr.mxu0 0.0
    %2432 = vmatpush1.msra.mxu0 0.0
    %2433 = vmatprep.subr.mxu0 0.0
    %2434 = vmatpush1.msra.mxu0 0.0
    %2435 = vmatprep.subr.mxu0 0.0
    %2436 = vmatpush1.msra.mxu0 0.0
    %2437 = vmatprep.subr.mxu0 0.0
    %2438 = vmatpush1.msra.mxu0 0.0
    %2439 = vmatprep.subr.mxu0 0.0
    %2440 = vmatpush1.msra.mxu0 0.0
    %2441 = vmatprep.subr.mxu0 0.0
    %2442 = vmatpush1.msra.mxu0 0.0
    %2443 = vmatprep.subr.mxu0 0.0
    %2444 = vmatpush1.msra.mxu0 0.0
    %2445 = vmatprep.subr.mxu0 0.0
    %2446 = vmatpush1.msra.mxu0 0.0
    %2447 = vmatprep.subr.mxu0 0.0
    %2448 = vmatpush1.msra.mxu0 0.0
    %2449 = vmatprep.subr.mxu0 0.0
    %2450 = vmatpush1.msra.mxu0 0.0
    %2451 = vmatprep.subr.mxu0 0.0
    %2452 = vmatpush1.msra.mxu0 0.0
    %2453 = vmatprep.subr.mxu0 0.0
    %2454 = vmatpush1.msra.mxu0 %v1901
    %2455 = vmatprep.subr.mxu0 0.0
    %2456 = vmatpush1.msra.mxu0 %v1900
    %2457 = vmatprep.subr.mxu0 0.0
    %2458 = vmatpush2.msra.mxu0 0.0
    %2459 = vmatprep.subr.mxu0 0.0
    %2460 = vmatpush2.msra.mxu0 0.0
    %2461 = vmatprep.subr.mxu0 0.0
    %2462 = vmatpush2.msra.mxu0 0.0
    %2463 = vmatprep.subr.mxu0 0.0
    %2464 = vmatpush2.msra.mxu0 0.0
    %2465 = vmatprep.subr.mxu0 0.0
    %2466 = vmatpush2.msra.mxu0 0.0
    %2467 = vmatprep.subr.mxu0 0.0
    %2468 = vmatpush2.msra.mxu0 0.0
    %2469 = vmatprep.subr.mxu0 0.0
    %2470 = vmatpush2.msra.mxu0 0.0
    %2471 = vmatprep.subr.mxu0 0.0
    %2472 = vmatpush2.msra.mxu0 0.0
    %2473 = vmatprep.subr.mxu0 0.0
    %2474 = vmatpush2.msra.mxu0 0.0
    %2475 = vmatprep.subr.mxu0 0.0
    %2476 = vmatpush2.msra.mxu0 0.0
    %2477 = vmatprep.subr.mxu0 0.0
    %2478 = vmatpush2.msra.mxu0 0.0
    %2479 = vmatprep.subr.mxu0 0.0
    %2480 = vmatpush2.msra.mxu0 0.0
    %2481 = vmatprep.subr.mxu0 0.0
    %2482 = vmatpush2.msra.mxu0 0.0
    %2483 = vmatprep.subr.mxu0 0.0
    %2484 = vmatpush2.msra.mxu0 0.0
    %2485 = vmatprep.subr.mxu0 0.0
    %2486 = vmatpush2.msra.mxu0 0.0
    %2487 = vmatprep.subr.mxu0 0.0
    %2488 = vmatpush2.msra.mxu0 0.0
    %2489 = vmatprep.mubr.f32.mxu0 0.0
    %2490 = vmatmul.mubr.f32.gmra.mxu0 %v2420
    %v2491 = vpop.f32.mrf.mxu0
    %v2492 = vadd.f32 %v2411, %v2491
    %v2493 = vpop.f32.mrf.mxu0
    %2494 = vmatprep.mubr.f32.mxu0 0.0
    %2495 = vmatmul.mubr.f32.gmra.mxu0 %v2423
    %v2496 = vpop.f32.mrf.mxu0
    %v2497 = vadd.f32 %v2416, %v2496
    %v2498 = vpop.f32.mrf.mxu0
    %2499 = vdwg.mxu0
    %v2500 = vadd.f32 %v1458, %v2492
    %v2501 = vadd.f32 %v1459, %v2497
    %v2502 = vld [vmem:[#allocation2 + $0x380] sm:$0x1]
    %v2503 = vlaneseq
    %v2504 = vshrl.u32 %v2503, 7
    %v2505 = vsub.s32 0, %v2504
    %v2506 = vrot.slane %v2502, %v2505
    %v2507 = vadd.f32 %v2500, %v2506
    %v2508 = vadd.f32 %v2501, %v2506
    %v2509 = vld [vmem:[#allocation2 + $0x388] sm:$0x1]
    %v2510 = vld [vmem:[#allocation2 + $0x390] sm:$0x1]
    %v2511 = vsel %vm141, %v2507, 0.0
    %2512 = vadd.xlane.f32.xlu0 %v2511
    %v2513 = vpop.xlane.xlu0 %2512
    %v2514 = vsel %vm141, %v2508, 0.0
    %2515 = vadd.xlane.f32.xlu0 %v2514
    %v2516 = vpop.xlane.xlu0 %2515
    %v2517 = vmul.f32 %v2513, %v1190
    %v2518 = vmul.f32 %v2516, %v1190
    %v2519 = vmul.f32 %v2507, %v2507
    %v2520 = vmul.f32 %v2508, %v2508
    %v2521 = vsel %vm141, %v2519, 0.0
    %2522 = vadd.xlane.f32.xlu0 %v2521
    %v2523 = vpop.xlane.xlu0 %2522
    %v2524 = vsel %vm141, %v2520, 0.0
    %2525 = vadd.xlane.f32.xlu0 %v2524
    %v2526 = vpop.xlane.xlu0 %2525
    %v2527 = vmul.f32 %v2523, %v1190
    %v2528 = vmul.f32 %v2526, %v1190
    %v2529 = vmul.f32 %v2517, %v2517
    %v2530 = vmul.f32 %v2518, %v2518
    %v2531 = vsub.f32 %v2527, %v2529
    %v2532 = vsub.f32 %v2528, %v2530
    %v2533 = vsub.f32 %v2507, %v2517
    %v2534 = vsub.f32 %v2508, %v2518
    %v2535 = vadd.f32 %v2531, 1e-05
    %v2536 = vadd.f32 %v2532, 1e-05
    %v2537 = vrsqrt.pop %v2535
    %v2538 = vrsqrt.pop %v2536
    %v2539 = vmul.f32 %v2533, %v2537
    %v2540 = vmul.f32 %v2534, %v2538
    %v2541 = vlaneseq
    %v2542 = vshrl.u32 %v2541, 7
    %v2543 = vsub.s32 0, %v2542
    %v2544 = vrot.slane %v2509, %v2543
    %v2545 = vmul.f32 %v2539, %v2544
    %v2546 = vmul.f32 %v2540, %v2544
    %v2547 = vlaneseq
    %v2548 = vshrl.u32 %v2547, 7
    %v2549 = vsub.s32 0, %v2548
    %v2550 = vrot.slane %v2510, %v2549
    %v2551 = vadd.f32 %v2545, %v2550
    %v2552 = vadd.f32 %v2546, %v2550
    %v2553 = vld [vmem:[#allocation2 + $0x3a8] sm:$0xff]
    %v2554 = vld [vmem:[#allocation2 + $0x3b0] sm:$0xff]
    %v2555 = vld [vmem:[#allocation2 + $0x3b8] sm:$0xff]
    %v2556 = vld [vmem:[#allocation2 + $0x3c0] sm:$0xff]
    %v2557 = vld [vmem:[#allocation2 + $0x3c8] sm:$0x1]
    %v2558 = vlaneseq
    %v2559 = vshrl.u32 %v2558, 7
    %v2560 = vsub.s32 0, %v2559
    %v2561 = vrot.slane %v2557, %v2560
    %v2563 = vsel %vm141, %v2551, 0
    %v2566 = vsel %vm141, %v2552, 0
    %2568 = vmatprep.subr.mxu0 0.0
    %2569 = vmatpush1.msra.mxu0 0.0
    %2570 = vmatprep.subr.mxu0 0.0
    %2571 = vmatpush1.msra.mxu0 0.0
    %2572 = vmatprep.subr.mxu0 0.0
    %2573 = vmatpush1.msra.mxu0 0.0
    %2574 = vmatprep.subr.mxu0 0.0
    %2575 = vmatpush1.msra.mxu0 0.0
    %2576 = vmatprep.subr.mxu0 0.0
    %2577 = vmatpush1.msra.mxu0 0.0
    %2578 = vmatprep.subr.mxu0 0.0
    %2579 = vmatpush1.msra.mxu0 0.0
    %2580 = vmatprep.subr.mxu0 0.0
    %2581 = vmatpush1.msra.mxu0 0.0
    %2582 = vmatprep.subr.mxu0 0.0
    %2583 = vmatpush1.msra.mxu0 0.0
    %2584 = vmatprep.subr.mxu0 0.0
    %2585 = vmatpush1.msra.mxu0 0.0
    %2586 = vmatprep.subr.mxu0 0.0
    %2587 = vmatpush1.msra.mxu0 0.0
    %2588 = vmatprep.subr.mxu0 0.0
    %2589 = vmatpush1.msra.mxu0 0.0
    %2590 = vmatprep.subr.mxu0 0.0
    %2591 = vmatpush1.msra.mxu0 0.0
    %2592 = vmatprep.subr.mxu0 0.0
    %2593 = vmatpush1.msra.mxu0 %v2556
    %2594 = vmatprep.subr.mxu0 0.0
    %2595 = vmatpush1.msra.mxu0 %v2555
    %2596 = vmatprep.subr.mxu0 0.0
    %2597 = vmatpush1.msra.mxu0 %v2554
    %2598 = vmatprep.subr.mxu0 0.0
    %2599 = vmatpush1.msra.mxu0 %v2553
    %2600 = vmatprep.subr.mxu0 0.0
    %2601 = vmatpush2.msra.mxu0 0.0
    %2602 = vmatprep.subr.mxu0 0.0
    %2603 = vmatpush2.msra.mxu0 0.0
    %2604 = vmatprep.subr.mxu0 0.0
    %2605 = vmatpush2.msra.mxu0 0.0
    %2606 = vmatprep.subr.mxu0 0.0
    %2607 = vmatpush2.msra.mxu0 0.0
    %2608 = vmatprep.subr.mxu0 0.0
    %2609 = vmatpush2.msra.mxu0 0.0
    %2610 = vmatprep.subr.mxu0 0.0
    %2611 = vmatpush2.msra.mxu0 0.0
    %2612 = vmatprep.subr.mxu0 0.0
    %2613 = vmatpush2.msra.mxu0 0.0
    %2614 = vmatprep.subr.mxu0 0.0
    %2615 = vmatpush2.msra.mxu0 0.0
    %2616 = vmatprep.subr.mxu0 0.0
    %2617 = vmatpush2.msra.mxu0 0.0
    %2618 = vmatprep.subr.mxu0 0.0
    %2619 = vmatpush2.msra.mxu0 0.0
    %2620 = vmatprep.subr.mxu0 0.0
    %2621 = vmatpush2.msra.mxu0 0.0
    %2622 = vmatprep.subr.mxu0 0.0
    %2623 = vmatpush2.msra.mxu0 0.0
    %2624 = vmatprep.subr.mxu0 0.0
    %2625 = vmatpush2.msra.mxu0 0.0
    %2626 = vmatprep.subr.mxu0 0.0
    %2627 = vmatpush2.msra.mxu0 0.0
    %2628 = vmatprep.subr.mxu0 0.0
    %2629 = vmatpush2.msra.mxu0 0.0
    %2630 = vmatprep.subr.mxu0 0.0
    %2631 = vmatpush2.msra.mxu0 0.0
    %2632 = vmatprep.mubr.f32.mxu0 0.0
    %2633 = vmatmul.mubr.f32.gmra.mxu0 %v2563
    %v2634 = vpop.f32.mrf.mxu0
    %v2635 = vadd.f32 %v2561, %v2634
    %v2636 = vpop.f32.mrf.mxu0
    %2637 = vmatprep.mubr.f32.mxu0 0.0
    %2638 = vmatmul.mubr.f32.gmra.mxu0 %v2566
    %v2639 = vpop.f32.mrf.mxu0
    %v2640 = vadd.f32 %v2561, %v2639
    %v2641 = vpop.f32.mrf.mxu0
    %2642 = vdwg.mxu0
    %v2643 = vmax.f32 %v2635, 0.0
    %v2644 = vmax.f32 %v2640, 0.0
    %v2645 = vld [vmem:[#allocation2 + $0x3d0] sm:$0xff]
    %v2646 = vld [vmem:[#allocation2 + $0x3d8] sm:$0xff]
    %v2647 = vld [vmem:[#allocation2 + $0x3e0] sm:$0xff]
    %v2648 = vld [vmem:[#allocation2 + $0x3e8] sm:$0xff]
    %v2649 = vld [vmem:[#allocation2 + $0x3f0] sm:$0xff]
    %v2650 = vld [vmem:[#allocation2 + $0x3f8] sm:$0xff]
    %v2651 = vld [vmem:[#allocation2 + $0x400] sm:$0xff]
    %v2652 = vld [vmem:[#allocation2 + $0x408] sm:$0xff]
    %v2653 = vld [vmem:[#allocation2 + $0x410] sm:$0x1]
    %v2654 = vlaneseq
    %v2655 = vshrl.u32 %v2654, 7
    %v2656 = vsub.s32 0, %v2655
    %v2657 = vrot.slane %v2653, %v2656
    %v2659 = vsel %vm1332, %v2643, 0
    %v2662 = vsel %vm1332, %v2644, 0
    %2664 = vmatprep.subr.mxu0 0.0
    %2665 = vmatpush1.msra.mxu0 0.0
    %2666 = vmatprep.subr.mxu0 0.0
    %2667 = vmatpush1.msra.mxu0 0.0
    %2668 = vmatprep.subr.mxu0 0.0
    %2669 = vmatpush1.msra.mxu0 0.0
    %2670 = vmatprep.subr.mxu0 0.0
    %2671 = vmatpush1.msra.mxu0 0.0
    %2672 = vmatprep.subr.mxu0 0.0
    %2673 = vmatpush1.msra.mxu0 0.0
    %2674 = vmatprep.subr.mxu0 0.0
    %2675 = vmatpush1.msra.mxu0 0.0
    %2676 = vmatprep.subr.mxu0 0.0
    %2677 = vmatpush1.msra.mxu0 0.0
    %2678 = vmatprep.subr.mxu0 0.0
    %2679 = vmatpush1.msra.mxu0 0.0
    %2680 = vmatprep.subr.mxu0 0.0
    %2681 = vmatpush1.msra.mxu0 %v2652
    %2682 = vmatprep.subr.mxu0 0.0
    %2683 = vmatpush1.msra.mxu0 %v2651
    %2684 = vmatprep.subr.mxu0 0.0
    %2685 = vmatpush1.msra.mxu0 %v2650
    %2686 = vmatprep.subr.mxu0 0.0
    %2687 = vmatpush1.msra.mxu0 %v2649
    %2688 = vmatprep.subr.mxu0 0.0
    %2689 = vmatpush1.msra.mxu0 %v2648
    %2690 = vmatprep.subr.mxu0 0.0
    %2691 = vmatpush1.msra.mxu0 %v2647
    %2692 = vmatprep.subr.mxu0 0.0
    %2693 = vmatpush1.msra.mxu0 %v2646
    %2694 = vmatprep.subr.mxu0 0.0
    %2695 = vmatpush1.msra.mxu0 %v2645
    %2696 = vmatprep.subr.mxu0 0.0
    %2697 = vmatpush2.msra.mxu0 0.0
    %2698 = vmatprep.subr.mxu0 0.0
    %2699 = vmatpush2.msra.mxu0 0.0
    %2700 = vmatprep.subr.mxu0 0.0
    %2701 = vmatpush2.msra.mxu0 0.0
    %2702 = vmatprep.subr.mxu0 0.0
    %2703 = vmatpush2.msra.mxu0 0.0
    %2704 = vmatprep.subr.mxu0 0.0
    %2705 = vmatpush2.msra.mxu0 0.0
    %2706 = vmatprep.subr.mxu0 0.0
    %2707 = vmatpush2.msra.mxu0 0.0
    %2708 = vmatprep.subr.mxu0 0.0
    %2709 = vmatpush2.msra.mxu0 0.0
    %2710 = vmatprep.subr.mxu0 0.0
    %2711 = vmatpush2.msra.mxu0 0.0
    %2712 = vmatprep.subr.mxu0 0.0
    %2713 = vmatpush2.msra.mxu0 0.0
    %2714 = vmatprep.subr.mxu0 0.0
    %2715 = vmatpush2.msra.mxu0 0.0
    %2716 = vmatprep.subr.mxu0 0.0
    %2717 = vmatpush2.msra.mxu0 0.0
    %2718 = vmatprep.subr.mxu0 0.0
    %2719 = vmatpush2.msra.mxu0 0.0
    %2720 = vmatprep.subr.mxu0 0.0
    %2721 = vmatpush2.msra.mxu0 0.0
    %2722 = vmatprep.subr.mxu0 0.0
    %2723 = vmatpush2.msra.mxu0 0.0
    %2724 = vmatprep.subr.mxu0 0.0
    %2725 = vmatpush2.msra.mxu0 0.0
    %2726 = vmatprep.subr.mxu0 0.0
    %2727 = vmatpush2.msra.mxu0 0.0
    %2728 = vmatprep.mubr.f32.mxu0 0.0
    %2729 = vmatmul.mubr.f32.gmra.mxu0 %v2659
    %v2730 = vpop.f32.mrf.mxu0
    %v2731 = vadd.f32 %v2657, %v2730
    %v2732 = vpop.f32.mrf.mxu0
    %2733 = vmatprep.mubr.f32.mxu0 0.0
    %2734 = vmatmul.mubr.f32.gmra.mxu0 %v2662
    %v2735 = vpop.f32.mrf.mxu0
    %v2736 = vadd.f32 %v2657, %v2735
    %v2737 = vpop.f32.mrf.mxu0
    %2738 = vdwg.mxu0
    %v2739 = vadd.f32 %v2551, %v2731
    %v2740 = vadd.f32 %v2552, %v2736
    %v2741 = vld [vmem:[#allocation2 + $0x398] sm:$0x1]
    %v2742 = vld [vmem:[#allocation2 + $0x3a0] sm:$0x1]
    %v2743 = vsel %vm141, %v2739, 0.0
    %2744 = vadd.xlane.f32.xlu0 %v2743
    %v2745 = vpop.xlane.xlu0 %2744
    %v2746 = vsel %vm141, %v2740, 0.0
    %2747 = vadd.xlane.f32.xlu0 %v2746
    %v2748 = vpop.xlane.xlu0 %2747
    %v2749 = vmul.f32 %v2745, %v1190
    %v2750 = vmul.f32 %v2748, %v1190
    %v2751 = vmul.f32 %v2739, %v2739
    %v2752 = vmul.f32 %v2740, %v2740
    %v2753 = vsel %vm141, %v2751, 0.0
    %2754 = vadd.xlane.f32.xlu0 %v2753
    %v2755 = vpop.xlane.xlu0 %2754
    %v2756 = vsel %vm141, %v2752, 0.0
    %2757 = vadd.xlane.f32.xlu0 %v2756
    %v2758 = vpop.xlane.xlu0 %2757
    %v2759 = vmul.f32 %v2755, %v1190
    %v2760 = vmul.f32 %v2758, %v1190
    %v2761 = vmul.f32 %v2749, %v2749
    %v2762 = vmul.f32 %v2750, %v2750
    %v2763 = vsub.f32 %v2759, %v2761
    %v2764 = vsub.f32 %v2760, %v2762
    %v2765 = vsub.f32 %v2739, %v2749
    %v2766 = vsub.f32 %v2740, %v2750
    %v2767 = vadd.f32 %v2763, 1e-05
    %v2768 = vadd.f32 %v2764, 1e-05
    %v2769 = vrsqrt.pop %v2767
    %v2770 = vrsqrt.pop %v2768
    %v2771 = vmul.f32 %v2765, %v2769
    %v2772 = vmul.f32 %v2766, %v2770
    %v2773 = vlaneseq
    %v2774 = vshrl.u32 %v2773, 7
    %v2775 = vsub.s32 0, %v2774
    %v2776 = vrot.slane %v2741, %v2775
    %v2777 = vmul.f32 %v2771, %v2776
    %v2778 = vmul.f32 %v2772, %v2776
    %v2779 = vlaneseq
    %v2780 = vshrl.u32 %v2779, 7
    %v2781 = vsub.s32 0, %v2780
    %v2782 = vrot.slane %v2742, %v2781
    %v2783 = vadd.f32 %v2777, %v2782
    %v2784 = vadd.f32 %v2778, %v2782
    %v2785 = vld [vmem:[#allocation2 + $0xa0] sm:$0xff]
    %v2786 = vld [vmem:[#allocation2 + $0xa8] sm:$0xff]
    %v2787 = vld [vmem:[#allocation2 + $0xb0] sm:$0xff]
    %v2788 = vld [vmem:[#allocation2 + $0xb8] sm:$0xff]
    %v2789 = vld [vmem:[#allocation2 + $0xc0] sm:$0x1]
    %v2790 = vlaneseq
    %v2791 = vshrl.u32 %v2790, 7
    %v2792 = vsub.s32 0, %v2791
    %v2793 = vrot.slane %v2789, %v2792
    %v2795 = vsel %vm141, %v2783, 0
    %v2798 = vsel %vm141, %v2784, 0
    %2800 = vmatprep.subr.mxu0 0.0
    %2801 = vmatpush1.msra.mxu0 0.0
    %2802 = vmatprep.subr.mxu0 0.0
    %2803 = vmatpush1.msra.mxu0 0.0
    %2804 = vmatprep.subr.mxu0 0.0
    %2805 = vmatpush1.msra.mxu0 0.0
    %2806 = vmatprep.subr.mxu0 0.0
    %2807 = vmatpush1.msra.mxu0 0.0
    %2808 = vmatprep.subr.mxu0 0.0
    %2809 = vmatpush1.msra.mxu0 0.0
    %2810 = vmatprep.subr.mxu0 0.0
    %2811 = vmatpush1.msra.mxu0 0.0
    %2812 = vmatprep.subr.mxu0 0.0
    %2813 = vmatpush1.msra.mxu0 0.0
    %2814 = vmatprep.subr.mxu0 0.0
    %2815 = vmatpush1.msra.mxu0 0.0
    %2816 = vmatprep.subr.mxu0 0.0
    %2817 = vmatpush1.msra.mxu0 0.0
    %2818 = vmatprep.subr.mxu0 0.0
    %2819 = vmatpush1.msra.mxu0 0.0
    %2820 = vmatprep.subr.mxu0 0.0
    %2821 = vmatpush1.msra.mxu0 0.0
    %2822 = vmatprep.subr.mxu0 0.0
    %2823 = vmatpush1.msra.mxu0 0.0
    %2824 = vmatprep.subr.mxu0 0.0
    %2825 = vmatpush1.msra.mxu0 %v2788
    %2826 = vmatprep.subr.mxu0 0.0
    %2827 = vmatpush1.msra.mxu0 %v2787
    %2828 = vmatprep.subr.mxu0 0.0
    %2829 = vmatpush1.msra.mxu0 %v2786
    %2830 = vmatprep.subr.mxu0 0.0
    %2831 = vmatpush1.msra.mxu0 %v2785
    %2832 = vmatprep.subr.mxu0 0.0
    %2833 = vmatpush2.msra.mxu0 0.0
    %2834 = vmatprep.subr.mxu0 0.0
    %2835 = vmatpush2.msra.mxu0 0.0
    %2836 = vmatprep.subr.mxu0 0.0
    %2837 = vmatpush2.msra.mxu0 0.0
    %2838 = vmatprep.subr.mxu0 0.0
    %2839 = vmatpush2.msra.mxu0 0.0
    %2840 = vmatprep.subr.mxu0 0.0
    %2841 = vmatpush2.msra.mxu0 0.0
    %2842 = vmatprep.subr.mxu0 0.0
    %2843 = vmatpush2.msra.mxu0 0.0
    %2844 = vmatprep.subr.mxu0 0.0
    %2845 = vmatpush2.msra.mxu0 0.0
    %2846 = vmatprep.subr.mxu0 0.0
    %2847 = vmatpush2.msra.mxu0 0.0
    %2848 = vmatprep.subr.mxu0 0.0
    %2849 = vmatpush2.msra.mxu0 0.0
    %2850 = vmatprep.subr.mxu0 0.0
    %2851 = vmatpush2.msra.mxu0 0.0
    %2852 = vmatprep.subr.mxu0 0.0
    %2853 = vmatpush2.msra.mxu0 0.0
    %2854 = vmatprep.subr.mxu0 0.0
    %2855 = vmatpush2.msra.mxu0 0.0
    %2856 = vmatprep.subr.mxu0 0.0
    %2857 = vmatpush2.msra.mxu0 0.0
    %2858 = vmatprep.subr.mxu0 0.0
    %2859 = vmatpush2.msra.mxu0 0.0
    %2860 = vmatprep.subr.mxu0 0.0
    %2861 = vmatpush2.msra.mxu0 0.0
    %2862 = vmatprep.subr.mxu0 0.0
    %2863 = vmatpush2.msra.mxu0 0.0
    %2864 = vmatprep.mubr.f32.mxu0 0.0
    %2865 = vmatmul.mubr.f32.gmra.mxu0 %v2795
    %v2866 = vpop.f32.mrf.mxu0
    %v2867 = vadd.f32 %v2793, %v2866
    %v2868 = vpop.f32.mrf.mxu0
    %2869 = vmatprep.mubr.f32.mxu0 0.0
    %2870 = vmatmul.mubr.f32.gmra.mxu0 %v2798
    %v2871 = vpop.f32.mrf.mxu0
    %v2872 = vadd.f32 %v2793, %v2871
    %v2873 = vpop.f32.mrf.mxu0
    %2874 = vdwg.mxu0
    %2875 = vst [vmem:[#allocation5] sm:$0xff] %v2867
    %2876 = vst [vmem:[#allocation5 + $0x8] sm:$0xff] %v2872
    // Predicated region
    $region14: #{transformer_forward.1} parent=1 // pred_check
      _
    $region15: #{transformer_forward.1} parent=1 // pred_check_branch
      %2878 = sbr.rel (0) target = $region17
    $region16: #{transformer_forward.1} parent=1 // pred_region
      %s2880 = ssub.s32 256, 256
      %2881 = vsyncadd [#allocation4], %s2880
      %s2882 = sshll.u32 [#allocation5], 4
      %s2883 = int_to_ptr.vmem [resolvable:$true] %s2882
      %2888 = dma.vmem_to_hbm [thread:$0]  %s2883, 256, %s2, [#allocation4], 128, 128, 8
    $region17: #{transformer_forward.1} parent=1 // pred_fallthru
      _
    // Predicated region
    $region18: #{transformer_forward.1} parent=1 // pred_check
      _
    $region19: #{transformer_forward.1} parent=1 // pred_check_branch
      %2890 = sbr.rel (0) target = $region21
    $region20: #{transformer_forward.1} parent=1 // pred_region
      %2891 = dma.done [#allocation4], 256
    $region21: #{transformer_forward.1} parent=1 // pred_fallthru
      _
    %2892 = vsyncpa [#allocation3], 1
    %2893 = vsyncpa [#allocation4], 1

</llo_original>
